<compile_context>
chip_gen: v7x
topology: tpu7x:2x2x1
jax: 0.10.0
libtpu: 0.0.40
codegen_flags: <defaults>
</compile_context>

<pallas_src>
import jax
import jax.numpy as jnp
from jax.experimental import pallas as pl
from jax.experimental.pallas import tpu as pltpu


# ---------------------------------------------------------------------------
# Fused Pallas kernel (one grid step == one sample, everything VMEM-resident)
# ---------------------------------------------------------------------------
def _lenet5_kernel(x_ref, a1_ref, b1r_ref, pl1_ref, pr1_ref,
                   a2_ref, b2r_ref, pl2_ref, pr2_ref,
                   g1_ref, fb1_ref, fw2_ref, fb2_ref, fw3_ref, fb3_ref,
                   o_ref):
    f32 = jnp.float32
    xi = x_ref[0, 0]                                          # (32, 32)

    # ---- conv1 (1->6, k=5) + bias + ReLU: 5 shifted banded matmuls ----------
    # h1[i, co*28 + j] = conv1 output at (channel co, row i, col j)
    h1 = b1r_ref[...]                                         # (1, 168)
    for di in range(5):
        h1 = h1 + jnp.dot(xi[di:di + 28, :], a1_ref[di],
                          preferred_element_type=f32)
    h1 = jnp.maximum(h1, 0.0)                                 # (28, 168)

    # ---- avgpool 2x2 fused as left/right matmuls ----------------------------
    p1 = jnp.dot(pl1_ref[...], h1, preferred_element_type=f32)       # (14, 168)
    p1 = jnp.dot(p1, pr1_ref[...], preferred_element_type=f32)       # (14, 84)

    # ---- conv2 (6->16, k=5) + bias + ReLU ------------------------------------
    h2 = b2r_ref[...]                                         # (1, 160)
    for di in range(5):
        h2 = h2 + jnp.dot(p1[di:di + 10, :], a2_ref[di],
                          preferred_element_type=f32)
    h2 = jnp.maximum(h2, 0.0)                                 # (10, 160)

    # ---- avgpool 2x2 ---------------------------------------------------------
    p2 = jnp.dot(pl2_ref[...], h2, preferred_element_type=f32)       # (5, 160)
    p2 = jnp.dot(p2, pr2_ref[...], preferred_element_type=f32)       # (5, 80)

    # ---- fc1 (torch.flatten's (C,H,W) permutation folded into g1) -----------
    y = fb1_ref[...]                                          # (1, 120)
    for h in range(5):
        y = y + jnp.dot(p2[h:h + 1, :], g1_ref[h],
                        preferred_element_type=f32)
    y = jnp.maximum(y, 0.0)

    # ---- fc2 + ReLU, fc3 ------------------------------------------------------
    y = jnp.maximum(
        jnp.dot(y, fw2_ref[...], preferred_element_type=f32) + fb2_ref[...], 0.0)
    y = jnp.dot(y, fw3_ref[...], preferred_element_type=f32) + fb3_ref[...]

    o_ref[0] = y.astype(o_ref.dtype)                          # (1, 26)


# ---------------------------------------------------------------------------
# Wrapper: one fused pallas_call, grid over the batch (parallel on v7x)
# ---------------------------------------------------------------------------
def lenet5_forward(kp, x):
    B = x.shape[0]
    weights = (kp["A1"], kp["b1row"], kp["PL1"], kp["PR1"],
               kp["A2"], kp["b2row"], kp["PL2"], kp["PR2"],
               kp["G1"], kp["fb1"], kp["fw2t"], kp["fb2"], kp["fw3t"], kp["fb3"])

    def resident(arr):  # full-array VMEM block, same block every grid step
        nd = arr.ndim
        return pl.BlockSpec(arr.shape, lambda b, _n=nd: (0,) * _n)

    in_specs = [pl.BlockSpec((1, 1, 32, 32), lambda b: (b, 0, 0, 0))]
    in_specs += [resident(a) for a in weights]

    out = pl.pallas_call(
        _lenet5_kernel,
        out_shape=jax.ShapeDtypeStruct((B, 1, 26), jnp.float32),
        grid_spec=pltpu.PrefetchScalarGridSpec(
            num_scalar_prefetch=0,
            grid=(B,),
            in_specs=in_specs,
            out_specs=pl.BlockSpec((1, 1, 26), lambda b: (b, 0, 0)),
        ),
        compiler_params=pltpu.CompilerParams(
            dimension_semantics=("parallel",)),
    )(x, *weights)
    return out.reshape(B, 26)


# ---------------------------------------------------------------------------
# Parameters (PyTorch-default-style uniform init, torch layouts)
# ---------------------------------------------------------------------------
def init_params(key):
    ks = jax.random.split(key, 10)

    def u(k, shape, fan_in):
        bound = 1.0 / jnp.sqrt(float(fan_in))
        return jax.random.uniform(k, shape, jnp.float32, -bound, bound)

    return dict(
        w1=u(ks[0], (6, 1, 5, 5), 25),    b1=u(ks[1], (6,), 25),
        w2=u(ks[2], (16, 6, 5, 5), 150),  b2=u(ks[3], (16,), 150),
        fw1=u(ks[4], (120, 400), 400),    fb1=u(ks[5], (120,), 400),
        fw2=u(ks[6], (84, 120), 120),     fb2=u(ks[7], (84,), 120),
        fw3=u(ks[8], (26, 84), 84),       fb3=u(ks[9], (26,), 84),
    )


def prepare_params(p):
    """One-time host-side packing (runs once, outside the per-step forward).

    Activation layout inside the kernel: F[i, c*W + j] == feature[c, i, j].
      * A1/A2: banded conv matrices so conv = sum of 5 shifted row-band matmuls.
      * PL*/PR*: 2x2 average pooling as left/right matmuls (0.5 * 0.5 = 0.25).
      * G1: fc1 weight with torch.flatten's (C,H,W) order folded in.
    """
    f32 = jnp.float32

    def band(win, wout, k):            # band[dj, jin, jout] = 1 iff jin == jout+dj
        d = jnp.arange(k)[:, None, None]
        jin = jnp.arange(win)[None, :, None]
        jout = jnp.arange(wout)[None, None, :]
        return (jin == jout + d).astype(f32)

    def pool_left(hin):                # (hin//2, hin), 0.5 where i//2 == r
        r = jnp.arange(hin // 2)[:, None]
        i = jnp.arange(hin)[None, :]
        return 0.5 * (i // 2 == r).astype(f32)

    def pool_right(win, c):            # block-diag (c*win, c*(win//2)), 0.5 entries
        prw = 0.5 * ((jnp.arange(win)[:, None] // 2)
                     == jnp.arange(win // 2)[None, :]).astype(f32)
        return jnp.kron(jnp.eye(c, dtype=f32), prw)

    # conv1: A1[di, jin, co*28 + jout] = w1[co, 0, di, jin - jout]
    band1 = band(32, 28, 5)                                   # (5, 32, 28)
    A1 = jnp.einsum("cde,ejn->djcn", p["w1"][:, 0], band1)    # (5, 32, 6, 28)
    A1 = A1.reshape(5, 32, 6 * 28)
    b1row = jnp.repeat(p["b1"], 28)[None, :]                  # (1, 168)

    # conv2: A2[di, ci*14 + jin, co*10 + jout] = w2[co, ci, di, jin - jout]
    band2 = band(14, 10, 5)                                   # (5, 14, 10)
    A2 = jnp.einsum("kcde,ejn->dcjkn", p["w2"], band2)        # (5, 6, 14, 16, 10)
    A2 = A2.reshape(5, 6 * 14, 16 * 10)
    b2row = jnp.repeat(p["b2"], 10)[None, :]                  # (1, 160)

    # pooling matmuls
    PL1, PR1 = pool_left(28), pool_right(28, 6)               # (14,28), (168,84)
    PL2, PR2 = pool_left(10), pool_right(10, 16)              # (5,10),  (160,80)

    # fc1: G1[h, c*5 + w, n] = fw1[n, c*25 + h*5 + w]
    G1 = p["fw1"].reshape(120, 16, 5, 5).transpose(2, 1, 3, 0).reshape(5, 80, 120)

    return dict(
        A1=A1, b1row=b1row, PL1=PL1, PR1=PR1,
        A2=A2, b2row=b2row, PL2=PL2, PR2=PR2,
        G1=G1, fb1=p["fb1"][None, :],
        fw2t=p["fw2"].T, fb2=p["fb2"][None, :],
        fw3t=p["fw3"].T, fb3=p["fb3"][None, :],
    )


# ---------------------------------------------------------------------------
# Plain-JAX reference (torch-layout params) for a correctness check
# ---------------------------------------------------------------------------
def reference_forward(p, x):
    def conv(x, w, b):
        y = jax.lax.conv_general_dilated(
            x, w, window_strides=(1, 1), padding="VALID",
            dimension_numbers=("NCHW", "OIHW", "NCHW"))
        return jnp.maximum(y + b[None, :, None, None], 0.0)

    def pool(t):
        return 0.25 * (t[:, :, 0::2, 0::2] + t[:, :, 0::2, 1::2]
                       + t[:, :, 1::2, 0::2] + t[:, :, 1::2, 1::2])

    x = pool(conv(x, p["w1"], p["b1"]))
    x = pool(conv(x, p["w2"], p["b2"]))
    x = x.reshape(x.shape[0], -1)                             # (B, 400) in (C,H,W) order
    x = jnp.maximum(x @ p["fw1"].T + p["fb1"], 0.0)
    x = jnp.maximum(x @ p["fw2"].T + p["fb2"], 0.0)
    return x @ p["fw3"].T + p["fb3"]


if __name__ == "__main__":
    key = jax.random.PRNGKey(0)
    pkey, xkey = jax.random.split(key)
    params = init_params(pkey)
    kparams = prepare_params(params)                          # one-time packing
    x = jax.random.normal(xkey, (2, 1, 32, 32), jnp.float32)  # NCHW, 32x32 single-channel

    fwd = jax.jit(lenet5_forward)
    y = jax.block_until_ready(fwd(kparams, x))

    y_ref = jax.block_until_ready(reference_forward(params, x))
    assert y.shape == (2, 26) and y.dtype == jnp.float32
    assert float(jnp.max(jnp.abs(y - y_ref))) < 1e-3, "mismatch vs reference"
    print("KERNEL_OK")
</pallas_src>

<mosaic_0001>
module attributes {stable_mosaic.version = 11 : i64} {
  func.func @_lenet5_kernel(%arg0: i32, %arg1: memref<1x1x32x32xf32, #tpu.memory_space<vmem>>, %arg2: memref<5x32x168xf32, #tpu.memory_space<vmem>>, %arg3: memref<1x168xf32, #tpu.memory_space<vmem>>, %arg4: memref<14x28xf32, #tpu.memory_space<vmem>>, %arg5: memref<168x84xf32, #tpu.memory_space<vmem>>, %arg6: memref<5x84x160xf32, #tpu.memory_space<vmem>>, %arg7: memref<1x160xf32, #tpu.memory_space<vmem>>, %arg8: memref<5x10xf32, #tpu.memory_space<vmem>>, %arg9: memref<160x80xf32, #tpu.memory_space<vmem>>, %arg10: memref<5x80x120xf32, #tpu.memory_space<vmem>>, %arg11: memref<1x120xf32, #tpu.memory_space<vmem>>, %arg12: memref<120x84xf32, #tpu.memory_space<vmem>>, %arg13: memref<1x84xf32, #tpu.memory_space<vmem>>, %arg14: memref<84x26xf32, #tpu.memory_space<vmem>>, %arg15: memref<1x26xf32, #tpu.memory_space<vmem>>, %arg16: memref<1x1x26xf32, #tpu.memory_space<vmem>>) attributes {dimension_semantics = [#tpu.dimension_semantics<parallel>], iteration_bounds = array<i64: 2>, scalar_prefetch = 0 : i64, scratch_operands = 0 : i64, tpu.core_type = #tpu.core_type<tc>, window_params = [{transform_indices = @transform_0, window_bounds = array<i64: 1, 1, 32, 32>}, {pipeline_mode = #tpu.pipeline_mode<synchronous>, transform_indices = @transform_1, window_bounds = array<i64: 5, 32, 168>}, {pipeline_mode = #tpu.pipeline_mode<synchronous>, transform_indices = @transform_2, window_bounds = array<i64: 1, 168>}, {pipeline_mode = #tpu.pipeline_mode<synchronous>, transform_indices = @transform_3, window_bounds = array<i64: 14, 28>}, {pipeline_mode = #tpu.pipeline_mode<synchronous>, transform_indices = @transform_4, window_bounds = array<i64: 168, 84>}, {pipeline_mode = #tpu.pipeline_mode<synchronous>, transform_indices = @transform_5, window_bounds = array<i64: 5, 84, 160>}, {pipeline_mode = #tpu.pipeline_mode<synchronous>, transform_indices = @transform_6, window_bounds = array<i64: 1, 160>}, {pipeline_mode = #tpu.pipeline_mode<synchronous>, transform_indices = @transform_7, window_bounds = array<i64: 5, 10>}, {pipeline_mode = #tpu.pipeline_mode<synchronous>, transform_indices = @transform_8, window_bounds = array<i64: 160, 80>}, {pipeline_mode = #tpu.pipeline_mode<synchronous>, transform_indices = @transform_9, window_bounds = array<i64: 5, 80, 120>}, {pipeline_mode = #tpu.pipeline_mode<synchronous>, transform_indices = @transform_10, window_bounds = array<i64: 1, 120>}, {pipeline_mode = #tpu.pipeline_mode<synchronous>, transform_indices = @transform_11, window_bounds = array<i64: 120, 84>}, {pipeline_mode = #tpu.pipeline_mode<synchronous>, transform_indices = @transform_12, window_bounds = array<i64: 1, 84>}, {pipeline_mode = #tpu.pipeline_mode<synchronous>, transform_indices = @transform_13, window_bounds = array<i64: 84, 26>}, {pipeline_mode = #tpu.pipeline_mode<synchronous>, transform_indices = @transform_14, window_bounds = array<i64: 1, 26>}, {transform_indices = @transform_15, window_bounds = array<i64: 1, 1, 26>}]} {
    %c0 = arith.constant 0 : index
    %c0_0 = arith.constant 0 : index
    %c0_1 = arith.constant 0 : index
    %c0_2 = arith.constant 0 : index
    %0 = vector.load %arg1[%c0, %c0_0, %c0_1, %c0_2] : memref<1x1x32x32xf32, #tpu.memory_space<vmem>>, vector<1x1x32x32xf32>
    %1 = vector.shape_cast %0 : vector<1x1x32x32xf32> to vector<32x32xf32>
    %c0_3 = arith.constant 0 : index
    %c0_4 = arith.constant 0 : index
    %2 = vector.load %arg3[%c0_3, %c0_4] : memref<1x168xf32, #tpu.memory_space<vmem>>, vector<1x168xf32>
    %3 = vector.extract_strided_slice %1 {offsets = [0, 0], sizes = [28, 32], strides = [1, 1]} : vector<32x32xf32> to vector<28x32xf32>
    %c0_5 = arith.constant 0 : index
    %c0_6 = arith.constant 0 : index
    %c0_7 = arith.constant 0 : index
    %4 = vector.load %arg2[%c0_5, %c0_6, %c0_7] : memref<5x32x168xf32, #tpu.memory_space<vmem>>, vector<1x32x168xf32>
    %5 = vector.shape_cast %4 : vector<1x32x168xf32> to vector<32x168xf32>
    %cst = arith.constant dense<0.000000e+00> : vector<28x168xf32>
    %6 = tpu.matmul %3, %5, %cst {dimension_numbers = #tpu.dot_dimension_numbers<[1], [0], [0], [1], [0, 0, 1, 1], [], []>} : vector<28x32xf32>, vector<32x168xf32>, vector<28x168xf32> -> vector<28x168xf32>
    %7 = vector.broadcast %2 : vector<1x168xf32> to vector<28x168xf32>
    %8 = arith.addf %7, %6 : vector<28x168xf32>
    %9 = vector.extract_strided_slice %1 {offsets = [1, 0], sizes = [28, 32], strides = [1, 1]} : vector<32x32xf32> to vector<28x32xf32>
    %c1 = arith.constant 1 : index
    %c0_8 = arith.constant 0 : index
    %c0_9 = arith.constant 0 : index
    %10 = vector.load %arg2[%c1, %c0_8, %c0_9] : memref<5x32x168xf32, #tpu.memory_space<vmem>>, vector<1x32x168xf32>
    %11 = vector.shape_cast %10 : vector<1x32x168xf32> to vector<32x168xf32>
    %cst_10 = arith.constant dense<0.000000e+00> : vector<28x168xf32>
    %12 = tpu.matmul %9, %11, %cst_10 {dimension_numbers = #tpu.dot_dimension_numbers<[1], [0], [0], [1], [0, 0, 1, 1], [], []>} : vector<28x32xf32>, vector<32x168xf32>, vector<28x168xf32> -> vector<28x168xf32>
    %13 = arith.addf %8, %12 : vector<28x168xf32>
    %14 = vector.extract_strided_slice %1 {offsets = [2, 0], sizes = [28, 32], strides = [1, 1]} : vector<32x32xf32> to vector<28x32xf32>
    %c2 = arith.constant 2 : index
    %c0_11 = arith.constant 0 : index
    %c0_12 = arith.constant 0 : index
    %15 = vector.load %arg2[%c2, %c0_11, %c0_12] : memref<5x32x168xf32, #tpu.memory_space<vmem>>, vector<1x32x168xf32>
    %16 = vector.shape_cast %15 : vector<1x32x168xf32> to vector<32x168xf32>
    %cst_13 = arith.constant dense<0.000000e+00> : vector<28x168xf32>
    %17 = tpu.matmul %14, %16, %cst_13 {dimension_numbers = #tpu.dot_dimension_numbers<[1], [0], [0], [1], [0, 0, 1, 1], [], []>} : vector<28x32xf32>, vector<32x168xf32>, vector<28x168xf32> -> vector<28x168xf32>
    %18 = arith.addf %13, %17 : vector<28x168xf32>
    %19 = vector.extract_strided_slice %1 {offsets = [3, 0], sizes = [28, 32], strides = [1, 1]} : vector<32x32xf32> to vector<28x32xf32>
    %c3 = arith.constant 3 : index
    %c0_14 = arith.constant 0 : index
    %c0_15 = arith.constant 0 : index
    %20 = vector.load %arg2[%c3, %c0_14, %c0_15] : memref<5x32x168xf32, #tpu.memory_space<vmem>>, vector<1x32x168xf32>
    %21 = vector.shape_cast %20 : vector<1x32x168xf32> to vector<32x168xf32>
    %cst_16 = arith.constant dense<0.000000e+00> : vector<28x168xf32>
    %22 = tpu.matmul %19, %21, %cst_16 {dimension_numbers = #tpu.dot_dimension_numbers<[1], [0], [0], [1], [0, 0, 1, 1], [], []>} : vector<28x32xf32>, vector<32x168xf32>, vector<28x168xf32> -> vector<28x168xf32>
    %23 = arith.addf %18, %22 : vector<28x168xf32>
    %24 = vector.extract_strided_slice %1 {offsets = [4, 0], sizes = [28, 32], strides = [1, 1]} : vector<32x32xf32> to vector<28x32xf32>
    %c4 = arith.constant 4 : index
    %c0_17 = arith.constant 0 : index
    %c0_18 = arith.constant 0 : index
    %25 = vector.load %arg2[%c4, %c0_17, %c0_18] : memref<5x32x168xf32, #tpu.memory_space<vmem>>, vector<1x32x168xf32>
    %26 = vector.shape_cast %25 : vector<1x32x168xf32> to vector<32x168xf32>
    %cst_19 = arith.constant dense<0.000000e+00> : vector<28x168xf32>
    %27 = tpu.matmul %24, %26, %cst_19 {dimension_numbers = #tpu.dot_dimension_numbers<[1], [0], [0], [1], [0, 0, 1, 1], [], []>} : vector<28x32xf32>, vector<32x168xf32>, vector<28x168xf32> -> vector<28x168xf32>
    %28 = arith.addf %23, %27 : vector<28x168xf32>
    %cst_20 = arith.constant 0.000000e+00 : f32
    %29 = vector.broadcast %cst_20 : f32 to vector<28x168xf32>
    %30 = arith.maximumf %28, %29 : vector<28x168xf32>
    %c0_21 = arith.constant 0 : index
    %c0_22 = arith.constant 0 : index
    %31 = vector.load %arg4[%c0_21, %c0_22] : memref<14x28xf32, #tpu.memory_space<vmem>>, vector<14x28xf32>
    %cst_23 = arith.constant dense<0.000000e+00> : vector<14x168xf32>
    %32 = tpu.matmul %31, %30, %cst_23 {dimension_numbers = #tpu.dot_dimension_numbers<[1], [0], [0], [1], [0, 0, 1, 1], [], []>} : vector<14x28xf32>, vector<28x168xf32>, vector<14x168xf32> -> vector<14x168xf32>
    %c0_24 = arith.constant 0 : index
    %c0_25 = arith.constant 0 : index
    %33 = vector.load %arg5[%c0_24, %c0_25] : memref<168x84xf32, #tpu.memory_space<vmem>>, vector<168x84xf32>
    %cst_26 = arith.constant dense<0.000000e+00> : vector<14x84xf32>
    %34 = tpu.matmul %32, %33, %cst_26 {dimension_numbers = #tpu.dot_dimension_numbers<[1], [0], [0], [1], [0, 0, 1, 1], [], []>} : vector<14x168xf32>, vector<168x84xf32>, vector<14x84xf32> -> vector<14x84xf32>
    %c0_27 = arith.constant 0 : index
    %c0_28 = arith.constant 0 : index
    %35 = vector.load %arg7[%c0_27, %c0_28] : memref<1x160xf32, #tpu.memory_space<vmem>>, vector<1x160xf32>
    %36 = vector.extract_strided_slice %34 {offsets = [0, 0], sizes = [10, 84], strides = [1, 1]} : vector<14x84xf32> to vector<10x84xf32>
    %c0_29 = arith.constant 0 : index
    %c0_30 = arith.constant 0 : index
    %c0_31 = arith.constant 0 : index
    %37 = vector.load %arg6[%c0_29, %c0_30, %c0_31] : memref<5x84x160xf32, #tpu.memory_space<vmem>>, vector<1x84x160xf32>
    %38 = vector.shape_cast %37 : vector<1x84x160xf32> to vector<84x160xf32>
    %cst_32 = arith.constant dense<0.000000e+00> : vector<10x160xf32>
    %39 = tpu.matmul %36, %38, %cst_32 {dimension_numbers = #tpu.dot_dimension_numbers<[1], [0], [0], [1], [0, 0, 1, 1], [], []>} : vector<10x84xf32>, vector<84x160xf32>, vector<10x160xf32> -> vector<10x160xf32>
    %40 = vector.broadcast %35 : vector<1x160xf32> to vector<10x160xf32>
    %41 = arith.addf %40, %39 : vector<10x160xf32>
    %42 = vector.extract_strided_slice %34 {offsets = [1, 0], sizes = [10, 84], strides = [1, 1]} : vector<14x84xf32> to vector<10x84xf32>
    %c1_33 = arith.constant 1 : index
    %c0_34 = arith.constant 0 : index
    %c0_35 = arith.constant 0 : index
    %43 = vector.load %arg6[%c1_33, %c0_34, %c0_35] : memref<5x84x160xf32, #tpu.memory_space<vmem>>, vector<1x84x160xf32>
    %44 = vector.shape_cast %43 : vector<1x84x160xf32> to vector<84x160xf32>
    %cst_36 = arith.constant dense<0.000000e+00> : vector<10x160xf32>
    %45 = tpu.matmul %42, %44, %cst_36 {dimension_numbers = #tpu.dot_dimension_numbers<[1], [0], [0], [1], [0, 0, 1, 1], [], []>} : vector<10x84xf32>, vector<84x160xf32>, vector<10x160xf32> -> vector<10x160xf32>
    %46 = arith.addf %41, %45 : vector<10x160xf32>
    %47 = vector.extract_strided_slice %34 {offsets = [2, 0], sizes = [10, 84], strides = [1, 1]} : vector<14x84xf32> to vector<10x84xf32>
    %c2_37 = arith.constant 2 : index
    %c0_38 = arith.constant 0 : index
    %c0_39 = arith.constant 0 : index
    %48 = vector.load %arg6[%c2_37, %c0_38, %c0_39] : memref<5x84x160xf32, #tpu.memory_space<vmem>>, vector<1x84x160xf32>
    %49 = vector.shape_cast %48 : vector<1x84x160xf32> to vector<84x160xf32>
    %cst_40 = arith.constant dense<0.000000e+00> : vector<10x160xf32>
    %50 = tpu.matmul %47, %49, %cst_40 {dimension_numbers = #tpu.dot_dimension_numbers<[1], [0], [0], [1], [0, 0, 1, 1], [], []>} : vector<10x84xf32>, vector<84x160xf32>, vector<10x160xf32> -> vector<10x160xf32>
    %51 = arith.addf %46, %50 : vector<10x160xf32>
    %52 = vector.extract_strided_slice %34 {offsets = [3, 0], sizes = [10, 84], strides = [1, 1]} : vector<14x84xf32> to vector<10x84xf32>
    %c3_41 = arith.constant 3 : index
    %c0_42 = arith.constant 0 : index
    %c0_43 = arith.constant 0 : index
    %53 = vector.load %arg6[%c3_41, %c0_42, %c0_43] : memref<5x84x160xf32, #tpu.memory_space<vmem>>, vector<1x84x160xf32>
    %54 = vector.shape_cast %53 : vector<1x84x160xf32> to vector<84x160xf32>
    %cst_44 = arith.constant dense<0.000000e+00> : vector<10x160xf32>
    %55 = tpu.matmul %52, %54, %cst_44 {dimension_numbers = #tpu.dot_dimension_numbers<[1], [0], [0], [1], [0, 0, 1, 1], [], []>} : vector<10x84xf32>, vector<84x160xf32>, vector<10x160xf32> -> vector<10x160xf32>
    %56 = arith.addf %51, %55 : vector<10x160xf32>
    %57 = vector.extract_strided_slice %34 {offsets = [4, 0], sizes = [10, 84], strides = [1, 1]} : vector<14x84xf32> to vector<10x84xf32>
    %c4_45 = arith.constant 4 : index
    %c0_46 = arith.constant 0 : index
    %c0_47 = arith.constant 0 : index
    %58 = vector.load %arg6[%c4_45, %c0_46, %c0_47] : memref<5x84x160xf32, #tpu.memory_space<vmem>>, vector<1x84x160xf32>
    %59 = vector.shape_cast %58 : vector<1x84x160xf32> to vector<84x160xf32>
    %cst_48 = arith.constant dense<0.000000e+00> : vector<10x160xf32>
    %60 = tpu.matmul %57, %59, %cst_48 {dimension_numbers = #tpu.dot_dimension_numbers<[1], [0], [0], [1], [0, 0, 1, 1], [], []>} : vector<10x84xf32>, vector<84x160xf32>, vector<10x160xf32> -> vector<10x160xf32>
    %61 = arith.addf %56, %60 : vector<10x160xf32>
    %cst_49 = arith.constant 0.000000e+00 : f32
    %62 = vector.broadcast %cst_49 : f32 to vector<10x160xf32>
    %63 = arith.maximumf %61, %62 : vector<10x160xf32>
    %c0_50 = arith.constant 0 : index
    %c0_51 = arith.constant 0 : index
    %64 = vector.load %arg8[%c0_50, %c0_51] : memref<5x10xf32, #tpu.memory_space<vmem>>, vector<5x10xf32>
    %cst_52 = arith.constant dense<0.000000e+00> : vector<5x160xf32>
    %65 = tpu.matmul %64, %63, %cst_52 {dimension_numbers = #tpu.dot_dimension_numbers<[1], [0], [0], [1], [0, 0, 1, 1], [], []>} : vector<5x10xf32>, vector<10x160xf32>, vector<5x160xf32> -> vector<5x160xf32>
    %c0_53 = arith.constant 0 : index
    %c0_54 = arith.constant 0 : index
    %66 = vector.load %arg9[%c0_53, %c0_54] : memref<160x80xf32, #tpu.memory_space<vmem>>, vector<160x80xf32>
    %cst_55 = arith.constant dense<0.000000e+00> : vector<5x80xf32>
    %67 = tpu.matmul %65, %66, %cst_55 {dimension_numbers = #tpu.dot_dimension_numbers<[1], [0], [0], [1], [0, 0, 1, 1], [], []>} : vector<5x160xf32>, vector<160x80xf32>, vector<5x80xf32> -> vector<5x80xf32>
    %c0_56 = arith.constant 0 : index
    %c0_57 = arith.constant 0 : index
    %68 = vector.load %arg11[%c0_56, %c0_57] : memref<1x120xf32, #tpu.memory_space<vmem>>, vector<1x120xf32>
    %69 = vector.extract_strided_slice %67 {offsets = [0, 0], sizes = [1, 80], strides = [1, 1]} : vector<5x80xf32> to vector<1x80xf32>
    %c0_58 = arith.constant 0 : index
    %c0_59 = arith.constant 0 : index
    %c0_60 = arith.constant 0 : index
    %70 = vector.load %arg10[%c0_58, %c0_59, %c0_60] : memref<5x80x120xf32, #tpu.memory_space<vmem>>, vector<1x80x120xf32>
    %71 = vector.shape_cast %70 : vector<1x80x120xf32> to vector<80x120xf32>
    %cst_61 = arith.constant dense<0.000000e+00> : vector<1x120xf32>
    %72 = tpu.matmul %69, %71, %cst_61 {dimension_numbers = #tpu.dot_dimension_numbers<[1], [0], [0], [1], [0, 0, 1, 1], [], []>} : vector<1x80xf32>, vector<80x120xf32>, vector<1x120xf32> -> vector<1x120xf32>
    %73 = arith.addf %68, %72 : vector<1x120xf32>
    %74 = vector.extract_strided_slice %67 {offsets = [1, 0], sizes = [1, 80], strides = [1, 1]} : vector<5x80xf32> to vector<1x80xf32>
    %c1_62 = arith.constant 1 : index
    %c0_63 = arith.constant 0 : index
    %c0_64 = arith.constant 0 : index
    %75 = vector.load %arg10[%c1_62, %c0_63, %c0_64] : memref<5x80x120xf32, #tpu.memory_space<vmem>>, vector<1x80x120xf32>
    %76 = vector.shape_cast %75 : vector<1x80x120xf32> to vector<80x120xf32>
    %cst_65 = arith.constant dense<0.000000e+00> : vector<1x120xf32>
    %77 = tpu.matmul %74, %76, %cst_65 {dimension_numbers = #tpu.dot_dimension_numbers<[1], [0], [0], [1], [0, 0, 1, 1], [], []>} : vector<1x80xf32>, vector<80x120xf32>, vector<1x120xf32> -> vector<1x120xf32>
    %78 = arith.addf %73, %77 : vector<1x120xf32>
    %79 = vector.extract_strided_slice %67 {offsets = [2, 0], sizes = [1, 80], strides = [1, 1]} : vector<5x80xf32> to vector<1x80xf32>
    %c2_66 = arith.constant 2 : index
    %c0_67 = arith.constant 0 : index
    %c0_68 = arith.constant 0 : index
    %80 = vector.load %arg10[%c2_66, %c0_67, %c0_68] : memref<5x80x120xf32, #tpu.memory_space<vmem>>, vector<1x80x120xf32>
    %81 = vector.shape_cast %80 : vector<1x80x120xf32> to vector<80x120xf32>
    %cst_69 = arith.constant dense<0.000000e+00> : vector<1x120xf32>
    %82 = tpu.matmul %79, %81, %cst_69 {dimension_numbers = #tpu.dot_dimension_numbers<[1], [0], [0], [1], [0, 0, 1, 1], [], []>} : vector<1x80xf32>, vector<80x120xf32>, vector<1x120xf32> -> vector<1x120xf32>
    %83 = arith.addf %78, %82 : vector<1x120xf32>
    %84 = vector.extract_strided_slice %67 {offsets = [3, 0], sizes = [1, 80], strides = [1, 1]} : vector<5x80xf32> to vector<1x80xf32>
    %c3_70 = arith.constant 3 : index
    %c0_71 = arith.constant 0 : index
    %c0_72 = arith.constant 0 : index
    %85 = vector.load %arg10[%c3_70, %c0_71, %c0_72] : memref<5x80x120xf32, #tpu.memory_space<vmem>>, vector<1x80x120xf32>
    %86 = vector.shape_cast %85 : vector<1x80x120xf32> to vector<80x120xf32>
    %cst_73 = arith.constant dense<0.000000e+00> : vector<1x120xf32>
    %87 = tpu.matmul %84, %86, %cst_73 {dimension_numbers = #tpu.dot_dimension_numbers<[1], [0], [0], [1], [0, 0, 1, 1], [], []>} : vector<1x80xf32>, vector<80x120xf32>, vector<1x120xf32> -> vector<1x120xf32>
    %88 = arith.addf %83, %87 : vector<1x120xf32>
    %89 = vector.extract_strided_slice %67 {offsets = [4, 0], sizes = [1, 80], strides = [1, 1]} : vector<5x80xf32> to vector<1x80xf32>
    %c4_74 = arith.constant 4 : index
    %c0_75 = arith.constant 0 : index
    %c0_76 = arith.constant 0 : index
    %90 = vector.load %arg10[%c4_74, %c0_75, %c0_76] : memref<5x80x120xf32, #tpu.memory_space<vmem>>, vector<1x80x120xf32>
    %91 = vector.shape_cast %90 : vector<1x80x120xf32> to vector<80x120xf32>
    %cst_77 = arith.constant dense<0.000000e+00> : vector<1x120xf32>
    %92 = tpu.matmul %89, %91, %cst_77 {dimension_numbers = #tpu.dot_dimension_numbers<[1], [0], [0], [1], [0, 0, 1, 1], [], []>} : vector<1x80xf32>, vector<80x120xf32>, vector<1x120xf32> -> vector<1x120xf32>
    %93 = arith.addf %88, %92 : vector<1x120xf32>
    %cst_78 = arith.constant 0.000000e+00 : f32
    %94 = vector.broadcast %cst_78 : f32 to vector<1x120xf32>
    %95 = arith.maximumf %93, %94 : vector<1x120xf32>
    %c0_79 = arith.constant 0 : index
    %c0_80 = arith.constant 0 : index
    %96 = vector.load %arg12[%c0_79, %c0_80] : memref<120x84xf32, #tpu.memory_space<vmem>>, vector<120x84xf32>
    %cst_81 = arith.constant dense<0.000000e+00> : vector<1x84xf32>
    %97 = tpu.matmul %95, %96, %cst_81 {dimension_numbers = #tpu.dot_dimension_numbers<[1], [0], [0], [1], [0, 0, 1, 1], [], []>} : vector<1x120xf32>, vector<120x84xf32>, vector<1x84xf32> -> vector<1x84xf32>
    %c0_82 = arith.constant 0 : index
    %c0_83 = arith.constant 0 : index
    %98 = vector.load %arg13[%c0_82, %c0_83] : memref<1x84xf32, #tpu.memory_space<vmem>>, vector<1x84xf32>
    %99 = arith.addf %97, %98 : vector<1x84xf32>
    %cst_84 = arith.constant 0.000000e+00 : f32
    %100 = vector.broadcast %cst_84 : f32 to vector<1x84xf32>
    %101 = arith.maximumf %99, %100 : vector<1x84xf32>
    %c0_85 = arith.constant 0 : index
    %c0_86 = arith.constant 0 : index
    %102 = vector.load %arg14[%c0_85, %c0_86] : memref<84x26xf32, #tpu.memory_space<vmem>>, vector<84x26xf32>
    %cst_87 = arith.constant dense<0.000000e+00> : vector<1x26xf32>
    %103 = tpu.matmul %101, %102, %cst_87 {dimension_numbers = #tpu.dot_dimension_numbers<[1], [0], [0], [1], [0, 0, 1, 1], [], []>} : vector<1x84xf32>, vector<84x26xf32>, vector<1x26xf32> -> vector<1x26xf32>
    %c0_88 = arith.constant 0 : index
    %c0_89 = arith.constant 0 : index
    %104 = vector.load %arg15[%c0_88, %c0_89] : memref<1x26xf32, #tpu.memory_space<vmem>>, vector<1x26xf32>
    %105 = arith.addf %103, %104 : vector<1x26xf32>
    %c0_90 = arith.constant 0 : index
    %c0_91 = arith.constant 0 : index
    %c0_92 = arith.constant 0 : index
    %106 = vector.load %arg16[%c0_90, %c0_91, %c0_92] : memref<1x1x26xf32, #tpu.memory_space<vmem>>, vector<1x1x26xf32>
    %107 = vector.shape_cast %106 : vector<1x1x26xf32> to vector<1x26xf32>
    %108 = vector.shape_cast %105 : vector<1x26xf32> to vector<1x1x26xf32>
    tpu.vector_store %arg16[%c0_90, %c0_91, %c0_92], %108 {strides = array<i32>} : memref<1x1x26xf32, #tpu.memory_space<vmem>>, vector<1x1x26xf32>,
    return
  }
  func.func @transform_0(%arg0: i32) -> (i32, i32, i32, i32) {
    %c0_i32 = arith.constant 0 : i32
    %c0_i32_0 = arith.constant 0 : i32
    %c0_i32_1 = arith.constant 0 : i32
    %c0_i32_2 = arith.constant 0 : i32
    return %arg0, %c0_i32, %c0_i32_0, %c0_i32_1 : i32, i32, i32, i32
  }
  func.func @transform_1(%arg0: i32) -> (i32, i32, i32) {
    %c0_i32 = arith.constant 0 : i32
    %c0_i32_0 = arith.constant 0 : i32
    %c0_i32_1 = arith.constant 0 : i32
    %c0_i32_2 = arith.constant 0 : i32
    return %c0_i32, %c0_i32_0, %c0_i32_1 : i32, i32, i32
  }
  func.func @transform_2(%arg0: i32) -> (i32, i32) {
    %c0_i32 = arith.constant 0 : i32
    %c0_i32_0 = arith.constant 0 : i32
    %c0_i32_1 = arith.constant 0 : i32
    return %c0_i32, %c0_i32_0 : i32, i32
  }
  func.func @transform_3(%arg0: i32) -> (i32, i32) {
    %c0_i32 = arith.constant 0 : i32
    %c0_i32_0 = arith.constant 0 : i32
    %c0_i32_1 = arith.constant 0 : i32
    return %c0_i32, %c0_i32_0 : i32, i32
  }
  func.func @transform_4(%arg0: i32) -> (i32, i32) {
    %c0_i32 = arith.constant 0 : i32
    %c0_i32_0 = arith.constant 0 : i32
    %c0_i32_1 = arith.constant 0 : i32
    return %c0_i32, %c0_i32_0 : i32, i32
  }
  func.func @transform_5(%arg0: i32) -> (i32, i32, i32) {
    %c0_i32 = arith.constant 0 : i32
    %c0_i32_0 = arith.constant 0 : i32
    %c0_i32_1 = arith.constant 0 : i32
    %c0_i32_2 = arith.constant 0 : i32
    return %c0_i32, %c0_i32_0, %c0_i32_1 : i32, i32, i32
  }
  func.func @transform_6(%arg0: i32) -> (i32, i32) {
    %c0_i32 = arith.constant 0 : i32
    %c0_i32_0 = arith.constant 0 : i32
    %c0_i32_1 = arith.constant 0 : i32
    return %c0_i32, %c0_i32_0 : i32, i32
  }
  func.func @transform_7(%arg0: i32) -> (i32, i32) {
    %c0_i32 = arith.constant 0 : i32
    %c0_i32_0 = arith.constant 0 : i32
    %c0_i32_1 = arith.constant 0 : i32
    return %c0_i32, %c0_i32_0 : i32, i32
  }
  func.func @transform_8(%arg0: i32) -> (i32, i32) {
    %c0_i32 = arith.constant 0 : i32
    %c0_i32_0 = arith.constant 0 : i32
    %c0_i32_1 = arith.constant 0 : i32
    return %c0_i32, %c0_i32_0 : i32, i32
  }
  func.func @transform_9(%arg0: i32) -> (i32, i32, i32) {
    %c0_i32 = arith.constant 0 : i32
    %c0_i32_0 = arith.constant 0 : i32
    %c0_i32_1 = arith.constant 0 : i32
    %c0_i32_2 = arith.constant 0 : i32
    return %c0_i32, %c0_i32_0, %c0_i32_1 : i32, i32, i32
  }
  func.func @transform_10(%arg0: i32) -> (i32, i32) {
    %c0_i32 = arith.constant 0 : i32
    %c0_i32_0 = arith.constant 0 : i32
    %c0_i32_1 = arith.constant 0 : i32
    return %c0_i32, %c0_i32_0 : i32, i32
  }
  func.func @transform_11(%arg0: i32) -> (i32, i32) {
    %c0_i32 = arith.constant 0 : i32
    %c0_i32_0 = arith.constant 0 : i32
    %c0_i32_1 = arith.constant 0 : i32
    return %c0_i32, %c0_i32_0 : i32, i32
  }
  func.func @transform_12(%arg0: i32) -> (i32, i32) {
    %c0_i32 = arith.constant 0 : i32
    %c0_i32_0 = arith.constant 0 : i32
    %c0_i32_1 = arith.constant 0 : i32
    return %c0_i32, %c0_i32_0 : i32, i32
  }
  func.func @transform_13(%arg0: i32) -> (i32, i32) {
    %c0_i32 = arith.constant 0 : i32
    %c0_i32_0 = arith.constant 0 : i32
    %c0_i32_1 = arith.constant 0 : i32
    return %c0_i32, %c0_i32_0 : i32, i32
  }
  func.func @transform_14(%arg0: i32) -> (i32, i32) {
    %c0_i32 = arith.constant 0 : i32
    %c0_i32_0 = arith.constant 0 : i32
    %c0_i32_1 = arith.constant 0 : i32
    return %c0_i32, %c0_i32_0 : i32, i32
  }
  func.func @transform_15(%arg0: i32) -> (i32, i32, i32) {
    %c0_i32 = arith.constant 0 : i32
    %c0_i32_0 = arith.constant 0 : i32
    %c0_i32_1 = arith.constant 0 : i32
    return %arg0, %c0_i32, %c0_i32_0 : i32, i32, i32
  }
}

</mosaic_0001>

<llo_original>
// kernel: lenet5_forward.1
$region0: #{lenet5_forward.1}
  #allocation0 [shape = 'u32[]', space=smem, size = 0x4, offset = 0x4, fixed_abs, tag = 'smem constant byte address 0x4 - core index']
  #allocation1 [shape = 'u32[144,128]{1,0:T(1,128)}', space=vmem, size = 0x12000, scoped, tag = 'internal scratch']
  %s0 = inlined_call_operand.vmem [shape: f32[2,1,32,32], index: 0, kind: input, shape index: {}]
  %s1 = inlined_call_operand.vmem [shape: f32[5,32,168], index: 1, kind: input, shape index: {}]
  %s2 = inlined_call_operand.vmem [shape: f32[1,168], index: 2, kind: input, shape index: {}]
  %s3 = inlined_call_operand.vmem [shape: f32[14,28], index: 3, kind: input, shape index: {}]
  %s4 = inlined_call_operand.vmem [shape: f32[168,84], index: 4, kind: input, shape index: {}]
  %s5 = inlined_call_operand.vmem [shape: f32[5,84,160], index: 5, kind: input, shape index: {}]
  %s6 = inlined_call_operand.vmem [shape: f32[1,160], index: 6, kind: input, shape index: {}]
  %s7 = inlined_call_operand.vmem [shape: f32[5,10], index: 7, kind: input, shape index: {}]
  %s8 = inlined_call_operand.vmem [shape: f32[160,80], index: 8, kind: input, shape index: {}]
  %s9 = inlined_call_operand.vmem [shape: f32[5,80,120], index: 9, kind: input, shape index: {}]
  %s10 = inlined_call_operand.vmem [shape: f32[1,120], index: 10, kind: input, shape index: {}]
  %s11 = inlined_call_operand.vmem [shape: f32[120,84], index: 11, kind: input, shape index: {}]
  %s12 = inlined_call_operand.vmem [shape: f32[1,84], index: 12, kind: input, shape index: {}]
  %s13 = inlined_call_operand.vmem [shape: f32[84,26], index: 13, kind: input, shape index: {}]
  %s14 = inlined_call_operand.vmem [shape: f32[1,26], index: 14, kind: input, shape index: {}]
  %s15 = inlined_call_operand.hbm [shape: f32[2,1,26], index: 15, kind: output, shape index: {}]
  %s16 = sld [smem:[#allocation0]]
  $region93: #{lenet5_forward.1} parent=0
    _
  %s18 = ssub.s32 1, %s16
  %s19 = scalar_select 0, %s18, %s16
  $region1: #{lenet5_forward.1} parent=0
    #allocation2 [shape = 'u8[1024]{0}', space=vmem, size = 0x400, scoped, tag = 'output window, operand 0']
    #allocation3 [shape = 's32[2]{0}', space=sflag, size = 0x8, scoped, tag = 'scoped memory for lenet5_forward.1']
    %20 = vsyncpa [#allocation3], 0
    %s21 = scalar_lea.sflag [#allocation3], 1
    %22 = vsyncpa %s21, 0
    loop: start=0, step=1, limit=4
    $region2: #{lenet5_forward.1} parent=1 // loop_pre_header
      _
    $region3: #{lenet5_forward.1} parent=1 // loop_header
      %s24 = sphi 0, %s28
      %p25 = scmp.ge.s32.totalorder %s24, 4
      %s34 = sphi 0, %s36
      %s37 = sphi 0, %s34
      %s38 = sphi 0, %s37
      %s54 = sphi 0, %s38
      %s58 = sphi 0, %s58
      %s60 = sphi 0, %s58
      %s61 = sphi 0, %s60
      %s75 = sphi 0, %s61
      %s79 = sphi 0, %s79
      %s81 = sphi 0, %s79
      %s82 = sphi 0, %s81
      %s96 = sphi 0, %s82
      %s100 = sphi 0, %s100
      %s102 = sphi 0, %s100
      %s103 = sphi 0, %s102
      %s117 = sphi 0, %s103
      %s121 = sphi 0, %s121
      %s123 = sphi 0, %s121
      %s124 = sphi 0, %s123
      %s138 = sphi 0, %s124
      %s142 = sphi 0, %s142
      %s144 = sphi 0, %s142
      %s145 = sphi 0, %s144
      %s159 = sphi 0, %s145
      %s163 = sphi 0, %s163
      %s165 = sphi 0, %s163
      %s166 = sphi 0, %s165
      %s180 = sphi 0, %s166
      %s184 = sphi 0, %s184
      %s186 = sphi 0, %s184
      %s187 = sphi 0, %s186
      %s201 = sphi 0, %s187
      %s205 = sphi 0, %s205
      %s207 = sphi 0, %s205
      %s208 = sphi 0, %s207
      %s222 = sphi 0, %s208
      %s226 = sphi 0, %s226
      %s228 = sphi 0, %s226
      %s229 = sphi 0, %s228
      %s243 = sphi 0, %s229
      %s247 = sphi 0, %s247
      %s249 = sphi 0, %s247
      %s250 = sphi 0, %s249
      %s264 = sphi 0, %s250
      %s268 = sphi 0, %s268
      %s270 = sphi 0, %s268
      %s271 = sphi 0, %s270
      %s285 = sphi 0, %s271
      %s289 = sphi 0, %s289
      %s291 = sphi 0, %s289
      %s292 = sphi 0, %s291
      %s306 = sphi 0, %s292
      %s310 = sphi 0, %s310
      %s312 = sphi 0, %s310
      %s313 = sphi 0, %s312
      %s327 = sphi 0, %s313
      %s331 = sphi 0, %s331
      %s333 = sphi 0, %s331
      %s334 = sphi 0, %s333
      %s348 = sphi 0, %s334
      %s354 = sphi 0, %s356
      %s357 = sphi 0, %s354
      %s358 = sphi 0, %s357
      %s374 = sphi 0, %s358
    $region4: #{lenet5_forward.1} parent=1 // loop_header_branch
      %27 = sbr.rel (%p25) target = $region8
    $region5: #{lenet5_forward.1} parent=1 // loop_body
      %s29 = ssub.s32 %s24, 1
      %s30 = ssub.s32 %s24, 2
      %s31 = sadd.s32 %s24, 1
      %s32 = ssub.s32 %s24, %s31
      %p33 = scmp.eq.s32.totalorder %s32, 0
      %s35 = sadd.s32 %s34, 1
      %s36 = scalar_select %p33, %s34, %s35
      %p39 = pneg %p33
      %p40 = scmp.eq.s32.totalorder %s24, 1
      %p41 = por %p39, %p40
      %p42 = scmp.ne.s32.totalorder %s34, %s37
      %p43 = scmp.eq.s32.totalorder %s24, 0
      %p44 = por %p42, %p43
      %p45 = scmp.ne.s32.totalorder %s34, %s37
      %p46 = scmp.eq.s32.totalorder %s29, 1
      %p47 = por %p45, %p46
      %p48 = scmp.ne.s32.totalorder %s37, %s38
      %p49 = scmp.eq.s32.totalorder %s29, 0
      %p50 = por %p48, %p49
      %p51 = scmp.ne.s32.totalorder %s37, %s38
      %p52 = scmp.eq.s32.totalorder %s30, 1
      %p53 = por %p51, %p52
      %p55 = scmp.ne.s32.totalorder %s38, %s54
      %p56 = scmp.eq.s32.totalorder %s30, 0
      %p57 = por %p55, %p56
      %s59 = sadd.s32 %s58, 1
      %p62 = scmp.eq.s32.totalorder %s24, 1
      %p63 = scmp.ne.s32.totalorder %s58, %s60
      %p64 = scmp.eq.s32.totalorder %s24, 0
      %p65 = por %p63, %p64
      %p66 = scmp.ne.s32.totalorder %s58, %s60
      %p67 = scmp.eq.s32.totalorder %s29, 1
      %p68 = por %p66, %p67
      %p69 = scmp.ne.s32.totalorder %s60, %s61
      %p70 = scmp.eq.s32.totalorder %s29, 0
      %p71 = por %p69, %p70
      %p72 = scmp.ne.s32.totalorder %s60, %s61
      %p73 = scmp.eq.s32.totalorder %s30, 1
      %p74 = por %p72, %p73
      %p76 = scmp.ne.s32.totalorder %s61, %s75
      %p77 = scmp.eq.s32.totalorder %s30, 0
      %p78 = por %p76, %p77
      %s80 = sadd.s32 %s79, 1
      %p83 = scmp.eq.s32.totalorder %s24, 1
      %p84 = scmp.ne.s32.totalorder %s79, %s81
      %p85 = scmp.eq.s32.totalorder %s24, 0
      %p86 = por %p84, %p85
      %p87 = scmp.ne.s32.totalorder %s79, %s81
      %p88 = scmp.eq.s32.totalorder %s29, 1
      %p89 = por %p87, %p88
      %p90 = scmp.ne.s32.totalorder %s81, %s82
      %p91 = scmp.eq.s32.totalorder %s29, 0
      %p92 = por %p90, %p91
      %p93 = scmp.ne.s32.totalorder %s81, %s82
      %p94 = scmp.eq.s32.totalorder %s30, 1
      %p95 = por %p93, %p94
      %p97 = scmp.ne.s32.totalorder %s82, %s96
      %p98 = scmp.eq.s32.totalorder %s30, 0
      %p99 = por %p97, %p98
      %s101 = sadd.s32 %s100, 1
      %p104 = scmp.eq.s32.totalorder %s24, 1
      %p105 = scmp.ne.s32.totalorder %s100, %s102
      %p106 = scmp.eq.s32.totalorder %s24, 0
      %p107 = por %p105, %p106
      %p108 = scmp.ne.s32.totalorder %s100, %s102
      %p109 = scmp.eq.s32.totalorder %s29, 1
      %p110 = por %p108, %p109
      %p111 = scmp.ne.s32.totalorder %s102, %s103
      %p112 = scmp.eq.s32.totalorder %s29, 0
      %p113 = por %p111, %p112
      %p114 = scmp.ne.s32.totalorder %s102, %s103
      %p115 = scmp.eq.s32.totalorder %s30, 1
      %p116 = por %p114, %p115
      %p118 = scmp.ne.s32.totalorder %s103, %s117
      %p119 = scmp.eq.s32.totalorder %s30, 0
      %p120 = por %p118, %p119
      %s122 = sadd.s32 %s121, 1
      %p125 = scmp.eq.s32.totalorder %s24, 1
      %p126 = scmp.ne.s32.totalorder %s121, %s123
      %p127 = scmp.eq.s32.totalorder %s24, 0
      %p128 = por %p126, %p127
      %p129 = scmp.ne.s32.totalorder %s121, %s123
      %p130 = scmp.eq.s32.totalorder %s29, 1
      %p131 = por %p129, %p130
      %p132 = scmp.ne.s32.totalorder %s123, %s124
      %p133 = scmp.eq.s32.totalorder %s29, 0
      %p134 = por %p132, %p133
      %p135 = scmp.ne.s32.totalorder %s123, %s124
      %p136 = scmp.eq.s32.totalorder %s30, 1
      %p137 = por %p135, %p136
      %p139 = scmp.ne.s32.totalorder %s124, %s138
      %p140 = scmp.eq.s32.totalorder %s30, 0
      %p141 = por %p139, %p140
      %s143 = sadd.s32 %s142, 1
      %p146 = scmp.eq.s32.totalorder %s24, 1
      %p147 = scmp.ne.s32.totalorder %s142, %s144
      %p148 = scmp.eq.s32.totalorder %s24, 0
      %p149 = por %p147, %p148
      %p150 = scmp.ne.s32.totalorder %s142, %s144
      %p151 = scmp.eq.s32.totalorder %s29, 1
      %p152 = por %p150, %p151
      %p153 = scmp.ne.s32.totalorder %s144, %s145
      %p154 = scmp.eq.s32.totalorder %s29, 0
      %p155 = por %p153, %p154
      %p156 = scmp.ne.s32.totalorder %s144, %s145
      %p157 = scmp.eq.s32.totalorder %s30, 1
      %p158 = por %p156, %p157
      %p160 = scmp.ne.s32.totalorder %s145, %s159
      %p161 = scmp.eq.s32.totalorder %s30, 0
      %p162 = por %p160, %p161
      %s164 = sadd.s32 %s163, 1
      %p167 = scmp.eq.s32.totalorder %s24, 1
      %p168 = scmp.ne.s32.totalorder %s163, %s165
      %p169 = scmp.eq.s32.totalorder %s24, 0
      %p170 = por %p168, %p169
      %p171 = scmp.ne.s32.totalorder %s163, %s165
      %p172 = scmp.eq.s32.totalorder %s29, 1
      %p173 = por %p171, %p172
      %p174 = scmp.ne.s32.totalorder %s165, %s166
      %p175 = scmp.eq.s32.totalorder %s29, 0
      %p176 = por %p174, %p175
      %p177 = scmp.ne.s32.totalorder %s165, %s166
      %p178 = scmp.eq.s32.totalorder %s30, 1
      %p179 = por %p177, %p178
      %p181 = scmp.ne.s32.totalorder %s166, %s180
      %p182 = scmp.eq.s32.totalorder %s30, 0
      %p183 = por %p181, %p182
      %s185 = sadd.s32 %s184, 1
      %p188 = scmp.eq.s32.totalorder %s24, 1
      %p189 = scmp.ne.s32.totalorder %s184, %s186
      %p190 = scmp.eq.s32.totalorder %s24, 0
      %p191 = por %p189, %p190
      %p192 = scmp.ne.s32.totalorder %s184, %s186
      %p193 = scmp.eq.s32.totalorder %s29, 1
      %p194 = por %p192, %p193
      %p195 = scmp.ne.s32.totalorder %s186, %s187
      %p196 = scmp.eq.s32.totalorder %s29, 0
      %p197 = por %p195, %p196
      %p198 = scmp.ne.s32.totalorder %s186, %s187
      %p199 = scmp.eq.s32.totalorder %s30, 1
      %p200 = por %p198, %p199
      %p202 = scmp.ne.s32.totalorder %s187, %s201
      %p203 = scmp.eq.s32.totalorder %s30, 0
      %p204 = por %p202, %p203
      %s206 = sadd.s32 %s205, 1
      %p209 = scmp.eq.s32.totalorder %s24, 1
      %p210 = scmp.ne.s32.totalorder %s205, %s207
      %p211 = scmp.eq.s32.totalorder %s24, 0
      %p212 = por %p210, %p211
      %p213 = scmp.ne.s32.totalorder %s205, %s207
      %p214 = scmp.eq.s32.totalorder %s29, 1
      %p215 = por %p213, %p214
      %p216 = scmp.ne.s32.totalorder %s207, %s208
      %p217 = scmp.eq.s32.totalorder %s29, 0
      %p218 = por %p216, %p217
      %p219 = scmp.ne.s32.totalorder %s207, %s208
      %p220 = scmp.eq.s32.totalorder %s30, 1
      %p221 = por %p219, %p220
      %p223 = scmp.ne.s32.totalorder %s208, %s222
      %p224 = scmp.eq.s32.totalorder %s30, 0
      %p225 = por %p223, %p224
      %s227 = sadd.s32 %s226, 1
      %p230 = scmp.eq.s32.totalorder %s24, 1
      %p231 = scmp.ne.s32.totalorder %s226, %s228
      %p232 = scmp.eq.s32.totalorder %s24, 0
      %p233 = por %p231, %p232
      %p234 = scmp.ne.s32.totalorder %s226, %s228
      %p235 = scmp.eq.s32.totalorder %s29, 1
      %p236 = por %p234, %p235
      %p237 = scmp.ne.s32.totalorder %s228, %s229
      %p238 = scmp.eq.s32.totalorder %s29, 0
      %p239 = por %p237, %p238
      %p240 = scmp.ne.s32.totalorder %s228, %s229
      %p241 = scmp.eq.s32.totalorder %s30, 1
      %p242 = por %p240, %p241
      %p244 = scmp.ne.s32.totalorder %s229, %s243
      %p245 = scmp.eq.s32.totalorder %s30, 0
      %p246 = por %p244, %p245
      %s248 = sadd.s32 %s247, 1
      %p251 = scmp.eq.s32.totalorder %s24, 1
      %p252 = scmp.ne.s32.totalorder %s247, %s249
      %p253 = scmp.eq.s32.totalorder %s24, 0
      %p254 = por %p252, %p253
      %p255 = scmp.ne.s32.totalorder %s247, %s249
      %p256 = scmp.eq.s32.totalorder %s29, 1
      %p257 = por %p255, %p256
      %p258 = scmp.ne.s32.totalorder %s249, %s250
      %p259 = scmp.eq.s32.totalorder %s29, 0
      %p260 = por %p258, %p259
      %p261 = scmp.ne.s32.totalorder %s249, %s250
      %p262 = scmp.eq.s32.totalorder %s30, 1
      %p263 = por %p261, %p262
      %p265 = scmp.ne.s32.totalorder %s250, %s264
      %p266 = scmp.eq.s32.totalorder %s30, 0
      %p267 = por %p265, %p266
      %s269 = sadd.s32 %s268, 1
      %p272 = scmp.eq.s32.totalorder %s24, 1
      %p273 = scmp.ne.s32.totalorder %s268, %s270
      %p274 = scmp.eq.s32.totalorder %s24, 0
      %p275 = por %p273, %p274
      %p276 = scmp.ne.s32.totalorder %s268, %s270
      %p277 = scmp.eq.s32.totalorder %s29, 1
      %p278 = por %p276, %p277
      %p279 = scmp.ne.s32.totalorder %s270, %s271
      %p280 = scmp.eq.s32.totalorder %s29, 0
      %p281 = por %p279, %p280
      %p282 = scmp.ne.s32.totalorder %s270, %s271
      %p283 = scmp.eq.s32.totalorder %s30, 1
      %p284 = por %p282, %p283
      %p286 = scmp.ne.s32.totalorder %s271, %s285
      %p287 = scmp.eq.s32.totalorder %s30, 0
      %p288 = por %p286, %p287
      %s290 = sadd.s32 %s289, 1
      %p293 = scmp.eq.s32.totalorder %s24, 1
      %p294 = scmp.ne.s32.totalorder %s289, %s291
      %p295 = scmp.eq.s32.totalorder %s24, 0
      %p296 = por %p294, %p295
      %p297 = scmp.ne.s32.totalorder %s289, %s291
      %p298 = scmp.eq.s32.totalorder %s29, 1
      %p299 = por %p297, %p298
      %p300 = scmp.ne.s32.totalorder %s291, %s292
      %p301 = scmp.eq.s32.totalorder %s29, 0
      %p302 = por %p300, %p301
      %p303 = scmp.ne.s32.totalorder %s291, %s292
      %p304 = scmp.eq.s32.totalorder %s30, 1
      %p305 = por %p303, %p304
      %p307 = scmp.ne.s32.totalorder %s292, %s306
      %p308 = scmp.eq.s32.totalorder %s30, 0
      %p309 = por %p307, %p308
      %s311 = sadd.s32 %s310, 1
      %p314 = scmp.eq.s32.totalorder %s24, 1
      %p315 = scmp.ne.s32.totalorder %s310, %s312
      %p316 = scmp.eq.s32.totalorder %s24, 0
      %p317 = por %p315, %p316
      %p318 = scmp.ne.s32.totalorder %s310, %s312
      %p319 = scmp.eq.s32.totalorder %s29, 1
      %p320 = por %p318, %p319
      %p321 = scmp.ne.s32.totalorder %s312, %s313
      %p322 = scmp.eq.s32.totalorder %s29, 0
      %p323 = por %p321, %p322
      %p324 = scmp.ne.s32.totalorder %s312, %s313
      %p325 = scmp.eq.s32.totalorder %s30, 1
      %p326 = por %p324, %p325
      %p328 = scmp.ne.s32.totalorder %s313, %s327
      %p329 = scmp.eq.s32.totalorder %s30, 0
      %p330 = por %p328, %p329
      %s332 = sadd.s32 %s331, 1
      %p335 = scmp.eq.s32.totalorder %s24, 1
      %p336 = scmp.ne.s32.totalorder %s331, %s333
      %p337 = scmp.eq.s32.totalorder %s24, 0
      %p338 = por %p336, %p337
      %p339 = scmp.ne.s32.totalorder %s331, %s333
      %p340 = scmp.eq.s32.totalorder %s29, 1
      %p341 = por %p339, %p340
      %p342 = scmp.ne.s32.totalorder %s333, %s334
      %p343 = scmp.eq.s32.totalorder %s29, 0
      %p344 = por %p342, %p343
      %p345 = scmp.ne.s32.totalorder %s333, %s334
      %p346 = scmp.eq.s32.totalorder %s30, 1
      %p347 = por %p345, %p346
      %p349 = scmp.ne.s32.totalorder %s334, %s348
      %p350 = scmp.eq.s32.totalorder %s30, 0
      %p351 = por %p349, %p350
      %s352 = ssub.s32 %s24, %s31
      %p353 = scmp.eq.s32.totalorder %s352, 0
      %s355 = sadd.s32 %s354, 1
      %s356 = scalar_select %p353, %s354, %s355
      %p359 = pneg %p353
      %p360 = scmp.eq.s32.totalorder %s24, 1
      %p361 = por %p359, %p360
      %p362 = scmp.ne.s32.totalorder %s354, %s357
      %p363 = scmp.eq.s32.totalorder %s24, 0
      %p364 = por %p362, %p363
      %p365 = scmp.ne.s32.totalorder %s354, %s357
      %p366 = scmp.eq.s32.totalorder %s29, 1
      %p367 = por %p365, %p366
      %p368 = scmp.ne.s32.totalorder %s357, %s358
      %p369 = scmp.eq.s32.totalorder %s29, 0
      %p370 = por %p368, %p369
      %p371 = scmp.ne.s32.totalorder %s357, %s358
      %p372 = scmp.eq.s32.totalorder %s30, 1
      %p373 = por %p371, %p372
      %p375 = scmp.ne.s32.totalorder %s358, %s374
      %p376 = scmp.eq.s32.totalorder %s30, 0
      %p377 = por %p375, %p376
      %p378 = scmp.le.s32.totalorder 1, %s24
      %p379 = scmp.lt.s32.totalorder %s24, 3
      %p380 = pnand %p378, %p379
      %p381 = pneg %p380
      // Predicated region
      $region9: #{lenet5_forward.1} parent=5 // pred_check
        _
      $region10: #{lenet5_forward.1} parent=5 // pred_check_branch
        %383 = sbr.rel (%p380) target = $region12
      $region11: #{lenet5_forward.1} parent=5 // pred_region
        %s384 = ssub.s32 %s24, 1
        // Predicated region
        $region13: #{lenet5_forward.1} parent=11 // pred_check
          %p385 = pneg %p71
        $region14: #{lenet5_forward.1} parent=11 // pred_check_branch
          %387 = sbr.rel (%p385) target = $region16
        $region15: #{lenet5_forward.1} parent=11 // pred_region
          _
        $region16: #{lenet5_forward.1} parent=11 // pred_fallthru
          _
        // Predicated region
        $region17: #{lenet5_forward.1} parent=11 // pred_check
          %p388 = pneg %p92
        $region18: #{lenet5_forward.1} parent=11 // pred_check_branch
          %390 = sbr.rel (%p388) target = $region20
        $region19: #{lenet5_forward.1} parent=11 // pred_region
          _
        $region20: #{lenet5_forward.1} parent=11 // pred_fallthru
          _
        // Predicated region
        $region21: #{lenet5_forward.1} parent=11 // pred_check
          %p391 = pneg %p113
        $region22: #{lenet5_forward.1} parent=11 // pred_check_branch
          %393 = sbr.rel (%p391) target = $region24
        $region23: #{lenet5_forward.1} parent=11 // pred_region
          _
        $region24: #{lenet5_forward.1} parent=11 // pred_fallthru
          _
        // Predicated region
        $region25: #{lenet5_forward.1} parent=11 // pred_check
          %p394 = pneg %p134
        $region26: #{lenet5_forward.1} parent=11 // pred_check_branch
          %396 = sbr.rel (%p394) target = $region28
        $region27: #{lenet5_forward.1} parent=11 // pred_region
          _
        $region28: #{lenet5_forward.1} parent=11 // pred_fallthru
          _
        // Predicated region
        $region29: #{lenet5_forward.1} parent=11 // pred_check
          %p397 = pneg %p155
        $region30: #{lenet5_forward.1} parent=11 // pred_check_branch
          %399 = sbr.rel (%p397) target = $region32
        $region31: #{lenet5_forward.1} parent=11 // pred_region
          _
        $region32: #{lenet5_forward.1} parent=11 // pred_fallthru
          _
        // Predicated region
        $region33: #{lenet5_forward.1} parent=11 // pred_check
          %p400 = pneg %p176
        $region34: #{lenet5_forward.1} parent=11 // pred_check_branch
          %402 = sbr.rel (%p400) target = $region36
        $region35: #{lenet5_forward.1} parent=11 // pred_region
          _
        $region36: #{lenet5_forward.1} parent=11 // pred_fallthru
          _
        // Predicated region
        $region37: #{lenet5_forward.1} parent=11 // pred_check
          %p403 = pneg %p197
        $region38: #{lenet5_forward.1} parent=11 // pred_check_branch
          %405 = sbr.rel (%p403) target = $region40
        $region39: #{lenet5_forward.1} parent=11 // pred_region
          _
        $region40: #{lenet5_forward.1} parent=11 // pred_fallthru
          _
        // Predicated region
        $region41: #{lenet5_forward.1} parent=11 // pred_check
          %p406 = pneg %p218
        $region42: #{lenet5_forward.1} parent=11 // pred_check_branch
          %408 = sbr.rel (%p406) target = $region44
        $region43: #{lenet5_forward.1} parent=11 // pred_region
          _
        $region44: #{lenet5_forward.1} parent=11 // pred_fallthru
          _
        // Predicated region
        $region45: #{lenet5_forward.1} parent=11 // pred_check
          %p409 = pneg %p239
        $region46: #{lenet5_forward.1} parent=11 // pred_check_branch
          %411 = sbr.rel (%p409) target = $region48
        $region47: #{lenet5_forward.1} parent=11 // pred_region
          _
        $region48: #{lenet5_forward.1} parent=11 // pred_fallthru
          _
        // Predicated region
        $region49: #{lenet5_forward.1} parent=11 // pred_check
          %p412 = pneg %p260
        $region50: #{lenet5_forward.1} parent=11 // pred_check_branch
          %414 = sbr.rel (%p412) target = $region52
        $region51: #{lenet5_forward.1} parent=11 // pred_region
          _
        $region52: #{lenet5_forward.1} parent=11 // pred_fallthru
          _
        // Predicated region
        $region53: #{lenet5_forward.1} parent=11 // pred_check
          %p415 = pneg %p281
        $region54: #{lenet5_forward.1} parent=11 // pred_check_branch
          %417 = sbr.rel (%p415) target = $region56
        $region55: #{lenet5_forward.1} parent=11 // pred_region
          _
        $region56: #{lenet5_forward.1} parent=11 // pred_fallthru
          _
        // Predicated region
        $region57: #{lenet5_forward.1} parent=11 // pred_check
          %p418 = pneg %p302
        $region58: #{lenet5_forward.1} parent=11 // pred_check_branch
          %420 = sbr.rel (%p418) target = $region60
        $region59: #{lenet5_forward.1} parent=11 // pred_region
          _
        $region60: #{lenet5_forward.1} parent=11 // pred_fallthru
          _
        // Predicated region
        $region61: #{lenet5_forward.1} parent=11 // pred_check
          %p421 = pneg %p323
        $region62: #{lenet5_forward.1} parent=11 // pred_check_branch
          %423 = sbr.rel (%p421) target = $region64
        $region63: #{lenet5_forward.1} parent=11 // pred_region
          _
        $region64: #{lenet5_forward.1} parent=11 // pred_fallthru
          _
        // Predicated region
        $region65: #{lenet5_forward.1} parent=11 // pred_check
          %p424 = pneg %p344
        $region66: #{lenet5_forward.1} parent=11 // pred_check_branch
          %426 = sbr.rel (%p424) target = $region68
        $region67: #{lenet5_forward.1} parent=11 // pred_region
          _
        $region68: #{lenet5_forward.1} parent=11 // pred_fallthru
          _
      $region12: #{lenet5_forward.1} parent=5 // pred_fallthru
        _
      %p427 = scmp.lt.s32.totalorder %s24, 2
      // Predicated region
      $region69: #{lenet5_forward.1} parent=5 // pred_check
        %p428 = pneg %p427
      $region70: #{lenet5_forward.1} parent=5 // pred_check_branch
        %430 = sbr.rel (%p428) target = $region72
      $region71: #{lenet5_forward.1} parent=5 // pred_region
        // Predicated region
        $region73: #{lenet5_forward.1} parent=71 // pred_check
          %p431 = pneg %p44
        $region74: #{lenet5_forward.1} parent=71 // pred_check_branch
          %433 = sbr.rel (%p431) target = $region76
        $region75: #{lenet5_forward.1} parent=71 // pred_region
          %p434 = scmp.lt.s32.totalorder %s24, 1
          %s435 = scalar_select %p434, %s24, 1
          %s436 = smul.addr %s435, 4
          %s437 = smul.addr %s436, 8
          %s438 = scalar_lea.vmem %s0, %s437
        $region76: #{lenet5_forward.1} parent=71 // pred_fallthru
          _
      $region72: #{lenet5_forward.1} parent=5 // pred_fallthru
        _
      %p439 = scmp.le.s32.totalorder 1, %s24
      %p440 = scmp.lt.s32.totalorder %s24, 3
      %p441 = pnand %p439, %p440
      %p442 = pneg %p441
      // Predicated region
      $region77: #{lenet5_forward.1} parent=5 // pred_check
        _
      $region78: #{lenet5_forward.1} parent=5 // pred_check_branch
        %444 = sbr.rel (%p441) target = $region80
      $region79: #{lenet5_forward.1} parent=5 // pred_region
        %s445 = ssub.s32 %s24, 1
        %p446 = scmp.lt.s32.totalorder %s29, 1
        %s447 = scalar_select %p446, %s29, 1
        %s448 = smul.addr %s447, 4
        %s449 = smul.addr %s448, 8
        %s450 = scalar_lea.vmem %s0, %s449
        %p451 = pneg %p50
        %p452 = pneg %p47
        %p453 = pneg %p71
        %p454 = pneg %p68
        %p455 = pneg %p92
        %p456 = pneg %p89
        %p457 = pneg %p113
        %p458 = pneg %p110
        %p459 = pneg %p134
        %p460 = pneg %p131
        %p461 = pneg %p155
        %p462 = pneg %p152
        %p463 = pneg %p176
        %p464 = pneg %p173
        %p465 = pneg %p197
        %p466 = pneg %p194
        %p467 = pneg %p218
        %p468 = pneg %p215
        %p469 = pneg %p239
        %p470 = pneg %p236
        %p471 = pneg %p260
        %p472 = pneg %p257
        %p473 = pneg %p281
        %p474 = pneg %p278
        %p475 = pneg %p302
        %p476 = pneg %p299
        %p477 = pneg %p323
        %p478 = pneg %p320
        %p479 = pneg %p344
        %p480 = pneg %p341
        %p481 = pneg %p370
        %p482 = pneg %p367
        %s483 = sand.u32 %s357, 1
        %s484 = scalar_lea.sflag [#allocation3], %s483
        %s485 = sand.u32 %s357, 1
        %s486 = scalar_lea.vmem [#allocation2], %s485
        %p487 = scmp.lt.s32.totalorder %s29, 1
        %s488 = scalar_select %p487, %s29, 1
        %s489 = smul.addr %s488, 4
        %s490 = smul.addr %s489, 8
        %s491 = scalar_lea.vmem %s0, %s490
        %v492 = vld [vmem:[%s491] sm:$0xff]
        %v493 = vld [vmem:[%s491 + $0x8] sm:$0xff]
        %v494 = vld [vmem:[%s491 + $0x10] sm:$0xff]
        %v495 = vld [vmem:[%s491 + $0x18] sm:$0xff]
        %v496 = vld [vmem:[%s2] sm:$0x3]
        %v497 = vld [vmem:[%s1] sm:$0xff]
        %v498 = vld [vmem:[%s1 + $0x8] sm:$0xff]
        %v499 = vld [vmem:[%s1 + $0x10] sm:$0xff]
        %v500 = vld [vmem:[%s1 + $0x18] sm:$0xff]
        %v501 = vld [vmem:[%s1 + $0x20] sm:$0xff]
        %v502 = vld [vmem:[%s1 + $0x28] sm:$0xff]
        %v503 = vld [vmem:[%s1 + $0x30] sm:$0xff]
        %v504 = vld [vmem:[%s1 + $0x38] sm:$0xff]
        %vm505 = vcmask 261120
        %v507 = vsel %vm505, %v492, 0
        %v510 = vsel %vm505, %v493, 0
        %v513 = vsel %vm505, %v494, 0
        %v516 = vsel %vm505, %v495, 0
        %518 = vmatprep.subr.mxu0 %v498
        %519 = vmatpush1.msra.mxu0 %v497
        %520 = vmatprep.subr.mxu0 %v500
        %521 = vmatpush1.msra.mxu0 %v499
        %522 = vmatprep.subr.mxu0 %v502
        %523 = vmatpush1.msra.mxu0 %v501
        %524 = vmatprep.subr.mxu0 %v504
        %525 = vmatpush1.msra.mxu0 %v503
        %526 = vmatprep.subr.mxu0 0.0
        %527 = vmatpush1.msra.mxu0 0.0
        %528 = vmatprep.subr.mxu0 0.0
        %529 = vmatpush1.msra.mxu0 0.0
        %530 = vmatprep.subr.mxu0 0.0
        %531 = vmatpush1.msra.mxu0 0.0
        %532 = vmatprep.subr.mxu0 0.0
        %533 = vmatpush1.msra.mxu0 0.0
        %534 = vmatprep.subr.mxu0 0.0
        %535 = vmatpush1.msra.mxu0 0.0
        %536 = vmatprep.subr.mxu0 0.0
        %537 = vmatpush1.msra.mxu0 0.0
        %538 = vmatprep.subr.mxu0 0.0
        %539 = vmatpush1.msra.mxu0 0.0
        %540 = vmatprep.subr.mxu0 0.0
        %541 = vmatpush1.msra.mxu0 0.0
        %542 = vmatprep.subr.mxu0 0.0
        %543 = vmatpush1.msra.mxu0 0.0
        %544 = vmatprep.subr.mxu0 0.0
        %545 = vmatpush1.msra.mxu0 0.0
        %546 = vmatprep.subr.mxu0 0.0
        %547 = vmatpush1.msra.mxu0 0.0
        %548 = vmatprep.subr.mxu0 0.0
        %549 = vmatpush1.msra.mxu0 0.0
        %550 = vmatprep.subr.mxu0 0.0
        %551 = vmatpush1.msra.mxu0 0.0
        %552 = vmatprep.subr.mxu0 0.0
        %553 = vmatpush1.msra.mxu0 0.0
        %554 = vmatprep.subr.mxu0 0.0
        %555 = vmatpush1.msra.mxu0 0.0
        %556 = vmatprep.subr.mxu0 0.0
        %557 = vmatpush1.msra.mxu0 0.0
        %558 = vmatprep.subr.mxu0 0.0
        %559 = vmatpush1.msra.mxu0 0.0
        %560 = vmatprep.subr.mxu0 0.0
        %561 = vmatpush1.msra.mxu0 0.0
        %562 = vmatprep.subr.mxu0 0.0
        %563 = vmatpush1.msra.mxu0 0.0
        %564 = vmatprep.subr.mxu0 0.0
        %565 = vmatpush1.msra.mxu0 0.0
        %566 = vmatprep.subr.mxu0 0.0
        %567 = vmatpush1.msra.mxu0 0.0
        %568 = vmatprep.subr.mxu0 0.0
        %569 = vmatpush1.msra.mxu0 0.0
        %570 = vmatprep.subr.mxu0 0.0
        %571 = vmatpush1.msra.mxu0 0.0
        %572 = vmatprep.subr.mxu0 0.0
        %573 = vmatpush1.msra.mxu0 0.0
        %574 = vmatprep.subr.mxu0 0.0
        %575 = vmatpush1.msra.mxu0 0.0
        %576 = vmatprep.subr.mxu0 0.0
        %577 = vmatpush1.msra.mxu0 0.0
        %578 = vmatprep.subr.mxu0 0.0
        %579 = vmatpush1.msra.mxu0 0.0
        %580 = vmatprep.subr.mxu0 0.0
        %581 = vmatpush1.msra.mxu0 0.0
        %582 = vmatprep.mubr.f32.mxu0 0.0
        %583 = vmatmul.mubr.f32.gmra.mrb[0].mxu0 %v507
        %v584 = vpop.f32.mrb[0].mxu0
        %v585 = vadd.f32 0.0, %v584
        %v586 = vpop.f32.mrb[0].mxu0
        %v587 = vadd.f32 0.0, %v586
        %588 = vmatprep.mubr.f32.mxu0 0.0
        %589 = vmatmul.mubr.f32.gmra.mrb[0].mxu0 %v510
        %v590 = vpop.f32.mrb[0].mxu0
        %v591 = vadd.f32 0.0, %v590
        %v592 = vpop.f32.mrb[0].mxu0
        %v593 = vadd.f32 0.0, %v592
        %594 = vmatprep.mubr.f32.mxu0 0.0
        %595 = vmatmul.mubr.f32.gmra.mrb[0].mxu0 %v513
        %v596 = vpop.f32.mrb[0].mxu0
        %v597 = vadd.f32 0.0, %v596
        %v598 = vpop.f32.mrb[0].mxu0
        %v599 = vadd.f32 0.0, %v598
        %600 = vmatprep.mubr.f32.mxu0 0.0
        %601 = vmatmul.mubr.f32.gmra.mrb[0].mxu0 %v516
        %v602 = vpop.f32.mrb[0].mxu0
        %v603 = vadd.f32 0.0, %v602
        %v604 = vpop.f32.mrb[0].mxu0
        %v605 = vadd.f32 0.0, %v604
        %606 = vdwg.mxu0
        %v608 = vlaneseq
        %v609 = vshrl.u32 %v608, 7
        %v610 = vsub.s32 0, %v609
        %v611 = vrot.slane %v496, %v610
        %v612 = vlaneseq
        %v613 = vshrl.u32 %v612, 7
        %v614 = vsub.s32 1, %v613
        %v615 = vrot.slane %v496, %v614
        %v618 = vadd.f32 %v611, %v585
        %v619 = vadd.f32 %v615, %v587
        %v620 = vadd.f32 %v611, %v591
        %v621 = vadd.f32 %v615, %v593
        %v622 = vadd.f32 %v611, %v597
        %v623 = vadd.f32 %v615, %v599
        %v624 = vadd.f32 %v611, %v603
        %v625 = vadd.f32 %v615, %v605
        %s626 = scalar_lea.vmem %s1, 64
        %v627 = vld [vmem:[%s626] sm:$0xff]
        %v628 = vld [vmem:[%s626 + $0x8] sm:$0xff]
        %v629 = vld [vmem:[%s626 + $0x10] sm:$0xff]
        %v630 = vld [vmem:[%s626 + $0x18] sm:$0xff]
        %v631 = vld [vmem:[%s626 + $0x20] sm:$0xff]
        %v632 = vld [vmem:[%s626 + $0x28] sm:$0xff]
        %v633 = vld [vmem:[%s626 + $0x30] sm:$0xff]
        %v634 = vld [vmem:[%s626 + $0x38] sm:$0xff]
        %vm635 = vcmask 1046528
        %v636 = vrot.slane %v492, 1
        %v637 = vrot.slane %v493, 1
        %v638 = vsel %vm635, %v636, %v637
        %v639 = vrot.slane %v494, 1
        %v640 = vsel %vm635, %v637, %v639
        %v641 = vrot.slane %v495, 1
        %v642 = vsel %vm635, %v639, %v641
        %v643 = vsel %vm505, %v638, 0
        %v645 = vsel %vm505, %v640, 0
        %v647 = vsel %vm505, %v642, 0
        %v649 = vsel %vm505, %v641, 0
        %651 = vmatprep.subr.mxu0 %v628
        %652 = vmatpush1.msra.mxu0 %v627
        %653 = vmatprep.subr.mxu0 %v630
        %654 = vmatpush1.msra.mxu0 %v629
        %655 = vmatprep.subr.mxu0 %v632
        %656 = vmatpush1.msra.mxu0 %v631
        %657 = vmatprep.subr.mxu0 %v634
        %658 = vmatpush1.msra.mxu0 %v633
        %659 = vmatprep.subr.mxu0 0.0
        %660 = vmatpush1.msra.mxu0 0.0
        %661 = vmatprep.subr.mxu0 0.0
        %662 = vmatpush1.msra.mxu0 0.0
        %663 = vmatprep.subr.mxu0 0.0
        %664 = vmatpush1.msra.mxu0 0.0
        %665 = vmatprep.subr.mxu0 0.0
        %666 = vmatpush1.msra.mxu0 0.0
        %667 = vmatprep.subr.mxu0 0.0
        %668 = vmatpush1.msra.mxu0 0.0
        %669 = vmatprep.subr.mxu0 0.0
        %670 = vmatpush1.msra.mxu0 0.0
        %671 = vmatprep.subr.mxu0 0.0
        %672 = vmatpush1.msra.mxu0 0.0
        %673 = vmatprep.subr.mxu0 0.0
        %674 = vmatpush1.msra.mxu0 0.0
        %675 = vmatprep.subr.mxu0 0.0
        %676 = vmatpush1.msra.mxu0 0.0
        %677 = vmatprep.subr.mxu0 0.0
        %678 = vmatpush1.msra.mxu0 0.0
        %679 = vmatprep.subr.mxu0 0.0
        %680 = vmatpush1.msra.mxu0 0.0
        %681 = vmatprep.subr.mxu0 0.0
        %682 = vmatpush1.msra.mxu0 0.0
        %683 = vmatprep.subr.mxu0 0.0
        %684 = vmatpush1.msra.mxu0 0.0
        %685 = vmatprep.subr.mxu0 0.0
        %686 = vmatpush1.msra.mxu0 0.0
        %687 = vmatprep.subr.mxu0 0.0
        %688 = vmatpush1.msra.mxu0 0.0
        %689 = vmatprep.subr.mxu0 0.0
        %690 = vmatpush1.msra.mxu0 0.0
        %691 = vmatprep.subr.mxu0 0.0
        %692 = vmatpush1.msra.mxu0 0.0
        %693 = vmatprep.subr.mxu0 0.0
        %694 = vmatpush1.msra.mxu0 0.0
        %695 = vmatprep.subr.mxu0 0.0
        %696 = vmatpush1.msra.mxu0 0.0
        %697 = vmatprep.subr.mxu0 0.0
        %698 = vmatpush1.msra.mxu0 0.0
        %699 = vmatprep.subr.mxu0 0.0
        %700 = vmatpush1.msra.mxu0 0.0
        %701 = vmatprep.subr.mxu0 0.0
        %702 = vmatpush1.msra.mxu0 0.0
        %703 = vmatprep.subr.mxu0 0.0
        %704 = vmatpush1.msra.mxu0 0.0
        %705 = vmatprep.subr.mxu0 0.0
        %706 = vmatpush1.msra.mxu0 0.0
        %707 = vmatprep.subr.mxu0 0.0
        %708 = vmatpush1.msra.mxu0 0.0
        %709 = vmatprep.subr.mxu0 0.0
        %710 = vmatpush1.msra.mxu0 0.0
        %711 = vmatprep.subr.mxu0 0.0
        %712 = vmatpush1.msra.mxu0 0.0
        %713 = vmatprep.subr.mxu0 0.0
        %714 = vmatpush1.msra.mxu0 0.0
        %715 = vmatprep.mubr.f32.mxu0 0.0
        %716 = vmatmul.mubr.f32.gmra.mrb[0].mxu0 %v643
        %v717 = vpop.f32.mrb[0].mxu0
        %v718 = vadd.f32 0.0, %v717
        %v719 = vpop.f32.mrb[0].mxu0
        %v720 = vadd.f32 0.0, %v719
        %721 = vmatprep.mubr.f32.mxu0 0.0
        %722 = vmatmul.mubr.f32.gmra.mrb[0].mxu0 %v645
        %v723 = vpop.f32.mrb[0].mxu0
        %v724 = vadd.f32 0.0, %v723
        %v725 = vpop.f32.mrb[0].mxu0
        %v726 = vadd.f32 0.0, %v725
        %727 = vmatprep.mubr.f32.mxu0 0.0
        %728 = vmatmul.mubr.f32.gmra.mrb[0].mxu0 %v647
        %v729 = vpop.f32.mrb[0].mxu0
        %v730 = vadd.f32 0.0, %v729
        %v731 = vpop.f32.mrb[0].mxu0
        %v732 = vadd.f32 0.0, %v731
        %733 = vmatprep.mubr.f32.mxu0 0.0
        %734 = vmatmul.mubr.f32.gmra.mrb[0].mxu0 %v649
        %v735 = vpop.f32.mrb[0].mxu0
        %v736 = vadd.f32 0.0, %v735
        %v737 = vpop.f32.mrb[0].mxu0
        %v738 = vadd.f32 0.0, %v737
        %739 = vdwg.mxu0
        %v740 = vadd.f32 %v618, %v718
        %v741 = vadd.f32 %v619, %v720
        %v742 = vadd.f32 %v620, %v724
        %v743 = vadd.f32 %v621, %v726
        %v744 = vadd.f32 %v622, %v730
        %v745 = vadd.f32 %v623, %v732
        %v746 = vadd.f32 %v624, %v736
        %v747 = vadd.f32 %v625, %v738
        %s748 = scalar_lea.vmem %s1, 128
        %v749 = vld [vmem:[%s748] sm:$0xff]
        %v750 = vld [vmem:[%s748 + $0x8] sm:$0xff]
        %v751 = vld [vmem:[%s748 + $0x10] sm:$0xff]
        %v752 = vld [vmem:[%s748 + $0x18] sm:$0xff]
        %v753 = vld [vmem:[%s748 + $0x20] sm:$0xff]
        %v754 = vld [vmem:[%s748 + $0x28] sm:$0xff]
        %v755 = vld [vmem:[%s748 + $0x30] sm:$0xff]
        %v756 = vld [vmem:[%s748 + $0x38] sm:$0xff]
        %vm757 = vcmask 1045504
        %v758 = vrot.slane %v492, 2
        %v759 = vrot.slane %v493, 2
        %v760 = vsel %vm757, %v758, %v759
        %v761 = vrot.slane %v494, 2
        %v762 = vsel %vm757, %v759, %v761
        %v763 = vrot.slane %v495, 2
        %v764 = vsel %vm757, %v761, %v763
        %v765 = vsel %vm505, %v760, 0
        %v767 = vsel %vm505, %v762, 0
        %v769 = vsel %vm505, %v764, 0
        %v771 = vsel %vm505, %v763, 0
        %773 = vmatprep.subr.mxu0 %v750
        %774 = vmatpush1.msra.mxu0 %v749
        %775 = vmatprep.subr.mxu0 %v752
        %776 = vmatpush1.msra.mxu0 %v751
        %777 = vmatprep.subr.mxu0 %v754
        %778 = vmatpush1.msra.mxu0 %v753
        %779 = vmatprep.subr.mxu0 %v756
        %780 = vmatpush1.msra.mxu0 %v755
        %781 = vmatprep.subr.mxu0 0.0
        %782 = vmatpush1.msra.mxu0 0.0
        %783 = vmatprep.subr.mxu0 0.0
        %784 = vmatpush1.msra.mxu0 0.0
        %785 = vmatprep.subr.mxu0 0.0
        %786 = vmatpush1.msra.mxu0 0.0
        %787 = vmatprep.subr.mxu0 0.0
        %788 = vmatpush1.msra.mxu0 0.0
        %789 = vmatprep.subr.mxu0 0.0
        %790 = vmatpush1.msra.mxu0 0.0
        %791 = vmatprep.subr.mxu0 0.0
        %792 = vmatpush1.msra.mxu0 0.0
        %793 = vmatprep.subr.mxu0 0.0
        %794 = vmatpush1.msra.mxu0 0.0
        %795 = vmatprep.subr.mxu0 0.0
        %796 = vmatpush1.msra.mxu0 0.0
        %797 = vmatprep.subr.mxu0 0.0
        %798 = vmatpush1.msra.mxu0 0.0
        %799 = vmatprep.subr.mxu0 0.0
        %800 = vmatpush1.msra.mxu0 0.0
        %801 = vmatprep.subr.mxu0 0.0
        %802 = vmatpush1.msra.mxu0 0.0
        %803 = vmatprep.subr.mxu0 0.0
        %804 = vmatpush1.msra.mxu0 0.0
        %805 = vmatprep.subr.mxu0 0.0
        %806 = vmatpush1.msra.mxu0 0.0
        %807 = vmatprep.subr.mxu0 0.0
        %808 = vmatpush1.msra.mxu0 0.0
        %809 = vmatprep.subr.mxu0 0.0
        %810 = vmatpush1.msra.mxu0 0.0
        %811 = vmatprep.subr.mxu0 0.0
        %812 = vmatpush1.msra.mxu0 0.0
        %813 = vmatprep.subr.mxu0 0.0
        %814 = vmatpush1.msra.mxu0 0.0
        %815 = vmatprep.subr.mxu0 0.0
        %816 = vmatpush1.msra.mxu0 0.0
        %817 = vmatprep.subr.mxu0 0.0
        %818 = vmatpush1.msra.mxu0 0.0
        %819 = vmatprep.subr.mxu0 0.0
        %820 = vmatpush1.msra.mxu0 0.0
        %821 = vmatprep.subr.mxu0 0.0
        %822 = vmatpush1.msra.mxu0 0.0
        %823 = vmatprep.subr.mxu0 0.0
        %824 = vmatpush1.msra.mxu0 0.0
        %825 = vmatprep.subr.mxu0 0.0
        %826 = vmatpush1.msra.mxu0 0.0
        %827 = vmatprep.subr.mxu0 0.0
        %828 = vmatpush1.msra.mxu0 0.0
        %829 = vmatprep.subr.mxu0 0.0
        %830 = vmatpush1.msra.mxu0 0.0
        %831 = vmatprep.subr.mxu0 0.0
        %832 = vmatpush1.msra.mxu0 0.0
        %833 = vmatprep.subr.mxu0 0.0
        %834 = vmatpush1.msra.mxu0 0.0
        %835 = vmatprep.subr.mxu0 0.0
        %836 = vmatpush1.msra.mxu0 0.0
        %837 = vmatprep.mubr.f32.mxu0 0.0
        %838 = vmatmul.mubr.f32.gmra.mrb[0].mxu0 %v765
        %v839 = vpop.f32.mrb[0].mxu0
        %v840 = vadd.f32 0.0, %v839
        %v841 = vpop.f32.mrb[0].mxu0
        %v842 = vadd.f32 0.0, %v841
        %843 = vmatprep.mubr.f32.mxu0 0.0
        %844 = vmatmul.mubr.f32.gmra.mrb[0].mxu0 %v767
        %v845 = vpop.f32.mrb[0].mxu0
        %v846 = vadd.f32 0.0, %v845
        %v847 = vpop.f32.mrb[0].mxu0
        %v848 = vadd.f32 0.0, %v847
        %849 = vmatprep.mubr.f32.mxu0 0.0
        %850 = vmatmul.mubr.f32.gmra.mrb[0].mxu0 %v769
        %v851 = vpop.f32.mrb[0].mxu0
        %v852 = vadd.f32 0.0, %v851
        %v853 = vpop.f32.mrb[0].mxu0
        %v854 = vadd.f32 0.0, %v853
        %855 = vmatprep.mubr.f32.mxu0 0.0
        %856 = vmatmul.mubr.f32.gmra.mrb[0].mxu0 %v771
        %v857 = vpop.f32.mrb[0].mxu0
        %v858 = vadd.f32 0.0, %v857
        %v859 = vpop.f32.mrb[0].mxu0
        %v860 = vadd.f32 0.0, %v859
        %861 = vdwg.mxu0
        %v862 = vadd.f32 %v740, %v840
        %v863 = vadd.f32 %v741, %v842
        %v864 = vadd.f32 %v742, %v846
        %v865 = vadd.f32 %v743, %v848
        %v866 = vadd.f32 %v744, %v852
        %v867 = vadd.f32 %v745, %v854
        %v868 = vadd.f32 %v746, %v858
        %v869 = vadd.f32 %v747, %v860
        %s870 = scalar_lea.vmem %s1, 192
        %v871 = vld [vmem:[%s870] sm:$0xff]
        %v872 = vld [vmem:[%s870 + $0x8] sm:$0xff]
        %v873 = vld [vmem:[%s870 + $0x10] sm:$0xff]
        %v874 = vld [vmem:[%s870 + $0x18] sm:$0xff]
        %v875 = vld [vmem:[%s870 + $0x20] sm:$0xff]
        %v876 = vld [vmem:[%s870 + $0x28] sm:$0xff]
        %v877 = vld [vmem:[%s870 + $0x30] sm:$0xff]
        %v878 = vld [vmem:[%s870 + $0x38] sm:$0xff]
        %vm879 = vcmask 1044480
        %v880 = vrot.slane %v492, 3
        %v881 = vrot.slane %v493, 3
        %v882 = vsel %vm879, %v880, %v881
        %v883 = vrot.slane %v494, 3
        %v884 = vsel %vm879, %v881, %v883
        %v885 = vrot.slane %v495, 3
        %v886 = vsel %vm879, %v883, %v885
        %v887 = vsel %vm505, %v882, 0
        %v889 = vsel %vm505, %v884, 0
        %v891 = vsel %vm505, %v886, 0
        %v893 = vsel %vm505, %v885, 0
        %895 = vmatprep.subr.mxu0 %v872
        %896 = vmatpush1.msra.mxu0 %v871
        %897 = vmatprep.subr.mxu0 %v874
        %898 = vmatpush1.msra.mxu0 %v873
        %899 = vmatprep.subr.mxu0 %v876
        %900 = vmatpush1.msra.mxu0 %v875
        %901 = vmatprep.subr.mxu0 %v878
        %902 = vmatpush1.msra.mxu0 %v877
        %903 = vmatprep.subr.mxu0 0.0
        %904 = vmatpush1.msra.mxu0 0.0
        %905 = vmatprep.subr.mxu0 0.0
        %906 = vmatpush1.msra.mxu0 0.0
        %907 = vmatprep.subr.mxu0 0.0
        %908 = vmatpush1.msra.mxu0 0.0
        %909 = vmatprep.subr.mxu0 0.0
        %910 = vmatpush1.msra.mxu0 0.0
        %911 = vmatprep.subr.mxu0 0.0
        %912 = vmatpush1.msra.mxu0 0.0
        %913 = vmatprep.subr.mxu0 0.0
        %914 = vmatpush1.msra.mxu0 0.0
        %915 = vmatprep.subr.mxu0 0.0
        %916 = vmatpush1.msra.mxu0 0.0
        %917 = vmatprep.subr.mxu0 0.0
        %918 = vmatpush1.msra.mxu0 0.0
        %919 = vmatprep.subr.mxu0 0.0
        %920 = vmatpush1.msra.mxu0 0.0
        %921 = vmatprep.subr.mxu0 0.0
        %922 = vmatpush1.msra.mxu0 0.0
        %923 = vmatprep.subr.mxu0 0.0
        %924 = vmatpush1.msra.mxu0 0.0
        %925 = vmatprep.subr.mxu0 0.0
        %926 = vmatpush1.msra.mxu0 0.0
        %927 = vmatprep.subr.mxu0 0.0
        %928 = vmatpush1.msra.mxu0 0.0
        %929 = vmatprep.subr.mxu0 0.0
        %930 = vmatpush1.msra.mxu0 0.0
        %931 = vmatprep.subr.mxu0 0.0
        %932 = vmatpush1.msra.mxu0 0.0
        %933 = vmatprep.subr.mxu0 0.0
        %934 = vmatpush1.msra.mxu0 0.0
        %935 = vmatprep.subr.mxu0 0.0
        %936 = vmatpush1.msra.mxu0 0.0
        %937 = vmatprep.subr.mxu0 0.0
        %938 = vmatpush1.msra.mxu0 0.0
        %939 = vmatprep.subr.mxu0 0.0
        %940 = vmatpush1.msra.mxu0 0.0
        %941 = vmatprep.subr.mxu0 0.0
        %942 = vmatpush1.msra.mxu0 0.0
        %943 = vmatprep.subr.mxu0 0.0
        %944 = vmatpush1.msra.mxu0 0.0
        %945 = vmatprep.subr.mxu0 0.0
        %946 = vmatpush1.msra.mxu0 0.0
        %947 = vmatprep.subr.mxu0 0.0
        %948 = vmatpush1.msra.mxu0 0.0
        %949 = vmatprep.subr.mxu0 0.0
        %950 = vmatpush1.msra.mxu0 0.0
        %951 = vmatprep.subr.mxu0 0.0
        %952 = vmatpush1.msra.mxu0 0.0
        %953 = vmatprep.subr.mxu0 0.0
        %954 = vmatpush1.msra.mxu0 0.0
        %955 = vmatprep.subr.mxu0 0.0
        %956 = vmatpush1.msra.mxu0 0.0
        %957 = vmatprep.subr.mxu0 0.0
        %958 = vmatpush1.msra.mxu0 0.0
        %959 = vmatprep.mubr.f32.mxu0 0.0
        %960 = vmatmul.mubr.f32.gmra.mrb[0].mxu0 %v887
        %v961 = vpop.f32.mrb[0].mxu0
        %v962 = vadd.f32 0.0, %v961
        %v963 = vpop.f32.mrb[0].mxu0
        %v964 = vadd.f32 0.0, %v963
        %965 = vmatprep.mubr.f32.mxu0 0.0
        %966 = vmatmul.mubr.f32.gmra.mrb[0].mxu0 %v889
        %v967 = vpop.f32.mrb[0].mxu0
        %v968 = vadd.f32 0.0, %v967
        %v969 = vpop.f32.mrb[0].mxu0
        %v970 = vadd.f32 0.0, %v969
        %971 = vmatprep.mubr.f32.mxu0 0.0
        %972 = vmatmul.mubr.f32.gmra.mrb[0].mxu0 %v891
        %v973 = vpop.f32.mrb[0].mxu0
        %v974 = vadd.f32 0.0, %v973
        %v975 = vpop.f32.mrb[0].mxu0
        %v976 = vadd.f32 0.0, %v975
        %977 = vmatprep.mubr.f32.mxu0 0.0
        %978 = vmatmul.mubr.f32.gmra.mrb[0].mxu0 %v893
        %v979 = vpop.f32.mrb[0].mxu0
        %v980 = vadd.f32 0.0, %v979
        %v981 = vpop.f32.mrb[0].mxu0
        %v982 = vadd.f32 0.0, %v981
        %983 = vdwg.mxu0
        %v984 = vadd.f32 %v862, %v962
        %v985 = vadd.f32 %v863, %v964
        %v986 = vadd.f32 %v864, %v968
        %v987 = vadd.f32 %v865, %v970
        %v988 = vadd.f32 %v866, %v974
        %v989 = vadd.f32 %v867, %v976
        %v990 = vadd.f32 %v868, %v980
        %v991 = vadd.f32 %v869, %v982
        %s992 = scalar_lea.vmem %s1, 256
        %v993 = vld [vmem:[%s992] sm:$0xff]
        %v994 = vld [vmem:[%s992 + $0x8] sm:$0xff]
        %v995 = vld [vmem:[%s992 + $0x10] sm:$0xff]
        %v996 = vld [vmem:[%s992 + $0x18] sm:$0xff]
        %v997 = vld [vmem:[%s992 + $0x20] sm:$0xff]
        %v998 = vld [vmem:[%s992 + $0x28] sm:$0xff]
        %v999 = vld [vmem:[%s992 + $0x30] sm:$0xff]
        %v1000 = vld [vmem:[%s992 + $0x38] sm:$0xff]
        %vm1001 = vcmask 1043456
        %v1002 = vrot.slane %v492, 4
        %v1003 = vrot.slane %v493, 4
        %v1004 = vsel %vm1001, %v1002, %v1003
        %v1005 = vrot.slane %v494, 4
        %v1006 = vsel %vm1001, %v1003, %v1005
        %v1007 = vrot.slane %v495, 4
        %v1008 = vsel %vm1001, %v1005, %v1007
        %v1009 = vsel %vm505, %v1004, 0
        %v1011 = vsel %vm505, %v1006, 0
        %v1013 = vsel %vm505, %v1008, 0
        %v1015 = vsel %vm505, %v1007, 0
        %1017 = vmatprep.subr.mxu0 %v994
        %1018 = vmatpush1.msra.mxu0 %v993
        %1019 = vmatprep.subr.mxu0 %v996
        %1020 = vmatpush1.msra.mxu0 %v995
        %1021 = vmatprep.subr.mxu0 %v998
        %1022 = vmatpush1.msra.mxu0 %v997
        %1023 = vmatprep.subr.mxu0 %v1000
        %1024 = vmatpush1.msra.mxu0 %v999
        %1025 = vmatprep.subr.mxu0 0.0
        %1026 = vmatpush1.msra.mxu0 0.0
        %1027 = vmatprep.subr.mxu0 0.0
        %1028 = vmatpush1.msra.mxu0 0.0
        %1029 = vmatprep.subr.mxu0 0.0
        %1030 = vmatpush1.msra.mxu0 0.0
        %1031 = vmatprep.subr.mxu0 0.0
        %1032 = vmatpush1.msra.mxu0 0.0
        %1033 = vmatprep.subr.mxu0 0.0
        %1034 = vmatpush1.msra.mxu0 0.0
        %1035 = vmatprep.subr.mxu0 0.0
        %1036 = vmatpush1.msra.mxu0 0.0
        %1037 = vmatprep.subr.mxu0 0.0
        %1038 = vmatpush1.msra.mxu0 0.0
        %1039 = vmatprep.subr.mxu0 0.0
        %1040 = vmatpush1.msra.mxu0 0.0
        %1041 = vmatprep.subr.mxu0 0.0
        %1042 = vmatpush1.msra.mxu0 0.0
        %1043 = vmatprep.subr.mxu0 0.0
        %1044 = vmatpush1.msra.mxu0 0.0
        %1045 = vmatprep.subr.mxu0 0.0
        %1046 = vmatpush1.msra.mxu0 0.0
        %1047 = vmatprep.subr.mxu0 0.0
        %1048 = vmatpush1.msra.mxu0 0.0
        %1049 = vmatprep.subr.mxu0 0.0
        %1050 = vmatpush1.msra.mxu0 0.0
        %1051 = vmatprep.subr.mxu0 0.0
        %1052 = vmatpush1.msra.mxu0 0.0
        %1053 = vmatprep.subr.mxu0 0.0
        %1054 = vmatpush1.msra.mxu0 0.0
        %1055 = vmatprep.subr.mxu0 0.0
        %1056 = vmatpush1.msra.mxu0 0.0
        %1057 = vmatprep.subr.mxu0 0.0
        %1058 = vmatpush1.msra.mxu0 0.0
        %1059 = vmatprep.subr.mxu0 0.0
        %1060 = vmatpush1.msra.mxu0 0.0
        %1061 = vmatprep.subr.mxu0 0.0
        %1062 = vmatpush1.msra.mxu0 0.0
        %1063 = vmatprep.subr.mxu0 0.0
        %1064 = vmatpush1.msra.mxu0 0.0
        %1065 = vmatprep.subr.mxu0 0.0
        %1066 = vmatpush1.msra.mxu0 0.0
        %1067 = vmatprep.subr.mxu0 0.0
        %1068 = vmatpush1.msra.mxu0 0.0
        %1069 = vmatprep.subr.mxu0 0.0
        %1070 = vmatpush1.msra.mxu0 0.0
        %1071 = vmatprep.subr.mxu0 0.0
        %1072 = vmatpush1.msra.mxu0 0.0
        %1073 = vmatprep.subr.mxu0 0.0
        %1074 = vmatpush1.msra.mxu0 0.0
        %1075 = vmatprep.subr.mxu0 0.0
        %1076 = vmatpush1.msra.mxu0 0.0
        %1077 = vmatprep.subr.mxu0 0.0
        %1078 = vmatpush1.msra.mxu0 0.0
        %1079 = vmatprep.subr.mxu0 0.0
        %1080 = vmatpush1.msra.mxu0 0.0
        %1081 = vmatprep.mubr.f32.mxu0 0.0
        %1082 = vmatmul.mubr.f32.gmra.mrb[0].mxu0 %v1009
        %v1083 = vpop.f32.mrb[0].mxu0
        %v1084 = vadd.f32 0.0, %v1083
        %v1085 = vpop.f32.mrb[0].mxu0
        %v1086 = vadd.f32 0.0, %v1085
        %1087 = vmatprep.mubr.f32.mxu0 0.0
        %1088 = vmatmul.mubr.f32.gmra.mrb[0].mxu0 %v1011
        %v1089 = vpop.f32.mrb[0].mxu0
        %v1090 = vadd.f32 0.0, %v1089
        %v1091 = vpop.f32.mrb[0].mxu0
        %v1092 = vadd.f32 0.0, %v1091
        %1093 = vmatprep.mubr.f32.mxu0 0.0
        %1094 = vmatmul.mubr.f32.gmra.mrb[0].mxu0 %v1013
        %v1095 = vpop.f32.mrb[0].mxu0
        %v1096 = vadd.f32 0.0, %v1095
        %v1097 = vpop.f32.mrb[0].mxu0
        %v1098 = vadd.f32 0.0, %v1097
        %1099 = vmatprep.mubr.f32.mxu0 0.0
        %1100 = vmatmul.mubr.f32.gmra.mrb[0].mxu0 %v1015
        %v1101 = vpop.f32.mrb[0].mxu0
        %v1102 = vadd.f32 0.0, %v1101
        %v1103 = vpop.f32.mrb[0].mxu0
        %v1104 = vadd.f32 0.0, %v1103
        %1105 = vdwg.mxu0
        %v1106 = vadd.f32 %v984, %v1084
        %v1107 = vadd.f32 %v985, %v1086
        %v1108 = vadd.f32 %v986, %v1090
        %v1109 = vadd.f32 %v987, %v1092
        %v1110 = vadd.f32 %v988, %v1096
        %v1111 = vadd.f32 %v989, %v1098
        %v1112 = vadd.f32 %v990, %v1102
        %v1113 = vadd.f32 %v991, %v1104
        %v1114 = vmax.f32 %v1106, 0.0
        %v1115 = vmax.f32 %v1107, 0.0
        %v1116 = vmax.f32 %v1108, 0.0
        %v1117 = vmax.f32 %v1109, 0.0
        %v1118 = vmax.f32 %v1110, 0.0
        %v1119 = vmax.f32 %v1111, 0.0
        %v1120 = vmax.f32 %v1112, 0.0
        %v1121 = vmax.f32 %v1113, 0.0
        %v1122 = vld [vmem:[%s3] sm:$0xff]
        %v1123 = vld [vmem:[%s3 + $0x8] sm:$0x3f]
        %vm1124 = vcmask 228352
        %v1126 = vsel %vm1124, %v1122, 0
        %v1129 = vsel %vm1124, %v1123, 0
        %v1132 = vsel %vm1001, %v1120, 0
        %v1135 = vsel %vm1001, %v1121, 0
        %1137 = vmatprep.subr.mxu0 %v1115
        %1138 = vmatpush1.msra.mxu0 %v1114
        %1139 = vmatprep.subr.mxu0 %v1117
        %1140 = vmatpush1.msra.mxu0 %v1116
        %1141 = vmatprep.subr.mxu0 %v1119
        %1142 = vmatpush1.msra.mxu0 %v1118
        %1143 = vmatprep.subr.mxu0 %v1135
        %1144 = vmatpush1.msra.mxu0 %v1132
        %1145 = vmatprep.subr.mxu0 0.0
        %1146 = vmatpush1.msra.mxu0 0.0
        %1147 = vmatprep.subr.mxu0 0.0
        %1148 = vmatpush1.msra.mxu0 0.0
        %1149 = vmatprep.subr.mxu0 0.0
        %1150 = vmatpush1.msra.mxu0 0.0
        %1151 = vmatprep.subr.mxu0 0.0
        %1152 = vmatpush1.msra.mxu0 0.0
        %1153 = vmatprep.subr.mxu0 0.0
        %1154 = vmatpush1.msra.mxu0 0.0
        %1155 = vmatprep.subr.mxu0 0.0
        %1156 = vmatpush1.msra.mxu0 0.0
        %1157 = vmatprep.subr.mxu0 0.0
        %1158 = vmatpush1.msra.mxu0 0.0
        %1159 = vmatprep.subr.mxu0 0.0
        %1160 = vmatpush1.msra.mxu0 0.0
        %1161 = vmatprep.subr.mxu0 0.0
        %1162 = vmatpush1.msra.mxu0 0.0
        %1163 = vmatprep.subr.mxu0 0.0
        %1164 = vmatpush1.msra.mxu0 0.0
        %1165 = vmatprep.subr.mxu0 0.0
        %1166 = vmatpush1.msra.mxu0 0.0
        %1167 = vmatprep.subr.mxu0 0.0
        %1168 = vmatpush1.msra.mxu0 0.0
        %1169 = vmatprep.subr.mxu0 0.0
        %1170 = vmatpush1.msra.mxu0 0.0
        %1171 = vmatprep.subr.mxu0 0.0
        %1172 = vmatpush1.msra.mxu0 0.0
        %1173 = vmatprep.subr.mxu0 0.0
        %1174 = vmatpush1.msra.mxu0 0.0
        %1175 = vmatprep.subr.mxu0 0.0
        %1176 = vmatpush1.msra.mxu0 0.0
        %1177 = vmatprep.subr.mxu0 0.0
        %1178 = vmatpush1.msra.mxu0 0.0
        %1179 = vmatprep.subr.mxu0 0.0
        %1180 = vmatpush1.msra.mxu0 0.0
        %1181 = vmatprep.subr.mxu0 0.0
        %1182 = vmatpush1.msra.mxu0 0.0
        %1183 = vmatprep.subr.mxu0 0.0
        %1184 = vmatpush1.msra.mxu0 0.0
        %1185 = vmatprep.subr.mxu0 0.0
        %1186 = vmatpush1.msra.mxu0 0.0
        %1187 = vmatprep.subr.mxu0 0.0
        %1188 = vmatpush1.msra.mxu0 0.0
        %1189 = vmatprep.subr.mxu0 0.0
        %1190 = vmatpush1.msra.mxu0 0.0
        %1191 = vmatprep.subr.mxu0 0.0
        %1192 = vmatpush1.msra.mxu0 0.0
        %1193 = vmatprep.subr.mxu0 0.0
        %1194 = vmatpush1.msra.mxu0 0.0
        %1195 = vmatprep.subr.mxu0 0.0
        %1196 = vmatpush1.msra.mxu0 0.0
        %1197 = vmatprep.subr.mxu0 0.0
        %1198 = vmatpush1.msra.mxu0 0.0
        %1199 = vmatprep.subr.mxu0 0.0
        %1200 = vmatpush1.msra.mxu0 0.0
        %1201 = vmatprep.mubr.f32.mxu0 0.0
        %1202 = vmatmul.mubr.f32.gmra.mrb[0].mxu0 %v1126
        %v1203 = vpop.f32.mrb[0].mxu0
        %v1204 = vadd.f32 0.0, %v1203
        %v1205 = vpop.f32.mrb[0].mxu0
        %v1206 = vadd.f32 0.0, %v1205
        %1207 = vmatprep.mubr.f32.mxu0 0.0
        %1208 = vmatmul.mubr.f32.gmra.mrb[0].mxu0 %v1129
        %v1209 = vpop.f32.mrb[0].mxu0
        %v1210 = vadd.f32 0.0, %v1209
        %v1211 = vpop.f32.mrb[0].mxu0
        %v1212 = vadd.f32 0.0, %v1211
        %1213 = vdwg.mxu0
        %v1214 = vld [vmem:[%s4] sm:$0xff]
        %v1215 = vld [vmem:[%s4 + $0x8] sm:$0xff]
        %v1216 = vld [vmem:[%s4 + $0x10] sm:$0xff]
        %v1217 = vld [vmem:[%s4 + $0x18] sm:$0xff]
        %v1218 = vld [vmem:[%s4 + $0x20] sm:$0xff]
        %v1219 = vld [vmem:[%s4 + $0x28] sm:$0xff]
        %v1220 = vld [vmem:[%s4 + $0x30] sm:$0xff]
        %v1221 = vld [vmem:[%s4 + $0x38] sm:$0xff]
        %v1222 = vld [vmem:[%s4 + $0x40] sm:$0xff]
        %v1223 = vld [vmem:[%s4 + $0x48] sm:$0xff]
        %v1224 = vld [vmem:[%s4 + $0x50] sm:$0xff]
        %v1225 = vld [vmem:[%s4 + $0x58] sm:$0xff]
        %v1226 = vld [vmem:[%s4 + $0x60] sm:$0xff]
        %v1227 = vld [vmem:[%s4 + $0x68] sm:$0xff]
        %v1228 = vld [vmem:[%s4 + $0x70] sm:$0xff]
        %v1229 = vld [vmem:[%s4 + $0x78] sm:$0xff]
        %v1230 = vld [vmem:[%s4 + $0x80] sm:$0xff]
        %v1231 = vld [vmem:[%s4 + $0x88] sm:$0xff]
        %v1232 = vld [vmem:[%s4 + $0x90] sm:$0xff]
        %v1233 = vld [vmem:[%s4 + $0x98] sm:$0xff]
        %v1234 = vld [vmem:[%s4 + $0xa0] sm:$0xff]
        %vm1235 = vcmask 326656
        %v1237 = vsel %vm1235, %v1206, 0
        %v1240 = vsel %vm1235, %v1212, 0
        %1242 = vmatprep.subr.mxu0 0.0
        %1243 = vmatpush1.msra.mxu0 %v1214
        %1244 = vmatprep.subr.mxu0 0.0
        %1245 = vmatpush1.msra.mxu0 %v1215
        %1246 = vmatprep.subr.mxu0 0.0
        %1247 = vmatpush1.msra.mxu0 %v1216
        %1248 = vmatprep.subr.mxu0 0.0
        %1249 = vmatpush1.msra.mxu0 %v1217
        %1250 = vmatprep.subr.mxu0 0.0
        %1251 = vmatpush1.msra.mxu0 %v1218
        %1252 = vmatprep.subr.mxu0 0.0
        %1253 = vmatpush1.msra.mxu0 %v1219
        %1254 = vmatprep.subr.mxu0 0.0
        %1255 = vmatpush1.msra.mxu0 %v1220
        %1256 = vmatprep.subr.mxu0 0.0
        %1257 = vmatpush1.msra.mxu0 %v1221
        %1258 = vmatprep.subr.mxu0 0.0
        %1259 = vmatpush1.msra.mxu0 %v1222
        %1260 = vmatprep.subr.mxu0 0.0
        %1261 = vmatpush1.msra.mxu0 %v1223
        %1262 = vmatprep.subr.mxu0 0.0
        %1263 = vmatpush1.msra.mxu0 %v1224
        %1264 = vmatprep.subr.mxu0 0.0
        %1265 = vmatpush1.msra.mxu0 %v1225
        %1266 = vmatprep.subr.mxu0 0.0
        %1267 = vmatpush1.msra.mxu0 %v1226
        %1268 = vmatprep.subr.mxu0 0.0
        %1269 = vmatpush1.msra.mxu0 %v1227
        %1270 = vmatprep.subr.mxu0 0.0
        %1271 = vmatpush1.msra.mxu0 %v1228
        %1272 = vmatprep.subr.mxu0 0.0
        %1273 = vmatpush1.msra.mxu0 %v1229
        %1274 = vmatprep.subr.mxu0 0.0
        %1275 = vmatpush1.msra.mxu0 %v1230
        %1276 = vmatprep.subr.mxu0 0.0
        %1277 = vmatpush1.msra.mxu0 %v1231
        %1278 = vmatprep.subr.mxu0 0.0
        %1279 = vmatpush1.msra.mxu0 %v1232
        %1280 = vmatprep.subr.mxu0 0.0
        %1281 = vmatpush1.msra.mxu0 %v1233
        %1282 = vmatprep.subr.mxu0 0.0
        %1283 = vmatpush1.msra.mxu0 %v1234
        %1284 = vmatprep.subr.mxu0 0.0
        %1285 = vmatpush1.msra.mxu0 0.0
        %1286 = vmatprep.subr.mxu0 0.0
        %1287 = vmatpush1.msra.mxu0 0.0
        %1288 = vmatprep.subr.mxu0 0.0
        %1289 = vmatpush1.msra.mxu0 0.0
        %1290 = vmatprep.subr.mxu0 0.0
        %1291 = vmatpush1.msra.mxu0 0.0
        %1292 = vmatprep.subr.mxu0 0.0
        %1293 = vmatpush1.msra.mxu0 0.0
        %1294 = vmatprep.subr.mxu0 0.0
        %1295 = vmatpush1.msra.mxu0 0.0
        %1296 = vmatprep.subr.mxu0 0.0
        %1297 = vmatpush1.msra.mxu0 0.0
        %1298 = vmatprep.subr.mxu0 0.0
        %1299 = vmatpush1.msra.mxu0 0.0
        %1300 = vmatprep.subr.mxu0 0.0
        %1301 = vmatpush1.msra.mxu0 0.0
        %1302 = vmatprep.subr.mxu0 0.0
        %1303 = vmatpush1.msra.mxu0 0.0
        %1304 = vmatprep.subr.mxu0 0.0
        %1305 = vmatpush1.msra.mxu0 0.0
        %1306 = vmatprep.mubr.f32.mxu0 %v1237
        %1307 = vmatmul.mubr.f32.gmra.mrb[0].mxu0 %v1204
        %v1308 = vpop.f32.mrb[0].mxu0
        %v1309 = vadd.f32 0.0, %v1308
        %v1310 = vpop.f32.mrb[0].mxu0
        %1311 = vmatprep.mubr.f32.mxu0 %v1240
        %1312 = vmatmul.mubr.f32.gmra.mrb[0].mxu0 %v1210
        %v1313 = vpop.f32.mrb[0].mxu0
        %v1314 = vadd.f32 0.0, %v1313
        %v1315 = vpop.f32.mrb[0].mxu0
        %1316 = vdwg.mxu0
        %v1317 = vld [vmem:[%s6] sm:$0x3]
        %v1318 = vld [vmem:[%s5] sm:$0xff]
        %v1319 = vld [vmem:[%s5 + $0x8] sm:$0xff]
        %v1320 = vld [vmem:[%s5 + $0x10] sm:$0xff]
        %v1321 = vld [vmem:[%s5 + $0x18] sm:$0xff]
        %v1322 = vld [vmem:[%s5 + $0x20] sm:$0xff]
        %v1323 = vld [vmem:[%s5 + $0x28] sm:$0xff]
        %v1324 = vld [vmem:[%s5 + $0x30] sm:$0xff]
        %v1325 = vld [vmem:[%s5 + $0x38] sm:$0xff]
        %v1326 = vld [vmem:[%s5 + $0x40] sm:$0xff]
        %v1327 = vld [vmem:[%s5 + $0x48] sm:$0xff]
        %v1328 = vld [vmem:[%s5 + $0x50] sm:$0xff]
        %v1329 = vld [vmem:[%s5 + $0x58] sm:$0xff]
        %v1330 = vld [vmem:[%s5 + $0x60] sm:$0xff]
        %v1331 = vld [vmem:[%s5 + $0x68] sm:$0xff]
        %v1332 = vld [vmem:[%s5 + $0x70] sm:$0xff]
        %v1333 = vld [vmem:[%s5 + $0x78] sm:$0xff]
        %v1334 = vld [vmem:[%s5 + $0x80] sm:$0xff]
        %v1335 = vld [vmem:[%s5 + $0x88] sm:$0xff]
        %v1336 = vld [vmem:[%s5 + $0x90] sm:$0xff]
        %v1337 = vld [vmem:[%s5 + $0x98] sm:$0xff]
        %v1338 = vld [vmem:[%s5 + $0xa0] sm:$0xf]
        %v1339 = vld [vmem:[%s5 + $0xa8] sm:$0xf]
        %vm1340 = vcmask 687104
        %v1342 = vsel %vm1340, %v1309, 0
        %v1345 = vsel %vm1340, %v1314, 0
        %v1348 = vsel %vm1001, %v1338, 0
        %v1351 = vsel %vm1001, %v1339, 0
        %1353 = vmatprep.subr.mxu0 %v1319
        %1354 = vmatpush1.msra.mxu0 %v1318
        %1355 = vmatprep.subr.mxu0 %v1321
        %1356 = vmatpush1.msra.mxu0 %v1320
        %1357 = vmatprep.subr.mxu0 %v1323
        %1358 = vmatpush1.msra.mxu0 %v1322
        %1359 = vmatprep.subr.mxu0 %v1325
        %1360 = vmatpush1.msra.mxu0 %v1324
        %1361 = vmatprep.subr.mxu0 %v1327
        %1362 = vmatpush1.msra.mxu0 %v1326
        %1363 = vmatprep.subr.mxu0 %v1329
        %1364 = vmatpush1.msra.mxu0 %v1328
        %1365 = vmatprep.subr.mxu0 %v1331
        %1366 = vmatpush1.msra.mxu0 %v1330
        %1367 = vmatprep.subr.mxu0 %v1333
        %1368 = vmatpush1.msra.mxu0 %v1332
        %1369 = vmatprep.subr.mxu0 %v1335
        %1370 = vmatpush1.msra.mxu0 %v1334
        %1371 = vmatprep.subr.mxu0 %v1337
        %1372 = vmatpush1.msra.mxu0 %v1336
        %1373 = vmatprep.subr.mxu0 %v1351
        %1374 = vmatpush1.msra.mxu0 %v1348
        %1375 = vmatprep.subr.mxu0 0.0
        %1376 = vmatpush1.msra.mxu0 0.0
        %1377 = vmatprep.subr.mxu0 0.0
        %1378 = vmatpush1.msra.mxu0 0.0
        %1379 = vmatprep.subr.mxu0 0.0
        %1380 = vmatpush1.msra.mxu0 0.0
        %1381 = vmatprep.subr.mxu0 0.0
        %1382 = vmatpush1.msra.mxu0 0.0
        %1383 = vmatprep.subr.mxu0 0.0
        %1384 = vmatpush1.msra.mxu0 0.0
        %1385 = vmatprep.subr.mxu0 0.0
        %1386 = vmatpush1.msra.mxu0 0.0
        %1387 = vmatprep.subr.mxu0 0.0
        %1388 = vmatpush1.msra.mxu0 0.0
        %1389 = vmatprep.subr.mxu0 0.0
        %1390 = vmatpush1.msra.mxu0 0.0
        %1391 = vmatprep.subr.mxu0 0.0
        %1392 = vmatpush1.msra.mxu0 0.0
        %1393 = vmatprep.subr.mxu0 0.0
        %1394 = vmatpush1.msra.mxu0 0.0
        %1395 = vmatprep.subr.mxu0 0.0
        %1396 = vmatpush1.msra.mxu0 0.0
        %1397 = vmatprep.subr.mxu0 0.0
        %1398 = vmatpush1.msra.mxu0 0.0
        %1399 = vmatprep.subr.mxu0 0.0
        %1400 = vmatpush1.msra.mxu0 0.0
        %1401 = vmatprep.subr.mxu0 0.0
        %1402 = vmatpush1.msra.mxu0 0.0
        %1403 = vmatprep.subr.mxu0 0.0
        %1404 = vmatpush1.msra.mxu0 0.0
        %1405 = vmatprep.subr.mxu0 0.0
        %1406 = vmatpush1.msra.mxu0 0.0
        %1407 = vmatprep.subr.mxu0 0.0
        %1408 = vmatpush1.msra.mxu0 0.0
        %1409 = vmatprep.subr.mxu0 0.0
        %1410 = vmatpush1.msra.mxu0 0.0
        %1411 = vmatprep.subr.mxu0 0.0
        %1412 = vmatpush1.msra.mxu0 0.0
        %1413 = vmatprep.subr.mxu0 0.0
        %1414 = vmatpush1.msra.mxu0 0.0
        %1415 = vmatprep.subr.mxu0 0.0
        %1416 = vmatpush1.msra.mxu0 0.0
        %1417 = vmatprep.mubr.f32.mxu0 0.0
        %1418 = vmatmul.mubr.f32.gmra.mrb[0].mxu0 %v1342
        %v1419 = vpop.f32.mrb[0].mxu0
        %v1420 = vadd.f32 0.0, %v1419
        %v1421 = vpop.f32.mrb[0].mxu0
        %v1422 = vadd.f32 0.0, %v1421
        %1423 = vmatprep.mubr.f32.mxu0 0.0
        %1424 = vmatmul.mubr.f32.gmra.mrb[0].mxu0 %v1345
        %v1425 = vpop.f32.mrb[0].mxu0
        %v1426 = vadd.f32 0.0, %v1425
        %v1427 = vpop.f32.mrb[0].mxu0
        %v1428 = vadd.f32 0.0, %v1427
        %1429 = vdwg.mxu0
        %v1431 = vlaneseq
        %v1432 = vshrl.u32 %v1431, 7
        %v1433 = vsub.s32 0, %v1432
        %v1434 = vrot.slane %v1317, %v1433
        %v1435 = vlaneseq
        %v1436 = vshrl.u32 %v1435, 7
        %v1437 = vsub.s32 1, %v1436
        %v1438 = vrot.slane %v1317, %v1437
        %v1441 = vadd.f32 %v1434, %v1420
        %v1442 = vadd.f32 %v1438, %v1422
        %v1443 = vadd.f32 %v1434, %v1426
        %v1444 = vadd.f32 %v1438, %v1428
        %s1445 = scalar_lea.vmem %s5, 176
        %v1446 = vld [vmem:[%s1445] sm:$0xff]
        %v1447 = vld [vmem:[%s1445 + $0x8] sm:$0xff]
        %v1448 = vld [vmem:[%s1445 + $0x10] sm:$0xff]
        %v1449 = vld [vmem:[%s1445 + $0x18] sm:$0xff]
        %v1450 = vld [vmem:[%s1445 + $0x20] sm:$0xff]
        %v1451 = vld [vmem:[%s1445 + $0x28] sm:$0xff]
        %v1452 = vld [vmem:[%s1445 + $0x30] sm:$0xff]
        %v1453 = vld [vmem:[%s1445 + $0x38] sm:$0xff]
        %v1454 = vld [vmem:[%s1445 + $0x40] sm:$0xff]
        %v1455 = vld [vmem:[%s1445 + $0x48] sm:$0xff]
        %v1456 = vld [vmem:[%s1445 + $0x50] sm:$0xff]
        %v1457 = vld [vmem:[%s1445 + $0x58] sm:$0xff]
        %v1458 = vld [vmem:[%s1445 + $0x60] sm:$0xff]
        %v1459 = vld [vmem:[%s1445 + $0x68] sm:$0xff]
        %v1460 = vld [vmem:[%s1445 + $0x70] sm:$0xff]
        %v1461 = vld [vmem:[%s1445 + $0x78] sm:$0xff]
        %v1462 = vld [vmem:[%s1445 + $0x80] sm:$0xff]
        %v1463 = vld [vmem:[%s1445 + $0x88] sm:$0xff]
        %v1464 = vld [vmem:[%s1445 + $0x90] sm:$0xff]
        %v1465 = vld [vmem:[%s1445 + $0x98] sm:$0xff]
        %v1466 = vld [vmem:[%s1445 + $0xa0] sm:$0xf]
        %v1467 = vld [vmem:[%s1445 + $0xa8] sm:$0xf]
        %v1468 = vrot.slane %v1309, 1
        %v1469 = vrot.slane %v1314, 1
        %v1470 = vsel %vm635, %v1468, %v1469
        %v1471 = vsel %vm1340, %v1470, 0
        %v1473 = vsel %vm1340, %v1469, 0
        %v1476 = vsel %vm1001, %v1466, 0
        %v1479 = vsel %vm1001, %v1467, 0
        %1481 = vmatprep.subr.mxu0 %v1447
        %1482 = vmatpush1.msra.mxu0 %v1446
        %1483 = vmatprep.subr.mxu0 %v1449
        %1484 = vmatpush1.msra.mxu0 %v1448
        %1485 = vmatprep.subr.mxu0 %v1451
        %1486 = vmatpush1.msra.mxu0 %v1450
        %1487 = vmatprep.subr.mxu0 %v1453
        %1488 = vmatpush1.msra.mxu0 %v1452
        %1489 = vmatprep.subr.mxu0 %v1455
        %1490 = vmatpush1.msra.mxu0 %v1454
        %1491 = vmatprep.subr.mxu0 %v1457
        %1492 = vmatpush1.msra.mxu0 %v1456
        %1493 = vmatprep.subr.mxu0 %v1459
        %1494 = vmatpush1.msra.mxu0 %v1458
        %1495 = vmatprep.subr.mxu0 %v1461
        %1496 = vmatpush1.msra.mxu0 %v1460
        %1497 = vmatprep.subr.mxu0 %v1463
        %1498 = vmatpush1.msra.mxu0 %v1462
        %1499 = vmatprep.subr.mxu0 %v1465
        %1500 = vmatpush1.msra.mxu0 %v1464
        %1501 = vmatprep.subr.mxu0 %v1479
        %1502 = vmatpush1.msra.mxu0 %v1476
        %1503 = vmatprep.subr.mxu0 0.0
        %1504 = vmatpush1.msra.mxu0 0.0
        %1505 = vmatprep.subr.mxu0 0.0
        %1506 = vmatpush1.msra.mxu0 0.0
        %1507 = vmatprep.subr.mxu0 0.0
        %1508 = vmatpush1.msra.mxu0 0.0
        %1509 = vmatprep.subr.mxu0 0.0
        %1510 = vmatpush1.msra.mxu0 0.0
        %1511 = vmatprep.subr.mxu0 0.0
        %1512 = vmatpush1.msra.mxu0 0.0
        %1513 = vmatprep.subr.mxu0 0.0
        %1514 = vmatpush1.msra.mxu0 0.0
        %1515 = vmatprep.subr.mxu0 0.0
        %1516 = vmatpush1.msra.mxu0 0.0
        %1517 = vmatprep.subr.mxu0 0.0
        %1518 = vmatpush1.msra.mxu0 0.0
        %1519 = vmatprep.subr.mxu0 0.0
        %1520 = vmatpush1.msra.mxu0 0.0
        %1521 = vmatprep.subr.mxu0 0.0
        %1522 = vmatpush1.msra.mxu0 0.0
        %1523 = vmatprep.subr.mxu0 0.0
        %1524 = vmatpush1.msra.mxu0 0.0
        %1525 = vmatprep.subr.mxu0 0.0
        %1526 = vmatpush1.msra.mxu0 0.0
        %1527 = vmatprep.subr.mxu0 0.0
        %1528 = vmatpush1.msra.mxu0 0.0
        %1529 = vmatprep.subr.mxu0 0.0
        %1530 = vmatpush1.msra.mxu0 0.0
        %1531 = vmatprep.subr.mxu0 0.0
        %1532 = vmatpush1.msra.mxu0 0.0
        %1533 = vmatprep.subr.mxu0 0.0
        %1534 = vmatpush1.msra.mxu0 0.0
        %1535 = vmatprep.subr.mxu0 0.0
        %1536 = vmatpush1.msra.mxu0 0.0
        %1537 = vmatprep.subr.mxu0 0.0
        %1538 = vmatpush1.msra.mxu0 0.0
        %1539 = vmatprep.subr.mxu0 0.0
        %1540 = vmatpush1.msra.mxu0 0.0
        %1541 = vmatprep.subr.mxu0 0.0
        %1542 = vmatpush1.msra.mxu0 0.0
        %1543 = vmatprep.subr.mxu0 0.0
        %1544 = vmatpush1.msra.mxu0 0.0
        %1545 = vmatprep.mubr.f32.mxu0 0.0
        %1546 = vmatmul.mubr.f32.gmra.mrb[0].mxu0 %v1471
        %v1547 = vpop.f32.mrb[0].mxu0
        %v1548 = vadd.f32 0.0, %v1547
        %v1549 = vpop.f32.mrb[0].mxu0
        %v1550 = vadd.f32 0.0, %v1549
        %1551 = vmatprep.mubr.f32.mxu0 0.0
        %1552 = vmatmul.mubr.f32.gmra.mrb[0].mxu0 %v1473
        %v1553 = vpop.f32.mrb[0].mxu0
        %v1554 = vadd.f32 0.0, %v1553
        %v1555 = vpop.f32.mrb[0].mxu0
        %v1556 = vadd.f32 0.0, %v1555
        %1557 = vdwg.mxu0
        %v1558 = vadd.f32 %v1441, %v1548
        %v1559 = vadd.f32 %v1442, %v1550
        %v1560 = vadd.f32 %v1443, %v1554
        %v1561 = vadd.f32 %v1444, %v1556
        %s1562 = scalar_lea.vmem %s5, 352
        %v1563 = vld [vmem:[%s1562] sm:$0xff]
        %v1564 = vld [vmem:[%s1562 + $0x8] sm:$0xff]
        %v1565 = vld [vmem:[%s1562 + $0x10] sm:$0xff]
        %v1566 = vld [vmem:[%s1562 + $0x18] sm:$0xff]
        %v1567 = vld [vmem:[%s1562 + $0x20] sm:$0xff]
        %v1568 = vld [vmem:[%s1562 + $0x28] sm:$0xff]
        %v1569 = vld [vmem:[%s1562 + $0x30] sm:$0xff]
        %v1570 = vld [vmem:[%s1562 + $0x38] sm:$0xff]
        %v1571 = vld [vmem:[%s1562 + $0x40] sm:$0xff]
        %v1572 = vld [vmem:[%s1562 + $0x48] sm:$0xff]
        %v1573 = vld [vmem:[%s1562 + $0x50] sm:$0xff]
        %v1574 = vld [vmem:[%s1562 + $0x58] sm:$0xff]
        %v1575 = vld [vmem:[%s1562 + $0x60] sm:$0xff]
        %v1576 = vld [vmem:[%s1562 + $0x68] sm:$0xff]
        %v1577 = vld [vmem:[%s1562 + $0x70] sm:$0xff]
        %v1578 = vld [vmem:[%s1562 + $0x78] sm:$0xff]
        %v1579 = vld [vmem:[%s1562 + $0x80] sm:$0xff]
        %v1580 = vld [vmem:[%s1562 + $0x88] sm:$0xff]
        %v1581 = vld [vmem:[%s1562 + $0x90] sm:$0xff]
        %v1582 = vld [vmem:[%s1562 + $0x98] sm:$0xff]
        %v1583 = vld [vmem:[%s1562 + $0xa0] sm:$0xf]
        %v1584 = vld [vmem:[%s1562 + $0xa8] sm:$0xf]
        %v1585 = vrot.slane %v1309, 2
        %v1586 = vrot.slane %v1314, 2
        %v1587 = vsel %vm757, %v1585, %v1586
        %v1588 = vsel %vm1340, %v1587, 0
        %v1590 = vsel %vm1340, %v1586, 0
        %v1593 = vsel %vm1001, %v1583, 0
        %v1596 = vsel %vm1001, %v1584, 0
        %1598 = vmatprep.subr.mxu0 %v1564
        %1599 = vmatpush1.msra.mxu0 %v1563
        %1600 = vmatprep.subr.mxu0 %v1566
        %1601 = vmatpush1.msra.mxu0 %v1565
        %1602 = vmatprep.subr.mxu0 %v1568
        %1603 = vmatpush1.msra.mxu0 %v1567
        %1604 = vmatprep.subr.mxu0 %v1570
        %1605 = vmatpush1.msra.mxu0 %v1569
        %1606 = vmatprep.subr.mxu0 %v1572
        %1607 = vmatpush1.msra.mxu0 %v1571
        %1608 = vmatprep.subr.mxu0 %v1574
        %1609 = vmatpush1.msra.mxu0 %v1573
        %1610 = vmatprep.subr.mxu0 %v1576
        %1611 = vmatpush1.msra.mxu0 %v1575
        %1612 = vmatprep.subr.mxu0 %v1578
        %1613 = vmatpush1.msra.mxu0 %v1577
        %1614 = vmatprep.subr.mxu0 %v1580
        %1615 = vmatpush1.msra.mxu0 %v1579
        %1616 = vmatprep.subr.mxu0 %v1582
        %1617 = vmatpush1.msra.mxu0 %v1581
        %1618 = vmatprep.subr.mxu0 %v1596
        %1619 = vmatpush1.msra.mxu0 %v1593
        %1620 = vmatprep.subr.mxu0 0.0
        %1621 = vmatpush1.msra.mxu0 0.0
        %1622 = vmatprep.subr.mxu0 0.0
        %1623 = vmatpush1.msra.mxu0 0.0
        %1624 = vmatprep.subr.mxu0 0.0
        %1625 = vmatpush1.msra.mxu0 0.0
        %1626 = vmatprep.subr.mxu0 0.0
        %1627 = vmatpush1.msra.mxu0 0.0
        %1628 = vmatprep.subr.mxu0 0.0
        %1629 = vmatpush1.msra.mxu0 0.0
        %1630 = vmatprep.subr.mxu0 0.0
        %1631 = vmatpush1.msra.mxu0 0.0
        %1632 = vmatprep.subr.mxu0 0.0
        %1633 = vmatpush1.msra.mxu0 0.0
        %1634 = vmatprep.subr.mxu0 0.0
        %1635 = vmatpush1.msra.mxu0 0.0
        %1636 = vmatprep.subr.mxu0 0.0
        %1637 = vmatpush1.msra.mxu0 0.0
        %1638 = vmatprep.subr.mxu0 0.0
        %1639 = vmatpush1.msra.mxu0 0.0
        %1640 = vmatprep.subr.mxu0 0.0
        %1641 = vmatpush1.msra.mxu0 0.0
        %1642 = vmatprep.subr.mxu0 0.0
        %1643 = vmatpush1.msra.mxu0 0.0
        %1644 = vmatprep.subr.mxu0 0.0
        %1645 = vmatpush1.msra.mxu0 0.0
        %1646 = vmatprep.subr.mxu0 0.0
        %1647 = vmatpush1.msra.mxu0 0.0
        %1648 = vmatprep.subr.mxu0 0.0
        %1649 = vmatpush1.msra.mxu0 0.0
        %1650 = vmatprep.subr.mxu0 0.0
        %1651 = vmatpush1.msra.mxu0 0.0
        %1652 = vmatprep.subr.mxu0 0.0
        %1653 = vmatpush1.msra.mxu0 0.0
        %1654 = vmatprep.subr.mxu0 0.0
        %1655 = vmatpush1.msra.mxu0 0.0
        %1656 = vmatprep.subr.mxu0 0.0
        %1657 = vmatpush1.msra.mxu0 0.0
        %1658 = vmatprep.subr.mxu0 0.0
        %1659 = vmatpush1.msra.mxu0 0.0
        %1660 = vmatprep.subr.mxu0 0.0
        %1661 = vmatpush1.msra.mxu0 0.0
        %1662 = vmatprep.mubr.f32.mxu0 0.0
        %1663 = vmatmul.mubr.f32.gmra.mrb[0].mxu0 %v1588
        %v1664 = vpop.f32.mrb[0].mxu0
        %v1665 = vadd.f32 0.0, %v1664
        %v1666 = vpop.f32.mrb[0].mxu0
        %v1667 = vadd.f32 0.0, %v1666
        %1668 = vmatprep.mubr.f32.mxu0 0.0
        %1669 = vmatmul.mubr.f32.gmra.mrb[0].mxu0 %v1590
        %v1670 = vpop.f32.mrb[0].mxu0
        %v1671 = vadd.f32 0.0, %v1670
        %v1672 = vpop.f32.mrb[0].mxu0
        %v1673 = vadd.f32 0.0, %v1672
        %1674 = vdwg.mxu0
        %v1675 = vadd.f32 %v1558, %v1665
        %v1676 = vadd.f32 %v1559, %v1667
        %v1677 = vadd.f32 %v1560, %v1671
        %v1678 = vadd.f32 %v1561, %v1673
        %s1679 = scalar_lea.vmem %s5, 528
        %v1680 = vld [vmem:[%s1679] sm:$0xff]
        %v1681 = vld [vmem:[%s1679 + $0x8] sm:$0xff]
        %v1682 = vld [vmem:[%s1679 + $0x10] sm:$0xff]
        %v1683 = vld [vmem:[%s1679 + $0x18] sm:$0xff]
        %v1684 = vld [vmem:[%s1679 + $0x20] sm:$0xff]
        %v1685 = vld [vmem:[%s1679 + $0x28] sm:$0xff]
        %v1686 = vld [vmem:[%s1679 + $0x30] sm:$0xff]
        %v1687 = vld [vmem:[%s1679 + $0x38] sm:$0xff]
        %v1688 = vld [vmem:[%s1679 + $0x40] sm:$0xff]
        %v1689 = vld [vmem:[%s1679 + $0x48] sm:$0xff]
        %v1690 = vld [vmem:[%s1679 + $0x50] sm:$0xff]
        %v1691 = vld [vmem:[%s1679 + $0x58] sm:$0xff]
        %v1692 = vld [vmem:[%s1679 + $0x60] sm:$0xff]
        %v1693 = vld [vmem:[%s1679 + $0x68] sm:$0xff]
        %v1694 = vld [vmem:[%s1679 + $0x70] sm:$0xff]
        %v1695 = vld [vmem:[%s1679 + $0x78] sm:$0xff]
        %v1696 = vld [vmem:[%s1679 + $0x80] sm:$0xff]
        %v1697 = vld [vmem:[%s1679 + $0x88] sm:$0xff]
        %v1698 = vld [vmem:[%s1679 + $0x90] sm:$0xff]
        %v1699 = vld [vmem:[%s1679 + $0x98] sm:$0xff]
        %v1700 = vld [vmem:[%s1679 + $0xa0] sm:$0xf]
        %v1701 = vld [vmem:[%s1679 + $0xa8] sm:$0xf]
        %v1702 = vrot.slane %v1309, 3
        %v1703 = vrot.slane %v1314, 3
        %v1704 = vsel %vm879, %v1702, %v1703
        %v1705 = vsel %vm1340, %v1704, 0
        %v1707 = vsel %vm1340, %v1703, 0
        %v1710 = vsel %vm1001, %v1700, 0
        %v1713 = vsel %vm1001, %v1701, 0
        %1715 = vmatprep.subr.mxu0 %v1681
        %1716 = vmatpush1.msra.mxu0 %v1680
        %1717 = vmatprep.subr.mxu0 %v1683
        %1718 = vmatpush1.msra.mxu0 %v1682
        %1719 = vmatprep.subr.mxu0 %v1685
        %1720 = vmatpush1.msra.mxu0 %v1684
        %1721 = vmatprep.subr.mxu0 %v1687
        %1722 = vmatpush1.msra.mxu0 %v1686
        %1723 = vmatprep.subr.mxu0 %v1689
        %1724 = vmatpush1.msra.mxu0 %v1688
        %1725 = vmatprep.subr.mxu0 %v1691
        %1726 = vmatpush1.msra.mxu0 %v1690
        %1727 = vmatprep.subr.mxu0 %v1693
        %1728 = vmatpush1.msra.mxu0 %v1692
        %1729 = vmatprep.subr.mxu0 %v1695
        %1730 = vmatpush1.msra.mxu0 %v1694
        %1731 = vmatprep.subr.mxu0 %v1697
        %1732 = vmatpush1.msra.mxu0 %v1696
        %1733 = vmatprep.subr.mxu0 %v1699
        %1734 = vmatpush1.msra.mxu0 %v1698
        %1735 = vmatprep.subr.mxu0 %v1713
        %1736 = vmatpush1.msra.mxu0 %v1710
        %1737 = vmatprep.subr.mxu0 0.0
        %1738 = vmatpush1.msra.mxu0 0.0
        %1739 = vmatprep.subr.mxu0 0.0
        %1740 = vmatpush1.msra.mxu0 0.0
        %1741 = vmatprep.subr.mxu0 0.0
        %1742 = vmatpush1.msra.mxu0 0.0
        %1743 = vmatprep.subr.mxu0 0.0
        %1744 = vmatpush1.msra.mxu0 0.0
        %1745 = vmatprep.subr.mxu0 0.0
        %1746 = vmatpush1.msra.mxu0 0.0
        %1747 = vmatprep.subr.mxu0 0.0
        %1748 = vmatpush1.msra.mxu0 0.0
        %1749 = vmatprep.subr.mxu0 0.0
        %1750 = vmatpush1.msra.mxu0 0.0
        %1751 = vmatprep.subr.mxu0 0.0
        %1752 = vmatpush1.msra.mxu0 0.0
        %1753 = vmatprep.subr.mxu0 0.0
        %1754 = vmatpush1.msra.mxu0 0.0
        %1755 = vmatprep.subr.mxu0 0.0
        %1756 = vmatpush1.msra.mxu0 0.0
        %1757 = vmatprep.subr.mxu0 0.0
        %1758 = vmatpush1.msra.mxu0 0.0
        %1759 = vmatprep.subr.mxu0 0.0
        %1760 = vmatpush1.msra.mxu0 0.0
        %1761 = vmatprep.subr.mxu0 0.0
        %1762 = vmatpush1.msra.mxu0 0.0
        %1763 = vmatprep.subr.mxu0 0.0
        %1764 = vmatpush1.msra.mxu0 0.0
        %1765 = vmatprep.subr.mxu0 0.0
        %1766 = vmatpush1.msra.mxu0 0.0
        %1767 = vmatprep.subr.mxu0 0.0
        %1768 = vmatpush1.msra.mxu0 0.0
        %1769 = vmatprep.subr.mxu0 0.0
        %1770 = vmatpush1.msra.mxu0 0.0
        %1771 = vmatprep.subr.mxu0 0.0
        %1772 = vmatpush1.msra.mxu0 0.0
        %1773 = vmatprep.subr.mxu0 0.0
        %1774 = vmatpush1.msra.mxu0 0.0
        %1775 = vmatprep.subr.mxu0 0.0
        %1776 = vmatpush1.msra.mxu0 0.0
        %1777 = vmatprep.subr.mxu0 0.0
        %1778 = vmatpush1.msra.mxu0 0.0
        %1779 = vmatprep.mubr.f32.mxu0 0.0
        %1780 = vmatmul.mubr.f32.gmra.mrb[0].mxu0 %v1705
        %v1781 = vpop.f32.mrb[0].mxu0
        %v1782 = vadd.f32 0.0, %v1781
        %v1783 = vpop.f32.mrb[0].mxu0
        %v1784 = vadd.f32 0.0, %v1783
        %1785 = vmatprep.mubr.f32.mxu0 0.0
        %1786 = vmatmul.mubr.f32.gmra.mrb[0].mxu0 %v1707
        %v1787 = vpop.f32.mrb[0].mxu0
        %v1788 = vadd.f32 0.0, %v1787
        %v1789 = vpop.f32.mrb[0].mxu0
        %v1790 = vadd.f32 0.0, %v1789
        %1791 = vdwg.mxu0
        %v1792 = vadd.f32 %v1675, %v1782
        %v1793 = vadd.f32 %v1676, %v1784
        %v1794 = vadd.f32 %v1677, %v1788
        %v1795 = vadd.f32 %v1678, %v1790
        %s1796 = scalar_lea.vmem %s5, 704
        %v1797 = vld [vmem:[%s1796] sm:$0xff]
        %v1798 = vld [vmem:[%s1796 + $0x8] sm:$0xff]
        %v1799 = vld [vmem:[%s1796 + $0x10] sm:$0xff]
        %v1800 = vld [vmem:[%s1796 + $0x18] sm:$0xff]
        %v1801 = vld [vmem:[%s1796 + $0x20] sm:$0xff]
        %v1802 = vld [vmem:[%s1796 + $0x28] sm:$0xff]
        %v1803 = vld [vmem:[%s1796 + $0x30] sm:$0xff]
        %v1804 = vld [vmem:[%s1796 + $0x38] sm:$0xff]
        %v1805 = vld [vmem:[%s1796 + $0x40] sm:$0xff]
        %v1806 = vld [vmem:[%s1796 + $0x48] sm:$0xff]
        %v1807 = vld [vmem:[%s1796 + $0x50] sm:$0xff]
        %v1808 = vld [vmem:[%s1796 + $0x58] sm:$0xff]
        %v1809 = vld [vmem:[%s1796 + $0x60] sm:$0xff]
        %v1810 = vld [vmem:[%s1796 + $0x68] sm:$0xff]
        %v1811 = vld [vmem:[%s1796 + $0x70] sm:$0xff]
        %v1812 = vld [vmem:[%s1796 + $0x78] sm:$0xff]
        %v1813 = vld [vmem:[%s1796 + $0x80] sm:$0xff]
        %v1814 = vld [vmem:[%s1796 + $0x88] sm:$0xff]
        %v1815 = vld [vmem:[%s1796 + $0x90] sm:$0xff]
        %v1816 = vld [vmem:[%s1796 + $0x98] sm:$0xff]
        %v1817 = vld [vmem:[%s1796 + $0xa0] sm:$0xf]
        %v1818 = vld [vmem:[%s1796 + $0xa8] sm:$0xf]
        %v1819 = vrot.slane %v1309, 4
        %v1820 = vrot.slane %v1314, 4
        %v1821 = vsel %vm1001, %v1819, %v1820
        %v1822 = vsel %vm1340, %v1821, 0
        %v1824 = vsel %vm1340, %v1820, 0
        %v1827 = vsel %vm1001, %v1817, 0
        %v1830 = vsel %vm1001, %v1818, 0
        %1832 = vmatprep.subr.mxu0 %v1798
        %1833 = vmatpush1.msra.mxu0 %v1797
        %1834 = vmatprep.subr.mxu0 %v1800
        %1835 = vmatpush1.msra.mxu0 %v1799
        %1836 = vmatprep.subr.mxu0 %v1802
        %1837 = vmatpush1.msra.mxu0 %v1801
        %1838 = vmatprep.subr.mxu0 %v1804
        %1839 = vmatpush1.msra.mxu0 %v1803
        %1840 = vmatprep.subr.mxu0 %v1806
        %1841 = vmatpush1.msra.mxu0 %v1805
        %1842 = vmatprep.subr.mxu0 %v1808
        %1843 = vmatpush1.msra.mxu0 %v1807
        %1844 = vmatprep.subr.mxu0 %v1810
        %1845 = vmatpush1.msra.mxu0 %v1809
        %1846 = vmatprep.subr.mxu0 %v1812
        %1847 = vmatpush1.msra.mxu0 %v1811
        %1848 = vmatprep.subr.mxu0 %v1814
        %1849 = vmatpush1.msra.mxu0 %v1813
        %1850 = vmatprep.subr.mxu0 %v1816
        %1851 = vmatpush1.msra.mxu0 %v1815
        %1852 = vmatprep.subr.mxu0 %v1830
        %1853 = vmatpush1.msra.mxu0 %v1827
        %1854 = vmatprep.subr.mxu0 0.0
        %1855 = vmatpush1.msra.mxu0 0.0
        %1856 = vmatprep.subr.mxu0 0.0
        %1857 = vmatpush1.msra.mxu0 0.0
        %1858 = vmatprep.subr.mxu0 0.0
        %1859 = vmatpush1.msra.mxu0 0.0
        %1860 = vmatprep.subr.mxu0 0.0
        %1861 = vmatpush1.msra.mxu0 0.0
        %1862 = vmatprep.subr.mxu0 0.0
        %1863 = vmatpush1.msra.mxu0 0.0
        %1864 = vmatprep.subr.mxu0 0.0
        %1865 = vmatpush1.msra.mxu0 0.0
        %1866 = vmatprep.subr.mxu0 0.0
        %1867 = vmatpush1.msra.mxu0 0.0
        %1868 = vmatprep.subr.mxu0 0.0
        %1869 = vmatpush1.msra.mxu0 0.0
        %1870 = vmatprep.subr.mxu0 0.0
        %1871 = vmatpush1.msra.mxu0 0.0
        %1872 = vmatprep.subr.mxu0 0.0
        %1873 = vmatpush1.msra.mxu0 0.0
        %1874 = vmatprep.subr.mxu0 0.0
        %1875 = vmatpush1.msra.mxu0 0.0
        %1876 = vmatprep.subr.mxu0 0.0
        %1877 = vmatpush1.msra.mxu0 0.0
        %1878 = vmatprep.subr.mxu0 0.0
        %1879 = vmatpush1.msra.mxu0 0.0
        %1880 = vmatprep.subr.mxu0 0.0
        %1881 = vmatpush1.msra.mxu0 0.0
        %1882 = vmatprep.subr.mxu0 0.0
        %1883 = vmatpush1.msra.mxu0 0.0
        %1884 = vmatprep.subr.mxu0 0.0
        %1885 = vmatpush1.msra.mxu0 0.0
        %1886 = vmatprep.subr.mxu0 0.0
        %1887 = vmatpush1.msra.mxu0 0.0
        %1888 = vmatprep.subr.mxu0 0.0
        %1889 = vmatpush1.msra.mxu0 0.0
        %1890 = vmatprep.subr.mxu0 0.0
        %1891 = vmatpush1.msra.mxu0 0.0
        %1892 = vmatprep.subr.mxu0 0.0
        %1893 = vmatpush1.msra.mxu0 0.0
        %1894 = vmatprep.subr.mxu0 0.0
        %1895 = vmatpush1.msra.mxu0 0.0
        %1896 = vmatprep.mubr.f32.mxu0 0.0
        %1897 = vmatmul.mubr.f32.gmra.mrb[0].mxu0 %v1822
        %v1898 = vpop.f32.mrb[0].mxu0
        %v1899 = vadd.f32 0.0, %v1898
        %v1900 = vpop.f32.mrb[0].mxu0
        %v1901 = vadd.f32 0.0, %v1900
        %1902 = vmatprep.mubr.f32.mxu0 0.0
        %1903 = vmatmul.mubr.f32.gmra.mrb[0].mxu0 %v1824
        %v1904 = vpop.f32.mrb[0].mxu0
        %v1905 = vadd.f32 0.0, %v1904
        %v1906 = vpop.f32.mrb[0].mxu0
        %v1907 = vadd.f32 0.0, %v1906
        %1908 = vdwg.mxu0
        %v1909 = vadd.f32 %v1792, %v1899
        %v1910 = vadd.f32 %v1793, %v1901
        %v1911 = vadd.f32 %v1794, %v1905
        %v1912 = vadd.f32 %v1795, %v1907
        %v1913 = vmax.f32 %v1909, 0.0
        %v1914 = vmax.f32 %v1910, 0.0
        %v1915 = vmax.f32 %v1911, 0.0
        %v1916 = vmax.f32 %v1912, 0.0
        %v1917 = vld [vmem:[%s7] sm:$0x1f]
        %vm1918 = vcmask 80896
        %v1920 = vsel %vm1918, %v1917, 0
        %vm1922 = vcmask 1041408
        %v1924 = vsel %vm1922, %v1915, 0
        %v1927 = vsel %vm1922, %v1916, 0
        %1929 = vmatprep.subr.mxu0 %v1914
        %1930 = vmatpush1.msra.mxu0 %v1913
        %1931 = vmatprep.subr.mxu0 %v1927
        %1932 = vmatpush1.msra.mxu0 %v1924
        %1933 = vmatprep.subr.mxu0 0.0
        %1934 = vmatpush1.msra.mxu0 0.0
        %1935 = vmatprep.subr.mxu0 0.0
        %1936 = vmatpush1.msra.mxu0 0.0
        %1937 = vmatprep.subr.mxu0 0.0
        %1938 = vmatpush1.msra.mxu0 0.0
        %1939 = vmatprep.subr.mxu0 0.0
        %1940 = vmatpush1.msra.mxu0 0.0
        %1941 = vmatprep.subr.mxu0 0.0
        %1942 = vmatpush1.msra.mxu0 0.0
        %1943 = vmatprep.subr.mxu0 0.0
        %1944 = vmatpush1.msra.mxu0 0.0
        %1945 = vmatprep.subr.mxu0 0.0
        %1946 = vmatpush1.msra.mxu0 0.0
        %1947 = vmatprep.subr.mxu0 0.0
        %1948 = vmatpush1.msra.mxu0 0.0
        %1949 = vmatprep.subr.mxu0 0.0
        %1950 = vmatpush1.msra.mxu0 0.0
        %1951 = vmatprep.subr.mxu0 0.0
        %1952 = vmatpush1.msra.mxu0 0.0
        %1953 = vmatprep.subr.mxu0 0.0
        %1954 = vmatpush1.msra.mxu0 0.0
        %1955 = vmatprep.subr.mxu0 0.0
        %1956 = vmatpush1.msra.mxu0 0.0
        %1957 = vmatprep.subr.mxu0 0.0
        %1958 = vmatpush1.msra.mxu0 0.0
        %1959 = vmatprep.subr.mxu0 0.0
        %1960 = vmatpush1.msra.mxu0 0.0
        %1961 = vmatprep.subr.mxu0 0.0
        %1962 = vmatpush1.msra.mxu0 0.0
        %1963 = vmatprep.subr.mxu0 0.0
        %1964 = vmatpush1.msra.mxu0 0.0
        %1965 = vmatprep.subr.mxu0 0.0
        %1966 = vmatpush1.msra.mxu0 0.0
        %1967 = vmatprep.subr.mxu0 0.0
        %1968 = vmatpush1.msra.mxu0 0.0
        %1969 = vmatprep.subr.mxu0 0.0
        %1970 = vmatpush1.msra.mxu0 0.0
        %1971 = vmatprep.subr.mxu0 0.0
        %1972 = vmatpush1.msra.mxu0 0.0
        %1973 = vmatprep.subr.mxu0 0.0
        %1974 = vmatpush1.msra.mxu0 0.0
        %1975 = vmatprep.subr.mxu0 0.0
        %1976 = vmatpush1.msra.mxu0 0.0
        %1977 = vmatprep.subr.mxu0 0.0
        %1978 = vmatpush1.msra.mxu0 0.0
        %1979 = vmatprep.subr.mxu0 0.0
        %1980 = vmatpush1.msra.mxu0 0.0
        %1981 = vmatprep.subr.mxu0 0.0
        %1982 = vmatpush1.msra.mxu0 0.0
        %1983 = vmatprep.subr.mxu0 0.0
        %1984 = vmatpush1.msra.mxu0 0.0
        %1985 = vmatprep.subr.mxu0 0.0
        %1986 = vmatpush1.msra.mxu0 0.0
        %1987 = vmatprep.subr.mxu0 0.0
        %1988 = vmatpush1.msra.mxu0 0.0
        %1989 = vmatprep.subr.mxu0 0.0
        %1990 = vmatpush1.msra.mxu0 0.0
        %1991 = vmatprep.subr.mxu0 0.0
        %1992 = vmatpush1.msra.mxu0 0.0
        %1993 = vmatprep.mubr.f32.mxu0 0.0
        %1994 = vmatmul.mubr.f32.gmra.mrb[0].mxu0 %v1920
        %v1995 = vpop.f32.mrb[0].mxu0
        %v1996 = vadd.f32 0.0, %v1995
        %v1997 = vpop.f32.mrb[0].mxu0
        %v1998 = vadd.f32 0.0, %v1997
        %1999 = vdwg.mxu0
        %v2000 = vld [vmem:[%s8] sm:$0xff]
        %v2001 = vld [vmem:[%s8 + $0x8] sm:$0xff]
        %v2002 = vld [vmem:[%s8 + $0x10] sm:$0xff]
        %v2003 = vld [vmem:[%s8 + $0x18] sm:$0xff]
        %v2004 = vld [vmem:[%s8 + $0x20] sm:$0xff]
        %v2005 = vld [vmem:[%s8 + $0x28] sm:$0xff]
        %v2006 = vld [vmem:[%s8 + $0x30] sm:$0xff]
        %v2007 = vld [vmem:[%s8 + $0x38] sm:$0xff]
        %v2008 = vld [vmem:[%s8 + $0x40] sm:$0xff]
        %v2009 = vld [vmem:[%s8 + $0x48] sm:$0xff]
        %v2010 = vld [vmem:[%s8 + $0x50] sm:$0xff]
        %v2011 = vld [vmem:[%s8 + $0x58] sm:$0xff]
        %v2012 = vld [vmem:[%s8 + $0x60] sm:$0xff]
        %v2013 = vld [vmem:[%s8 + $0x68] sm:$0xff]
        %v2014 = vld [vmem:[%s8 + $0x70] sm:$0xff]
        %v2015 = vld [vmem:[%s8 + $0x78] sm:$0xff]
        %v2016 = vld [vmem:[%s8 + $0x80] sm:$0xff]
        %v2017 = vld [vmem:[%s8 + $0x88] sm:$0xff]
        %v2018 = vld [vmem:[%s8 + $0x90] sm:$0xff]
        %v2019 = vld [vmem:[%s8 + $0x98] sm:$0xff]
        %v2021 = vsel %vm505, %v1998, 0
        %2023 = vmatprep.subr.mxu0 0.0
        %2024 = vmatpush1.msra.mxu0 %v2000
        %2025 = vmatprep.subr.mxu0 0.0
        %2026 = vmatpush1.msra.mxu0 %v2001
        %2027 = vmatprep.subr.mxu0 0.0
        %2028 = vmatpush1.msra.mxu0 %v2002
        %2029 = vmatprep.subr.mxu0 0.0
        %2030 = vmatpush1.msra.mxu0 %v2003
        %2031 = vmatprep.subr.mxu0 0.0
        %2032 = vmatpush1.msra.mxu0 %v2004
        %2033 = vmatprep.subr.mxu0 0.0
        %2034 = vmatpush1.msra.mxu0 %v2005
        %2035 = vmatprep.subr.mxu0 0.0
        %2036 = vmatpush1.msra.mxu0 %v2006
        %2037 = vmatprep.subr.mxu0 0.0
        %2038 = vmatpush1.msra.mxu0 %v2007
        %2039 = vmatprep.subr.mxu0 0.0
        %2040 = vmatpush1.msra.mxu0 %v2008
        %2041 = vmatprep.subr.mxu0 0.0
        %2042 = vmatpush1.msra.mxu0 %v2009
        %2043 = vmatprep.subr.mxu0 0.0
        %2044 = vmatpush1.msra.mxu0 %v2010
        %2045 = vmatprep.subr.mxu0 0.0
        %2046 = vmatpush1.msra.mxu0 %v2011
        %2047 = vmatprep.subr.mxu0 0.0
        %2048 = vmatpush1.msra.mxu0 %v2012
        %2049 = vmatprep.subr.mxu0 0.0
        %2050 = vmatpush1.msra.mxu0 %v2013
        %2051 = vmatprep.subr.mxu0 0.0
        %2052 = vmatpush1.msra.mxu0 %v2014
        %2053 = vmatprep.subr.mxu0 0.0
        %2054 = vmatpush1.msra.mxu0 %v2015
        %2055 = vmatprep.subr.mxu0 0.0
        %2056 = vmatpush1.msra.mxu0 %v2016
        %2057 = vmatprep.subr.mxu0 0.0
        %2058 = vmatpush1.msra.mxu0 %v2017
        %2059 = vmatprep.subr.mxu0 0.0
        %2060 = vmatpush1.msra.mxu0 %v2018
        %2061 = vmatprep.subr.mxu0 0.0
        %2062 = vmatpush1.msra.mxu0 %v2019
        %2063 = vmatprep.subr.mxu0 0.0
        %2064 = vmatpush1.msra.mxu0 0.0
        %2065 = vmatprep.subr.mxu0 0.0
        %2066 = vmatpush1.msra.mxu0 0.0
        %2067 = vmatprep.subr.mxu0 0.0
        %2068 = vmatpush1.msra.mxu0 0.0
        %2069 = vmatprep.subr.mxu0 0.0
        %2070 = vmatpush1.msra.mxu0 0.0
        %2071 = vmatprep.subr.mxu0 0.0
        %2072 = vmatpush1.msra.mxu0 0.0
        %2073 = vmatprep.subr.mxu0 0.0
        %2074 = vmatpush1.msra.mxu0 0.0
        %2075 = vmatprep.subr.mxu0 0.0
        %2076 = vmatpush1.msra.mxu0 0.0
        %2077 = vmatprep.subr.mxu0 0.0
        %2078 = vmatpush1.msra.mxu0 0.0
        %2079 = vmatprep.subr.mxu0 0.0
        %2080 = vmatpush1.msra.mxu0 0.0
        %2081 = vmatprep.subr.mxu0 0.0
        %2082 = vmatpush1.msra.mxu0 0.0
        %2083 = vmatprep.subr.mxu0 0.0
        %2084 = vmatpush1.msra.mxu0 0.0
        %2085 = vmatprep.subr.mxu0 0.0
        %2086 = vmatpush1.msra.mxu0 0.0
        %2087 = vmatprep.mubr.f32.mxu0 %v2021
        %2088 = vmatmul.mubr.f32.gmra.mrb[0].mxu0 %v1996
        %v2089 = vpop.f32.mrb[0].mxu0
        %v2090 = vadd.f32 0.0, %v2089
        %v2091 = vpop.f32.mrb[0].mxu0
        %2092 = vdwg.mxu0
        %v2093 = vld [vmem:[%s10] sm:$0x1]
        %v2094 = vld [vmem:[%s9] sm:$0xff]
        %v2095 = vld [vmem:[%s9 + $0x8] sm:$0xff]
        %v2096 = vld [vmem:[%s9 + $0x10] sm:$0xff]
        %v2097 = vld [vmem:[%s9 + $0x18] sm:$0xff]
        %v2098 = vld [vmem:[%s9 + $0x20] sm:$0xff]
        %v2099 = vld [vmem:[%s9 + $0x28] sm:$0xff]
        %v2100 = vld [vmem:[%s9 + $0x30] sm:$0xff]
        %v2101 = vld [vmem:[%s9 + $0x38] sm:$0xff]
        %v2102 = vld [vmem:[%s9 + $0x40] sm:$0xff]
        %v2103 = vld [vmem:[%s9 + $0x48] sm:$0xff]
        %vm2104 = vcmask 654336
        %v2106 = vsel %vm2104, %v2090, 0
        %2108 = vmatprep.subr.mxu0 0.0
        %2109 = vmatpush1.msra.mxu0 %v2094
        %2110 = vmatprep.subr.mxu0 0.0
        %2111 = vmatpush1.msra.mxu0 %v2095
        %2112 = vmatprep.subr.mxu0 0.0
        %2113 = vmatpush1.msra.mxu0 %v2096
        %2114 = vmatprep.subr.mxu0 0.0
        %2115 = vmatpush1.msra.mxu0 %v2097
        %2116 = vmatprep.subr.mxu0 0.0
        %2117 = vmatpush1.msra.mxu0 %v2098
        %2118 = vmatprep.subr.mxu0 0.0
        %2119 = vmatpush1.msra.mxu0 %v2099
        %2120 = vmatprep.subr.mxu0 0.0
        %2121 = vmatpush1.msra.mxu0 %v2100
        %2122 = vmatprep.subr.mxu0 0.0
        %2123 = vmatpush1.msra.mxu0 %v2101
        %2124 = vmatprep.subr.mxu0 0.0
        %2125 = vmatpush1.msra.mxu0 %v2102
        %2126 = vmatprep.subr.mxu0 0.0
        %2127 = vmatpush1.msra.mxu0 %v2103
        %2128 = vmatprep.subr.mxu0 0.0
        %2129 = vmatpush1.msra.mxu0 0.0
        %2130 = vmatprep.subr.mxu0 0.0
        %2131 = vmatpush1.msra.mxu0 0.0
        %2132 = vmatprep.subr.mxu0 0.0
        %2133 = vmatpush1.msra.mxu0 0.0
        %2134 = vmatprep.subr.mxu0 0.0
        %2135 = vmatpush1.msra.mxu0 0.0
        %2136 = vmatprep.subr.mxu0 0.0
        %2137 = vmatpush1.msra.mxu0 0.0
        %2138 = vmatprep.subr.mxu0 0.0
        %2139 = vmatpush1.msra.mxu0 0.0
        %2140 = vmatprep.subr.mxu0 0.0
        %2141 = vmatpush1.msra.mxu0 0.0
        %2142 = vmatprep.subr.mxu0 0.0
        %2143 = vmatpush1.msra.mxu0 0.0
        %2144 = vmatprep.subr.mxu0 0.0
        %2145 = vmatpush1.msra.mxu0 0.0
        %2146 = vmatprep.subr.mxu0 0.0
        %2147 = vmatpush1.msra.mxu0 0.0
        %2148 = vmatprep.subr.mxu0 0.0
        %2149 = vmatpush1.msra.mxu0 0.0
        %2150 = vmatprep.subr.mxu0 0.0
        %2151 = vmatpush1.msra.mxu0 0.0
        %2152 = vmatprep.subr.mxu0 0.0
        %2153 = vmatpush1.msra.mxu0 0.0
        %2154 = vmatprep.subr.mxu0 0.0
        %2155 = vmatpush1.msra.mxu0 0.0
        %2156 = vmatprep.subr.mxu0 0.0
        %2157 = vmatpush1.msra.mxu0 0.0
        %2158 = vmatprep.subr.mxu0 0.0
        %2159 = vmatpush1.msra.mxu0 0.0
        %2160 = vmatprep.subr.mxu0 0.0
        %2161 = vmatpush1.msra.mxu0 0.0
        %2162 = vmatprep.subr.mxu0 0.0
        %2163 = vmatpush1.msra.mxu0 0.0
        %2164 = vmatprep.subr.mxu0 0.0
        %2165 = vmatpush1.msra.mxu0 0.0
        %2166 = vmatprep.subr.mxu0 0.0
        %2167 = vmatpush1.msra.mxu0 0.0
        %2168 = vmatprep.subr.mxu0 0.0
        %2169 = vmatpush1.msra.mxu0 0.0
        %2170 = vmatprep.subr.mxu0 0.0
        %2171 = vmatpush1.msra.mxu0 0.0
        %2172 = vmatprep.mubr.f32.mxu0 0.0
        %2173 = vmatmul.mubr.f32.gmra.mrb[0].mxu0 %v2106
        %v2174 = vpop.f32.mrb[0].mxu0
        %v2175 = vadd.f32 0.0, %v2174
        %v2176 = vpop.f32.mrb[0].mxu0
        %2177 = vdwg.mxu0
        %v2178 = vadd.f32 %v2093, %v2175
        %s2179 = scalar_lea.vmem %s9, 80
        %v2180 = vld [vmem:[%s2179] sm:$0xff]
        %v2181 = vld [vmem:[%s2179 + $0x8] sm:$0xff]
        %v2182 = vld [vmem:[%s2179 + $0x10] sm:$0xff]
        %v2183 = vld [vmem:[%s2179 + $0x18] sm:$0xff]
        %v2184 = vld [vmem:[%s2179 + $0x20] sm:$0xff]
        %v2185 = vld [vmem:[%s2179 + $0x28] sm:$0xff]
        %v2186 = vld [vmem:[%s2179 + $0x30] sm:$0xff]
        %v2187 = vld [vmem:[%s2179 + $0x38] sm:$0xff]
        %v2188 = vld [vmem:[%s2179 + $0x40] sm:$0xff]
        %v2189 = vld [vmem:[%s2179 + $0x48] sm:$0xff]
        %v2190 = vrot.slane %v2090, 1
        %v2191 = vsel %vm2104, %v2190, 0
        %2193 = vmatprep.subr.mxu0 0.0
        %2194 = vmatpush1.msra.mxu0 %v2180
        %2195 = vmatprep.subr.mxu0 0.0
        %2196 = vmatpush1.msra.mxu0 %v2181
        %2197 = vmatprep.subr.mxu0 0.0
        %2198 = vmatpush1.msra.mxu0 %v2182
        %2199 = vmatprep.subr.mxu0 0.0
        %2200 = vmatpush1.msra.mxu0 %v2183
        %2201 = vmatprep.subr.mxu0 0.0
        %2202 = vmatpush1.msra.mxu0 %v2184
        %2203 = vmatprep.subr.mxu0 0.0
        %2204 = vmatpush1.msra.mxu0 %v2185
        %2205 = vmatprep.subr.mxu0 0.0
        %2206 = vmatpush1.msra.mxu0 %v2186
        %2207 = vmatprep.subr.mxu0 0.0
        %2208 = vmatpush1.msra.mxu0 %v2187
        %2209 = vmatprep.subr.mxu0 0.0
        %2210 = vmatpush1.msra.mxu0 %v2188
        %2211 = vmatprep.subr.mxu0 0.0
        %2212 = vmatpush1.msra.mxu0 %v2189
        %2213 = vmatprep.subr.mxu0 0.0
        %2214 = vmatpush1.msra.mxu0 0.0
        %2215 = vmatprep.subr.mxu0 0.0
        %2216 = vmatpush1.msra.mxu0 0.0
        %2217 = vmatprep.subr.mxu0 0.0
        %2218 = vmatpush1.msra.mxu0 0.0
        %2219 = vmatprep.subr.mxu0 0.0
        %2220 = vmatpush1.msra.mxu0 0.0
        %2221 = vmatprep.subr.mxu0 0.0
        %2222 = vmatpush1.msra.mxu0 0.0
        %2223 = vmatprep.subr.mxu0 0.0
        %2224 = vmatpush1.msra.mxu0 0.0
        %2225 = vmatprep.subr.mxu0 0.0
        %2226 = vmatpush1.msra.mxu0 0.0
        %2227 = vmatprep.subr.mxu0 0.0
        %2228 = vmatpush1.msra.mxu0 0.0
        %2229 = vmatprep.subr.mxu0 0.0
        %2230 = vmatpush1.msra.mxu0 0.0
        %2231 = vmatprep.subr.mxu0 0.0
        %2232 = vmatpush1.msra.mxu0 0.0
        %2233 = vmatprep.subr.mxu0 0.0
        %2234 = vmatpush1.msra.mxu0 0.0
        %2235 = vmatprep.subr.mxu0 0.0
        %2236 = vmatpush1.msra.mxu0 0.0
        %2237 = vmatprep.subr.mxu0 0.0
        %2238 = vmatpush1.msra.mxu0 0.0
        %2239 = vmatprep.subr.mxu0 0.0
        %2240 = vmatpush1.msra.mxu0 0.0
        %2241 = vmatprep.subr.mxu0 0.0
        %2242 = vmatpush1.msra.mxu0 0.0
        %2243 = vmatprep.subr.mxu0 0.0
        %2244 = vmatpush1.msra.mxu0 0.0
        %2245 = vmatprep.subr.mxu0 0.0
        %2246 = vmatpush1.msra.mxu0 0.0
        %2247 = vmatprep.subr.mxu0 0.0
        %2248 = vmatpush1.msra.mxu0 0.0
        %2249 = vmatprep.subr.mxu0 0.0
        %2250 = vmatpush1.msra.mxu0 0.0
        %2251 = vmatprep.subr.mxu0 0.0
        %2252 = vmatpush1.msra.mxu0 0.0
        %2253 = vmatprep.subr.mxu0 0.0
        %2254 = vmatpush1.msra.mxu0 0.0
        %2255 = vmatprep.subr.mxu0 0.0
        %2256 = vmatpush1.msra.mxu0 0.0
        %2257 = vmatprep.mubr.f32.mxu0 0.0
        %2258 = vmatmul.mubr.f32.gmra.mrb[0].mxu0 %v2191
        %v2259 = vpop.f32.mrb[0].mxu0
        %v2260 = vadd.f32 0.0, %v2259
        %v2261 = vpop.f32.mrb[0].mxu0
        %2262 = vdwg.mxu0
        %v2263 = vadd.f32 %v2178, %v2260
        %s2264 = scalar_lea.vmem %s9, 160
        %v2265 = vld [vmem:[%s2264] sm:$0xff]
        %v2266 = vld [vmem:[%s2264 + $0x8] sm:$0xff]
        %v2267 = vld [vmem:[%s2264 + $0x10] sm:$0xff]
        %v2268 = vld [vmem:[%s2264 + $0x18] sm:$0xff]
        %v2269 = vld [vmem:[%s2264 + $0x20] sm:$0xff]
        %v2270 = vld [vmem:[%s2264 + $0x28] sm:$0xff]
        %v2271 = vld [vmem:[%s2264 + $0x30] sm:$0xff]
        %v2272 = vld [vmem:[%s2264 + $0x38] sm:$0xff]
        %v2273 = vld [vmem:[%s2264 + $0x40] sm:$0xff]
        %v2274 = vld [vmem:[%s2264 + $0x48] sm:$0xff]
        %v2275 = vrot.slane %v2090, 2
        %v2276 = vsel %vm2104, %v2275, 0
        %2278 = vmatprep.subr.mxu0 0.0
        %2279 = vmatpush1.msra.mxu0 %v2265
        %2280 = vmatprep.subr.mxu0 0.0
        %2281 = vmatpush1.msra.mxu0 %v2266
        %2282 = vmatprep.subr.mxu0 0.0
        %2283 = vmatpush1.msra.mxu0 %v2267
        %2284 = vmatprep.subr.mxu0 0.0
        %2285 = vmatpush1.msra.mxu0 %v2268
        %2286 = vmatprep.subr.mxu0 0.0
        %2287 = vmatpush1.msra.mxu0 %v2269
        %2288 = vmatprep.subr.mxu0 0.0
        %2289 = vmatpush1.msra.mxu0 %v2270
        %2290 = vmatprep.subr.mxu0 0.0
        %2291 = vmatpush1.msra.mxu0 %v2271
        %2292 = vmatprep.subr.mxu0 0.0
        %2293 = vmatpush1.msra.mxu0 %v2272
        %2294 = vmatprep.subr.mxu0 0.0
        %2295 = vmatpush1.msra.mxu0 %v2273
        %2296 = vmatprep.subr.mxu0 0.0
        %2297 = vmatpush1.msra.mxu0 %v2274
        %2298 = vmatprep.subr.mxu0 0.0
        %2299 = vmatpush1.msra.mxu0 0.0
        %2300 = vmatprep.subr.mxu0 0.0
        %2301 = vmatpush1.msra.mxu0 0.0
        %2302 = vmatprep.subr.mxu0 0.0
        %2303 = vmatpush1.msra.mxu0 0.0
        %2304 = vmatprep.subr.mxu0 0.0
        %2305 = vmatpush1.msra.mxu0 0.0
        %2306 = vmatprep.subr.mxu0 0.0
        %2307 = vmatpush1.msra.mxu0 0.0
        %2308 = vmatprep.subr.mxu0 0.0
        %2309 = vmatpush1.msra.mxu0 0.0
        %2310 = vmatprep.subr.mxu0 0.0
        %2311 = vmatpush1.msra.mxu0 0.0
        %2312 = vmatprep.subr.mxu0 0.0
        %2313 = vmatpush1.msra.mxu0 0.0
        %2314 = vmatprep.subr.mxu0 0.0
        %2315 = vmatpush1.msra.mxu0 0.0
        %2316 = vmatprep.subr.mxu0 0.0
        %2317 = vmatpush1.msra.mxu0 0.0
        %2318 = vmatprep.subr.mxu0 0.0
        %2319 = vmatpush1.msra.mxu0 0.0
        %2320 = vmatprep.subr.mxu0 0.0
        %2321 = vmatpush1.msra.mxu0 0.0
        %2322 = vmatprep.subr.mxu0 0.0
        %2323 = vmatpush1.msra.mxu0 0.0
        %2324 = vmatprep.subr.mxu0 0.0
        %2325 = vmatpush1.msra.mxu0 0.0
        %2326 = vmatprep.subr.mxu0 0.0
        %2327 = vmatpush1.msra.mxu0 0.0
        %2328 = vmatprep.subr.mxu0 0.0
        %2329 = vmatpush1.msra.mxu0 0.0
        %2330 = vmatprep.subr.mxu0 0.0
        %2331 = vmatpush1.msra.mxu0 0.0
        %2332 = vmatprep.subr.mxu0 0.0
        %2333 = vmatpush1.msra.mxu0 0.0
        %2334 = vmatprep.subr.mxu0 0.0
        %2335 = vmatpush1.msra.mxu0 0.0
        %2336 = vmatprep.subr.mxu0 0.0
        %2337 = vmatpush1.msra.mxu0 0.0
        %2338 = vmatprep.subr.mxu0 0.0
        %2339 = vmatpush1.msra.mxu0 0.0
        %2340 = vmatprep.subr.mxu0 0.0
        %2341 = vmatpush1.msra.mxu0 0.0
        %2342 = vmatprep.mubr.f32.mxu0 0.0
        %2343 = vmatmul.mubr.f32.gmra.mrb[0].mxu0 %v2276
        %v2344 = vpop.f32.mrb[0].mxu0
        %v2345 = vadd.f32 0.0, %v2344
        %v2346 = vpop.f32.mrb[0].mxu0
        %2347 = vdwg.mxu0
        %v2348 = vadd.f32 %v2263, %v2345
        %s2349 = scalar_lea.vmem %s9, 240
        %v2350 = vld [vmem:[%s2349] sm:$0xff]
        %v2351 = vld [vmem:[%s2349 + $0x8] sm:$0xff]
        %v2352 = vld [vmem:[%s2349 + $0x10] sm:$0xff]
        %v2353 = vld [vmem:[%s2349 + $0x18] sm:$0xff]
        %v2354 = vld [vmem:[%s2349 + $0x20] sm:$0xff]
        %v2355 = vld [vmem:[%s2349 + $0x28] sm:$0xff]
        %v2356 = vld [vmem:[%s2349 + $0x30] sm:$0xff]
        %v2357 = vld [vmem:[%s2349 + $0x38] sm:$0xff]
        %v2358 = vld [vmem:[%s2349 + $0x40] sm:$0xff]
        %v2359 = vld [vmem:[%s2349 + $0x48] sm:$0xff]
        %v2360 = vrot.slane %v2090, 3
        %v2361 = vsel %vm2104, %v2360, 0
        %2363 = vmatprep.subr.mxu0 0.0
        %2364 = vmatpush1.msra.mxu0 %v2350
        %2365 = vmatprep.subr.mxu0 0.0
        %2366 = vmatpush1.msra.mxu0 %v2351
        %2367 = vmatprep.subr.mxu0 0.0
        %2368 = vmatpush1.msra.mxu0 %v2352
        %2369 = vmatprep.subr.mxu0 0.0
        %2370 = vmatpush1.msra.mxu0 %v2353
        %2371 = vmatprep.subr.mxu0 0.0
        %2372 = vmatpush1.msra.mxu0 %v2354
        %2373 = vmatprep.subr.mxu0 0.0
        %2374 = vmatpush1.msra.mxu0 %v2355
        %2375 = vmatprep.subr.mxu0 0.0
        %2376 = vmatpush1.msra.mxu0 %v2356
        %2377 = vmatprep.subr.mxu0 0.0
        %2378 = vmatpush1.msra.mxu0 %v2357
        %2379 = vmatprep.subr.mxu0 0.0
        %2380 = vmatpush1.msra.mxu0 %v2358
        %2381 = vmatprep.subr.mxu0 0.0
        %2382 = vmatpush1.msra.mxu0 %v2359
        %2383 = vmatprep.subr.mxu0 0.0
        %2384 = vmatpush1.msra.mxu0 0.0
        %2385 = vmatprep.subr.mxu0 0.0
        %2386 = vmatpush1.msra.mxu0 0.0
        %2387 = vmatprep.subr.mxu0 0.0
        %2388 = vmatpush1.msra.mxu0 0.0
        %2389 = vmatprep.subr.mxu0 0.0
        %2390 = vmatpush1.msra.mxu0 0.0
        %2391 = vmatprep.subr.mxu0 0.0
        %2392 = vmatpush1.msra.mxu0 0.0
        %2393 = vmatprep.subr.mxu0 0.0
        %2394 = vmatpush1.msra.mxu0 0.0
        %2395 = vmatprep.subr.mxu0 0.0
        %2396 = vmatpush1.msra.mxu0 0.0
        %2397 = vmatprep.subr.mxu0 0.0
        %2398 = vmatpush1.msra.mxu0 0.0
        %2399 = vmatprep.subr.mxu0 0.0
        %2400 = vmatpush1.msra.mxu0 0.0
        %2401 = vmatprep.subr.mxu0 0.0
        %2402 = vmatpush1.msra.mxu0 0.0
        %2403 = vmatprep.subr.mxu0 0.0
        %2404 = vmatpush1.msra.mxu0 0.0
        %2405 = vmatprep.subr.mxu0 0.0
        %2406 = vmatpush1.msra.mxu0 0.0
        %2407 = vmatprep.subr.mxu0 0.0
        %2408 = vmatpush1.msra.mxu0 0.0
        %2409 = vmatprep.subr.mxu0 0.0
        %2410 = vmatpush1.msra.mxu0 0.0
        %2411 = vmatprep.subr.mxu0 0.0
        %2412 = vmatpush1.msra.mxu0 0.0
        %2413 = vmatprep.subr.mxu0 0.0
        %2414 = vmatpush1.msra.mxu0 0.0
        %2415 = vmatprep.subr.mxu0 0.0
        %2416 = vmatpush1.msra.mxu0 0.0
        %2417 = vmatprep.subr.mxu0 0.0
        %2418 = vmatpush1.msra.mxu0 0.0
        %2419 = vmatprep.subr.mxu0 0.0
        %2420 = vmatpush1.msra.mxu0 0.0
        %2421 = vmatprep.subr.mxu0 0.0
        %2422 = vmatpush1.msra.mxu0 0.0
        %2423 = vmatprep.subr.mxu0 0.0
        %2424 = vmatpush1.msra.mxu0 0.0
        %2425 = vmatprep.subr.mxu0 0.0
        %2426 = vmatpush1.msra.mxu0 0.0
        %2427 = vmatprep.mubr.f32.mxu0 0.0
        %2428 = vmatmul.mubr.f32.gmra.mrb[0].mxu0 %v2361
        %v2429 = vpop.f32.mrb[0].mxu0
        %v2430 = vadd.f32 0.0, %v2429
        %v2431 = vpop.f32.mrb[0].mxu0
        %2432 = vdwg.mxu0
        %v2433 = vadd.f32 %v2348, %v2430
        %s2434 = scalar_lea.vmem %s9, 320
        %v2435 = vld [vmem:[%s2434] sm:$0xff]
        %v2436 = vld [vmem:[%s2434 + $0x8] sm:$0xff]
        %v2437 = vld [vmem:[%s2434 + $0x10] sm:$0xff]
        %v2438 = vld [vmem:[%s2434 + $0x18] sm:$0xff]
        %v2439 = vld [vmem:[%s2434 + $0x20] sm:$0xff]
        %v2440 = vld [vmem:[%s2434 + $0x28] sm:$0xff]
        %v2441 = vld [vmem:[%s2434 + $0x30] sm:$0xff]
        %v2442 = vld [vmem:[%s2434 + $0x38] sm:$0xff]
        %v2443 = vld [vmem:[%s2434 + $0x40] sm:$0xff]
        %v2444 = vld [vmem:[%s2434 + $0x48] sm:$0xff]
        %v2445 = vrot.slane %v2090, 4
        %v2446 = vsel %vm2104, %v2445, 0
        %2448 = vmatprep.subr.mxu0 0.0
        %2449 = vmatpush1.msra.mxu0 %v2435
        %2450 = vmatprep.subr.mxu0 0.0
        %2451 = vmatpush1.msra.mxu0 %v2436
        %2452 = vmatprep.subr.mxu0 0.0
        %2453 = vmatpush1.msra.mxu0 %v2437
        %2454 = vmatprep.subr.mxu0 0.0
        %2455 = vmatpush1.msra.mxu0 %v2438
        %2456 = vmatprep.subr.mxu0 0.0
        %2457 = vmatpush1.msra.mxu0 %v2439
        %2458 = vmatprep.subr.mxu0 0.0
        %2459 = vmatpush1.msra.mxu0 %v2440
        %2460 = vmatprep.subr.mxu0 0.0
        %2461 = vmatpush1.msra.mxu0 %v2441
        %2462 = vmatprep.subr.mxu0 0.0
        %2463 = vmatpush1.msra.mxu0 %v2442
        %2464 = vmatprep.subr.mxu0 0.0
        %2465 = vmatpush1.msra.mxu0 %v2443
        %2466 = vmatprep.subr.mxu0 0.0
        %2467 = vmatpush1.msra.mxu0 %v2444
        %2468 = vmatprep.subr.mxu0 0.0
        %2469 = vmatpush1.msra.mxu0 0.0
        %2470 = vmatprep.subr.mxu0 0.0
        %2471 = vmatpush1.msra.mxu0 0.0
        %2472 = vmatprep.subr.mxu0 0.0
        %2473 = vmatpush1.msra.mxu0 0.0
        %2474 = vmatprep.subr.mxu0 0.0
        %2475 = vmatpush1.msra.mxu0 0.0
        %2476 = vmatprep.subr.mxu0 0.0
        %2477 = vmatpush1.msra.mxu0 0.0
        %2478 = vmatprep.subr.mxu0 0.0
        %2479 = vmatpush1.msra.mxu0 0.0
        %2480 = vmatprep.subr.mxu0 0.0
        %2481 = vmatpush1.msra.mxu0 0.0
        %2482 = vmatprep.subr.mxu0 0.0
        %2483 = vmatpush1.msra.mxu0 0.0
        %2484 = vmatprep.subr.mxu0 0.0
        %2485 = vmatpush1.msra.mxu0 0.0
        %2486 = vmatprep.subr.mxu0 0.0
        %2487 = vmatpush1.msra.mxu0 0.0
        %2488 = vmatprep.subr.mxu0 0.0
        %2489 = vmatpush1.msra.mxu0 0.0
        %2490 = vmatprep.subr.mxu0 0.0
        %2491 = vmatpush1.msra.mxu0 0.0
        %2492 = vmatprep.subr.mxu0 0.0
        %2493 = vmatpush1.msra.mxu0 0.0
        %2494 = vmatprep.subr.mxu0 0.0
        %2495 = vmatpush1.msra.mxu0 0.0
        %2496 = vmatprep.subr.mxu0 0.0
        %2497 = vmatpush1.msra.mxu0 0.0
        %2498 = vmatprep.subr.mxu0 0.0
        %2499 = vmatpush1.msra.mxu0 0.0
        %2500 = vmatprep.subr.mxu0 0.0
        %2501 = vmatpush1.msra.mxu0 0.0
        %2502 = vmatprep.subr.mxu0 0.0
        %2503 = vmatpush1.msra.mxu0 0.0
        %2504 = vmatprep.subr.mxu0 0.0
        %2505 = vmatpush1.msra.mxu0 0.0
        %2506 = vmatprep.subr.mxu0 0.0
        %2507 = vmatpush1.msra.mxu0 0.0
        %2508 = vmatprep.subr.mxu0 0.0
        %2509 = vmatpush1.msra.mxu0 0.0
        %2510 = vmatprep.subr.mxu0 0.0
        %2511 = vmatpush1.msra.mxu0 0.0
        %2512 = vmatprep.mubr.f32.mxu0 0.0
        %2513 = vmatmul.mubr.f32.gmra.mrb[0].mxu0 %v2446
        %v2514 = vpop.f32.mrb[0].mxu0
        %v2515 = vadd.f32 0.0, %v2514
        %v2516 = vpop.f32.mrb[0].mxu0
        %2517 = vdwg.mxu0
        %v2518 = vadd.f32 %v2433, %v2515
        %v2519 = vmax.f32 %v2518, 0.0
        %v2520 = vld [vmem:[%s11] sm:$0xff]
        %v2521 = vld [vmem:[%s11 + $0x8] sm:$0xff]
        %v2522 = vld [vmem:[%s11 + $0x10] sm:$0xff]
        %v2523 = vld [vmem:[%s11 + $0x18] sm:$0xff]
        %v2524 = vld [vmem:[%s11 + $0x20] sm:$0xff]
        %v2525 = vld [vmem:[%s11 + $0x28] sm:$0xff]
        %v2526 = vld [vmem:[%s11 + $0x30] sm:$0xff]
        %v2527 = vld [vmem:[%s11 + $0x38] sm:$0xff]
        %v2528 = vld [vmem:[%s11 + $0x40] sm:$0xff]
        %v2529 = vld [vmem:[%s11 + $0x48] sm:$0xff]
        %v2530 = vld [vmem:[%s11 + $0x50] sm:$0xff]
        %v2531 = vld [vmem:[%s11 + $0x58] sm:$0xff]
        %v2532 = vld [vmem:[%s11 + $0x60] sm:$0xff]
        %v2533 = vld [vmem:[%s11 + $0x68] sm:$0xff]
        %v2534 = vld [vmem:[%s11 + $0x70] sm:$0xff]
        %v2535 = vld [vmem:[%s12] sm:$0x1]
        %vm2536 = vcmask 982016
        %v2538 = vsel %vm2536, %v2519, 0
        %2540 = vmatprep.subr.mxu0 0.0
        %2541 = vmatpush1.msra.mxu0 %v2520
        %2542 = vmatprep.subr.mxu0 0.0
        %2543 = vmatpush1.msra.mxu0 %v2521
        %2544 = vmatprep.subr.mxu0 0.0
        %2545 = vmatpush1.msra.mxu0 %v2522
        %2546 = vmatprep.subr.mxu0 0.0
        %2547 = vmatpush1.msra.mxu0 %v2523
        %2548 = vmatprep.subr.mxu0 0.0
        %2549 = vmatpush1.msra.mxu0 %v2524
        %2550 = vmatprep.subr.mxu0 0.0
        %2551 = vmatpush1.msra.mxu0 %v2525
        %2552 = vmatprep.subr.mxu0 0.0
        %2553 = vmatpush1.msra.mxu0 %v2526
        %2554 = vmatprep.subr.mxu0 0.0
        %2555 = vmatpush1.msra.mxu0 %v2527
        %2556 = vmatprep.subr.mxu0 0.0
        %2557 = vmatpush1.msra.mxu0 %v2528
        %2558 = vmatprep.subr.mxu0 0.0
        %2559 = vmatpush1.msra.mxu0 %v2529
        %2560 = vmatprep.subr.mxu0 0.0
        %2561 = vmatpush1.msra.mxu0 %v2530
        %2562 = vmatprep.subr.mxu0 0.0
        %2563 = vmatpush1.msra.mxu0 %v2531
        %2564 = vmatprep.subr.mxu0 0.0
        %2565 = vmatpush1.msra.mxu0 %v2532
        %2566 = vmatprep.subr.mxu0 0.0
        %2567 = vmatpush1.msra.mxu0 %v2533
        %2568 = vmatprep.subr.mxu0 0.0
        %2569 = vmatpush1.msra.mxu0 %v2534
        %2570 = vmatprep.subr.mxu0 0.0
        %2571 = vmatpush1.msra.mxu0 0.0
        %2572 = vmatprep.subr.mxu0 0.0
        %2573 = vmatpush1.msra.mxu0 0.0
        %2574 = vmatprep.subr.mxu0 0.0
        %2575 = vmatpush1.msra.mxu0 0.0
        %2576 = vmatprep.subr.mxu0 0.0
        %2577 = vmatpush1.msra.mxu0 0.0
        %2578 = vmatprep.subr.mxu0 0.0
        %2579 = vmatpush1.msra.mxu0 0.0
        %2580 = vmatprep.subr.mxu0 0.0
        %2581 = vmatpush1.msra.mxu0 0.0
        %2582 = vmatprep.subr.mxu0 0.0
        %2583 = vmatpush1.msra.mxu0 0.0
        %2584 = vmatprep.subr.mxu0 0.0
        %2585 = vmatpush1.msra.mxu0 0.0
        %2586 = vmatprep.subr.mxu0 0.0
        %2587 = vmatpush1.msra.mxu0 0.0
        %2588 = vmatprep.subr.mxu0 0.0
        %2589 = vmatpush1.msra.mxu0 0.0
        %2590 = vmatprep.subr.mxu0 0.0
        %2591 = vmatpush1.msra.mxu0 0.0
        %2592 = vmatprep.subr.mxu0 0.0
        %2593 = vmatpush1.msra.mxu0 0.0
        %2594 = vmatprep.subr.mxu0 0.0
        %2595 = vmatpush1.msra.mxu0 0.0
        %2596 = vmatprep.subr.mxu0 0.0
        %2597 = vmatpush1.msra.mxu0 0.0
        %2598 = vmatprep.subr.mxu0 0.0
        %2599 = vmatpush1.msra.mxu0 0.0
        %2600 = vmatprep.subr.mxu0 0.0
        %2601 = vmatpush1.msra.mxu0 0.0
        %2602 = vmatprep.subr.mxu0 0.0
        %2603 = vmatpush1.msra.mxu0 0.0
        %2604 = vmatprep.mubr.f32.mxu0 0.0
        %2605 = vmatmul.mubr.f32.gmra.mrb[0].mxu0 %v2538
        %v2606 = vpop.f32.mrb[0].mxu0
        %v2607 = vadd.f32 %v2535, %v2606
        %v2608 = vpop.f32.mrb[0].mxu0
        %2609 = vdwg.mxu0
        %v2610 = vmax.f32 %v2607, 0.0
        %v2611 = vld [vmem:[%s13] sm:$0xff]
        %v2612 = vld [vmem:[%s13 + $0x8] sm:$0xff]
        %v2613 = vld [vmem:[%s13 + $0x10] sm:$0xff]
        %v2614 = vld [vmem:[%s13 + $0x18] sm:$0xff]
        %v2615 = vld [vmem:[%s13 + $0x20] sm:$0xff]
        %v2616 = vld [vmem:[%s13 + $0x28] sm:$0xff]
        %v2617 = vld [vmem:[%s13 + $0x30] sm:$0xff]
        %v2618 = vld [vmem:[%s13 + $0x38] sm:$0xff]
        %v2619 = vld [vmem:[%s13 + $0x40] sm:$0xff]
        %v2620 = vld [vmem:[%s13 + $0x48] sm:$0xff]
        %v2621 = vld [vmem:[%s13 + $0x50] sm:$0xf]
        %v2622 = vld [vmem:[%s14] sm:$0x1]
        %v2624 = vsel %vm1340, %v2610, 0
        %v2627 = vsel %vm1001, %v2621, 0
        %2629 = vmatprep.subr.mxu0 0.0
        %2630 = vmatpush1.msra.mxu0 %v2611
        %2631 = vmatprep.subr.mxu0 0.0
        %2632 = vmatpush1.msra.mxu0 %v2612
        %2633 = vmatprep.subr.mxu0 0.0
        %2634 = vmatpush1.msra.mxu0 %v2613
        %2635 = vmatprep.subr.mxu0 0.0
        %2636 = vmatpush1.msra.mxu0 %v2614
        %2637 = vmatprep.subr.mxu0 0.0
        %2638 = vmatpush1.msra.mxu0 %v2615
        %2639 = vmatprep.subr.mxu0 0.0
        %2640 = vmatpush1.msra.mxu0 %v2616
        %2641 = vmatprep.subr.mxu0 0.0
        %2642 = vmatpush1.msra.mxu0 %v2617
        %2643 = vmatprep.subr.mxu0 0.0
        %2644 = vmatpush1.msra.mxu0 %v2618
        %2645 = vmatprep.subr.mxu0 0.0
        %2646 = vmatpush1.msra.mxu0 %v2619
        %2647 = vmatprep.subr.mxu0 0.0
        %2648 = vmatpush1.msra.mxu0 %v2620
        %2649 = vmatprep.subr.mxu0 0.0
        %2650 = vmatpush1.msra.mxu0 %v2627
        %2651 = vmatprep.subr.mxu0 0.0
        %2652 = vmatpush1.msra.mxu0 0.0
        %2653 = vmatprep.subr.mxu0 0.0
        %2654 = vmatpush1.msra.mxu0 0.0
        %2655 = vmatprep.subr.mxu0 0.0
        %2656 = vmatpush1.msra.mxu0 0.0
        %2657 = vmatprep.subr.mxu0 0.0
        %2658 = vmatpush1.msra.mxu0 0.0
        %2659 = vmatprep.subr.mxu0 0.0
        %2660 = vmatpush1.msra.mxu0 0.0
        %2661 = vmatprep.subr.mxu0 0.0
        %2662 = vmatpush1.msra.mxu0 0.0
        %2663 = vmatprep.subr.mxu0 0.0
        %2664 = vmatpush1.msra.mxu0 0.0
        %2665 = vmatprep.subr.mxu0 0.0
        %2666 = vmatpush1.msra.mxu0 0.0
        %2667 = vmatprep.subr.mxu0 0.0
        %2668 = vmatpush1.msra.mxu0 0.0
        %2669 = vmatprep.subr.mxu0 0.0
        %2670 = vmatpush1.msra.mxu0 0.0
        %2671 = vmatprep.subr.mxu0 0.0
        %2672 = vmatpush1.msra.mxu0 0.0
        %2673 = vmatprep.subr.mxu0 0.0
        %2674 = vmatpush1.msra.mxu0 0.0
        %2675 = vmatprep.subr.mxu0 0.0
        %2676 = vmatpush1.msra.mxu0 0.0
        %2677 = vmatprep.subr.mxu0 0.0
        %2678 = vmatpush1.msra.mxu0 0.0
        %2679 = vmatprep.subr.mxu0 0.0
        %2680 = vmatpush1.msra.mxu0 0.0
        %2681 = vmatprep.subr.mxu0 0.0
        %2682 = vmatpush1.msra.mxu0 0.0
        %2683 = vmatprep.subr.mxu0 0.0
        %2684 = vmatpush1.msra.mxu0 0.0
        %2685 = vmatprep.subr.mxu0 0.0
        %2686 = vmatpush1.msra.mxu0 0.0
        %2687 = vmatprep.subr.mxu0 0.0
        %2688 = vmatpush1.msra.mxu0 0.0
        %2689 = vmatprep.subr.mxu0 0.0
        %2690 = vmatpush1.msra.mxu0 0.0
        %2691 = vmatprep.subr.mxu0 0.0
        %2692 = vmatpush1.msra.mxu0 0.0
        %2693 = vmatprep.mubr.f32.mxu0 0.0
        %2694 = vmatmul.mubr.f32.gmra.mrb[0].mxu0 %v2624
        %v2695 = vpop.f32.mrb[0].mxu0
        %v2696 = vadd.f32 %v2622, %v2695
        %v2697 = vpop.f32.mrb[0].mxu0
        %2698 = vdwg.mxu0
        %vm2699 = vcmask 204800
        %2700 = vst.msk [vmem:[%s486] sm:$0x1] %vm2699, %v2696
        %s2701 = sand.u32 %s357, 1
        %s2702 = scalar_lea.sflag [#allocation3], %s2701
        %s2703 = sand.u32 %s357, 1
        %s2704 = scalar_lea.vmem [#allocation2], %s2703
        // Predicated region
        $region81: #{lenet5_forward.1} parent=79 // pred_check
          %p2705 = pneg %p367
        $region82: #{lenet5_forward.1} parent=79 // pred_check_branch
          %2707 = sbr.rel (%p2705) target = $region84
        $region83: #{lenet5_forward.1} parent=79 // pred_region
          %s2709 = ssub.s32 16, 16
          %2710 = vsyncadd %s2702, %s2709
          %s2711 = smul.addr %s29, 16
          %s2712 = scalar_lea.hbm %s15, %s2711
          %s2714 = sshll.u32 %s2704, 4
          %s2715 = int_to_ptr.vmem [resolvable:$true] %s2714
          %2717 = dma.vmem_to_hbm [thread:$0]  %s2715, 16, %s2712, %s2702
        $region84: #{lenet5_forward.1} parent=79 // pred_fallthru
          _
      $region80: #{lenet5_forward.1} parent=5 // pred_fallthru
        _
      %p2718 = scmp.le.s32.totalorder 2, %s24
      // Predicated region
      $region85: #{lenet5_forward.1} parent=5 // pred_check
        %p2719 = pneg %p2718
      $region86: #{lenet5_forward.1} parent=5 // pred_check_branch
        %2721 = sbr.rel (%p2719) target = $region88
      $region87: #{lenet5_forward.1} parent=5 // pred_region
        %s2722 = ssub.s32 %s24, 2
        // Predicated region
        $region89: #{lenet5_forward.1} parent=87 // pred_check
          %p2723 = pneg %p373
        $region90: #{lenet5_forward.1} parent=87 // pred_check_branch
          %2725 = sbr.rel (%p2723) target = $region92
        $region91: #{lenet5_forward.1} parent=87 // pred_region
          %s2726 = sand.u32 %s358, 1
          %s2727 = scalar_lea.sflag [#allocation3], %s2726
          %s2728 = sand.u32 %s358, 1
          %s2729 = scalar_lea.vmem [#allocation2], %s2728
          %2730 = dma.done %s2727, 16
        $region92: #{lenet5_forward.1} parent=87 // pred_fallthru
          _
      $region88: #{lenet5_forward.1} parent=5 // pred_fallthru
        _
    $region6: #{lenet5_forward.1} parent=1 // loop_footer
      %s28 = sadd.s32 1, %s24
    $region7: #{lenet5_forward.1} parent=1 // loop_footer_branch
      %23 = sbr.rel target = $region3
    $region8: #{lenet5_forward.1} parent=1 // loop_exit
      _
    %2731 = vsyncpa [#allocation3], 1
    %s2732 = scalar_lea.sflag [#allocation3], 1
    %2733 = vsyncpa %s2732, 1

</llo_original>
